<compile_context>
chip_gen: v5e
topology: v5e:2x2
jax: 0.10.0
libtpu: 0.0.40
codegen_flags: <defaults>
</compile_context>

<pallas_src>
import functools

import numpy as np
import jax
import jax.numpy as jnp
from jax.experimental import pallas as pl
from jax.experimental.pallas import tpu as pltpu


def _round_up(x, m):
    return ((x + m - 1) // m) * m


def speller_kernel(lf_ref,
                   w_tok_ref, w_ctx_ref, w_h_ref, bg_ref,
                   phiw_ref, phib_ref, psiw_ref, psib_ref,
                   fcwh_ref, fcwc_ref, fcb_ref,
                   out_ref,
                   comp_lf_sc, tok_emb_sc, ctx_sc, h_sc, c_sc,
                   *, sos_index):
    step = pl.program_id(1)                                   # decode step (arbitrary axis)
    TB, T, D = lf_ref.shape
    H = h_sc.shape[-1]
    L_pad = out_ref.shape[-1]

    lf = lf_ref[...]                                          # (TB, T, D) f32

    # ---- per-batch-tile init: hoisted relu(psi(listener)) + recurrent state ----
    @pl.when(step == 0)
    def _init():
        comp_lf_sc[...] = jnp.maximum(
            jnp.dot(lf.reshape(TB * T, D).astype(jnp.bfloat16), psiw_ref[...],
                    preferred_element_type=jnp.float32)
            + psib_ref[...], 0.0).reshape(TB, T, -1)          # (TB, T, M)
        # <sos> token-gate embedding = static row of W_tok (no one-hot anywhere)
        tok_emb_sc[...] = (jnp.zeros_like(tok_emb_sc)
                           + w_tok_ref[sos_index:sos_index + 1, :].astype(jnp.float32))
        ctx_sc[...] = lf[:, 0, :]
        h_sc[...] = jnp.zeros_like(h_sc)
        c_sc[...] = jnp.zeros_like(c_sc)

    tok_emb = tok_emb_sc[...]                                 # (TB, 4H) prev-token gate rows
    ctx = ctx_sc[...]                                         # (TB, D)
    h = h_sc[...]                                             # (TB, H)
    c = c_sc[...]                                             # (TB, H)

    # ---- LSTM cell: token contribution pre-gathered; ctx/h as separate MXU matmuls
    #      (no lane-axis concat => no relayouts when D/H are not 128-multiples) ----
    pre = (tok_emb
           + jnp.dot(ctx.astype(jnp.bfloat16), w_ctx_ref[...],
                     preferred_element_type=jnp.float32)
           + jnp.dot(h.astype(jnp.bfloat16), w_h_ref[...],
                     preferred_element_type=jnp.float32)
           + bg_ref[...])                                     # (TB, 4H), order i,f,g,o
    i_g = jax.nn.sigmoid(pre[:, 0 * H:1 * H])
    f_g = jax.nn.sigmoid(pre[:, 1 * H:2 * H])
    g_g = jnp.tanh(pre[:, 2 * H:3 * H])
    o_g = jax.nn.sigmoid(pre[:, 3 * H:4 * H])
    c_new = f_g * c + i_g * g_g
    h_new = o_g * jnp.tanh(c_new)                             # (TB, H) == LSTM output

    # ---- single-head MLP attention, lane-dense (MXU einsums, q == 1) ----
    comp_dec = jnp.maximum(
        jnp.dot(h_new.astype(jnp.bfloat16), phiw_ref[...],
                preferred_element_type=jnp.float32) + phib_ref[...], 0.0)   # (TB, M)
    energy = jnp.einsum('bqm,btm->bqt', comp_dec[:, None, :], comp_lf_sc[...],
                        preferred_element_type=jnp.float32)[:, 0, :]        # (TB, T)
    em = jnp.max(energy, axis=-1, keepdims=True)
    ee = jnp.exp(energy - em)
    attn = ee * pl.reciprocal(jnp.sum(ee, axis=-1, keepdims=True),
                              approx=True)                    # (TB, T) softmax over T
    context = jnp.einsum('bqt,btd->bqd', attn[:, None, :], lf,
                         preferred_element_type=jnp.float32)[:, 0, :]       # (TB, D)

    # ---- output projection (split, no concat) + log-softmax ----
    logits = (jnp.dot(h_new.astype(jnp.bfloat16), fcwh_ref[...],
                      preferred_element_type=jnp.float32)
              + jnp.dot(context.astype(jnp.bfloat16), fcwc_ref[...],
                        preferred_element_type=jnp.float32)
              + fcb_ref[...])                                 # (TB, L_pad), pad cols ~ -1e30
    m = jnp.max(logits, axis=-1, keepdims=True)
    lp = logits - m - jnp.log(jnp.sum(jnp.exp(logits - m), axis=-1, keepdims=True))
    out_ref[0] = lp                                           # lane-dense full-block store

    # ---- greedy decode: first index attaining the max (== torch.topk(1)), then fold
    #      the next-step token embedding immediately (one-hot never leaves this step) ----
    lane_iota = jax.lax.broadcasted_iota(jnp.int32, (TB, L_pad), 1)
    mx = jnp.max(lp, axis=-1, keepdims=True)
    idx = jnp.min(jnp.where(lp == mx, lane_iota, L_pad), axis=-1, keepdims=True)
    onehot = (lane_iota == idx).astype(jnp.bfloat16)
    # TODO(synk): at production vocab replace this one-hot @ W_tok MXU contraction with a
    # per-row DMA/row-gather on the argmax index (same carried (TB, 4H) embedding).
    tok_emb_sc[...] = jnp.dot(onehot, w_tok_ref[...], preferred_element_type=jnp.float32)
    ctx_sc[...] = context
    h_sc[...] = h_new
    c_sc[...] = c_new


def speller_forward(listener_feats, params, *, label_maxlen, sos_index, num_labels,
                    batch_tile=None, time_major=False):
    B, T, D = listener_feats.shape
    L_pad = params['fc_b'].shape[-1]
    H = params['b_gates'].shape[-1] // 4
    M = params['phi_w'].shape[-1]
    S = int(label_maxlen)

    # ---- batch tile: fill the MXU M-dim; keep nb >= 2 on big batches (v7x 2 TCs) ----
    if batch_tile is None:
        TB = B
        if B > 256:
            for cand in (256, 128, 64, 32, 16, 8):
                if B % cand == 0:
                    TB = cand
                    break
    else:
        TB = int(batch_tile)
    if B % TB != 0:
        raise ValueError(f"batch {B} not divisible by batch_tile {TB}")
    nb = B // TB
    if nb > 1 and TB % 8 != 0:
        raise ValueError("batch_tile must be a multiple of 8 when tiling the batch "
                         "(sublane constraint on the streamed output block)")

    weight_names = ('w_tok', 'w_ctx', 'w_h', 'b_gates', 'phi_w', 'phi_b',
                    'psi_w', 'psi_b', 'fc_w_h', 'fc_w_ctx', 'fc_b')
    weights = [params[n] for n in weight_names]

    def nbytes(a):
        return int(np.prod(a.shape)) * a.dtype.itemsize

    def build(resident_weights):
        if resident_weights:
            # Whole-array VMEM residents: single copy, no per-step double-buffering.
            w_specs = [pl.BlockSpec(memory_space=pltpu.MemorySpace.VMEM)
                       for _ in weights]
            w_copies = 1
        else:
            w_specs = [pl.BlockSpec(w.shape,
                                    (lambda nd: (lambda b, s: (0,) * nd))(w.ndim))
                       for w in weights]
            w_copies = 2
        in_specs = [pl.BlockSpec((TB, T, D), lambda b, s: (b, 0, 0))] + w_specs
        out_specs = pl.BlockSpec((1, TB, L_pad), lambda b, s: (s, b, 0))
        scratch_shapes = [
            pltpu.VMEM((TB, T, M), jnp.float32),    # relu(psi(listener)) - step invariant
            pltpu.VMEM((TB, 4 * H), jnp.float32),   # prev-token gate embedding carry
            pltpu.VMEM((TB, D), jnp.float32),       # context carry
            pltpu.VMEM((TB, H), jnp.float32),       # h carry
            pltpu.VMEM((TB, H), jnp.float32),       # c carry
        ]

        vmem_need = (2 * TB * T * D * 4                       # listener tile (double-buffered)
                     + w_copies * sum(nbytes(w) for w in weights)
                     + 2 * TB * L_pad * 4                     # streamed output block x2
                     + (TB * T * M + TB * 4 * H + TB * D + 2 * TB * H) * 4  # scratch
                     + (6 << 20))                             # headroom for temporaries
        try:
            cap = int(pltpu.get_tpu_info().vmem_capacity_bytes)   # 128 MiB v5e/v6e, 64 MiB v7x
        except Exception:
            cap = 64 << 20                                        # conservative fallback
        budget = int(cap * 0.9)
        if vmem_need > budget:
            raise ValueError(
                f"VMEM over budget: need ~{vmem_need >> 20} MiB > {budget >> 20} MiB "
                f"usable on this chip; reduce batch_tile (currently {TB}).")
        vmem_limit = int(min(max(vmem_need, 32 << 20), budget))

        grid_spec = pltpu.PrefetchScalarGridSpec(
            num_scalar_prefetch=0, grid=(nb, S),
            in_specs=in_specs, out_specs=out_specs, scratch_shapes=scratch_shapes)
        return pl.pallas_call(
            functools.partial(speller_kernel, sos_index=sos_index),
            out_shape=jax.ShapeDtypeStruct((S, B, L_pad), jnp.float32),
            grid_spec=grid_spec,
            compiler_params=pltpu.CompilerParams(
                dimension_semantics=("parallel", "arbitrary"),
                vmem_limit_bytes=vmem_limit))

    try:
        out = build(resident_weights=True)(listener_feats, *weights)
    except ValueError:
        raise
    except Exception:
        # Fallback for Pallas versions without unblocked-VMEM operand support:
        # blocked full-shape weight specs (double-buffered, as previously validated).
        out = build(resident_weights=False)(listener_feats, *weights)

    if time_major:
        # Cheapest layout for downstream consumers: no wrapper transpose.
        return out[..., :num_labels]                          # (S, B, num_labels)
    return jnp.transpose(out, (1, 0, 2))[..., :num_labels]    # (B, S, num_labels)


def init_params(key, num_labels, speller_hidden, listener_hidden, mlp_hidden):
    """Synthetic parameters, shapes as in Speller.__init__, split/padded for the kernel."""
    D = 2 * listener_hidden
    H = speller_hidden
    assert H == D, "speller_hidden_dim must equal 2*listener_hidden_dim"
    L = num_labels
    L_pad = _round_up(max(L, 128), 128)      # lane-dense logits block
    In = L + H                               # LSTM input dim (num_labels + speller_hidden)
    ks = jax.random.split(key, 10)

    def uni(k, shape, fan):
        b = 1.0 / np.sqrt(fan)
        return jax.random.uniform(k, shape, jnp.float32, -b, b)

    # nn.LSTM parameters (gate order i, f, g, o)
    w_ih = uni(ks[0], (4 * H, In), H)
    w_hh = uni(ks[1], (4 * H, H), H)
    b_ih = uni(ks[2], (4 * H,), H)
    b_hh = uni(ks[3], (4 * H,), H)

    tok_blk, ctx_blk, h_blk, biases = [], [], [], []
    for gi in range(4):                      # columns ordered [i | f | g | o]
        wi = w_ih[gi * H:(gi + 1) * H]       # (H, In)
        wh = w_hh[gi * H:(gi + 1) * H]       # (H, H)
        tok_blk.append(jnp.zeros((L_pad, H), jnp.float32).at[:L].set(wi[:, :L].T))
        ctx_blk.append(wi[:, L:].T)          # (D, H)
        h_blk.append(wh.T)                   # (H, H)
        biases.append(b_ih[gi * H:(gi + 1) * H] + b_hh[gi * H:(gi + 1) * H])
    w_tok = jnp.concatenate(tok_blk, axis=1)                  # (L_pad, 4H) token "embedding"
    w_ctx = jnp.concatenate(ctx_blk, axis=1)                  # (D, 4H)
    w_h = jnp.concatenate(h_blk, axis=1)                      # (H, 4H)
    b_gates = jnp.concatenate(biases)[None, :]                # (1, 4H)

    phi_w = uni(ks[4], (mlp_hidden, D), D)                    # Linear(D, mlp)
    phi_b = uni(ks[5], (mlp_hidden,), D)
    psi_w = uni(ks[6], (mlp_hidden, D), D)                    # Linear(D, mlp)
    psi_b = uni(ks[7], (mlp_hidden,), D)
    fc_w = uni(ks[8], (L, 2 * H), 2 * H)                      # Linear(2H, L)
    fc_b = uni(ks[9], (L,), 2 * H)
    fc_w_h = jnp.zeros((H, L_pad), jnp.float32).at[:, :L].set(fc_w[:, :H].T)
    fc_w_ctx = jnp.zeros((D, L_pad), jnp.float32).at[:, :L].set(fc_w[:, H:].T)
    fc_b_pad = jnp.full((1, L_pad), -1e30, jnp.float32).at[0, :L].set(fc_b)

    return dict(
        w_tok=w_tok.astype(jnp.bfloat16),
        w_ctx=w_ctx.astype(jnp.bfloat16),
        w_h=w_h.astype(jnp.bfloat16),
        b_gates=b_gates,
        phi_w=phi_w.T.astype(jnp.bfloat16), phi_b=phi_b[None, :],
        psi_w=psi_w.T.astype(jnp.bfloat16), psi_b=psi_b[None, :],
        fc_w_h=fc_w_h.astype(jnp.bfloat16),
        fc_w_ctx=fc_w_ctx.astype(jnp.bfloat16),
        fc_b=fc_b_pad)


def speller_reference(lf, params, *, label_maxlen, sos_index, num_labels):
    """Pure-JAX reference with the same split bf16-matmul / f32-elementwise math."""
    B, T, D = lf.shape
    H = params['b_gates'].shape[-1] // 4
    w_tok = params['w_tok']
    comp_lf = jnp.maximum(
        jnp.dot(lf.reshape(B * T, D).astype(jnp.bfloat16), params['psi_w'],
                preferred_element_type=jnp.float32) + params['psi_b'], 0.0
    ).reshape(B, T, -1)
    tok_emb = jnp.broadcast_to(w_tok[sos_index].astype(jnp.float32)[None, :], (B, 4 * H))
    ctx = lf[:, 0, :]
    h = jnp.zeros((B, H), jnp.float32)
    c = jnp.zeros((B, H), jnp.float32)
    outs = []
    for _ in range(label_maxlen):
        pre = (tok_emb
               + jnp.dot(ctx.astype(jnp.bfloat16), params['w_ctx'],
                         preferred_element_type=jnp.float32)
               + jnp.dot(h.astype(jnp.bfloat16), params['w_h'],
                         preferred_element_type=jnp.float32)
               + params['b_gates'])
        i = jax.nn.sigmoid(pre[:, 0 * H:1 * H])
        f = jax.nn.sigmoid(pre[:, 1 * H:2 * H])
        g = jnp.tanh(pre[:, 2 * H:3 * H])
        o = jax.nn.sigmoid(pre[:, 3 * H:4 * H])
        c = f * c + i * g
        h = o * jnp.tanh(c)
        comp_dec = jnp.maximum(
            jnp.dot(h.astype(jnp.bfloat16), params['phi_w'],
                    preferred_element_type=jnp.float32) + params['phi_b'], 0.0)
        energy = jnp.sum(comp_dec[:, None, :] * comp_lf, axis=-1)           # (B, T)
        em = jnp.max(energy, axis=-1, keepdims=True)
        ee = jnp.exp(energy - em)
        attn = ee / jnp.sum(ee, axis=-1, keepdims=True)
        ctx = jnp.sum(attn[:, :, None] * lf, axis=1)
        logits = (jnp.dot(h.astype(jnp.bfloat16), params['fc_w_h'],
                          preferred_element_type=jnp.float32)
                  + jnp.dot(ctx.astype(jnp.bfloat16), params['fc_w_ctx'],
                            preferred_element_type=jnp.float32)
                  + params['fc_b'])
        lp = jax.nn.log_softmax(logits, axis=-1)
        outs.append(lp[:, :num_labels])
        idx = jnp.argmax(lp, axis=-1)
        tok_emb = jnp.take(w_tok, idx, axis=0).astype(jnp.float32)
    return jnp.stack(outs, axis=1)


# TODO(synk): teacher forcing (host-side np.random + per-example .item() scatter of
# ground_truth) and Categorical sampling (sample_decode=True) are host/data-dependent
# control flow with no clean in-kernel equivalent; only the deterministic greedy
# branch is implemented.

if __name__ == "__main__":
    B, T = 2, 8                        # batch, listener time steps
    listener_hidden = 16               # listener feat dim D = 32
    speller_hidden = 2 * listener_hidden
    mlp_hidden = 32
    num_labels = 16
    label_maxlen = 6
    sos_index = 0

    key = jax.random.PRNGKey(0)
    k_feat, k_par = jax.random.split(key)
    listener_feats = jax.random.normal(
        k_feat, (B, T, 2 * listener_hidden), jnp.float32)
    params = init_params(k_par, num_labels, speller_hidden,
                         listener_hidden, mlp_hidden)

    out = speller_forward(listener_feats, params, label_maxlen=label_maxlen,
                          sos_index=sos_index, num_labels=num_labels)
    out = jax.block_until_ready(out)
    assert out.shape == (B, label_maxlen, num_labels)

    ref = speller_reference(listener_feats, params, label_maxlen=label_maxlen,
                            sos_index=sos_index, num_labels=num_labels)
    np.testing.assert_allclose(np.asarray(out), np.asarray(ref),
                               atol=1e-2, rtol=1e-2)
    print("KERNEL_OK")
</pallas_src>

<mosaic_0001>
module attributes {stable_mosaic.version = 11 : i64} {
  func.func @speller_kernel(%arg0: i32, %arg1: i32, %arg2: memref<2x8x32xf32, #tpu.memory_space<vmem>>, %arg3: memref<128x128xbf16, #tpu.memory_space<vmem>>, %arg4: memref<32x128xbf16, #tpu.memory_space<vmem>>, %arg5: memref<32x128xbf16, #tpu.memory_space<vmem>>, %arg6: memref<1x128xf32, #tpu.memory_space<vmem>>, %arg7: memref<32x32xbf16, #tpu.memory_space<vmem>>, %arg8: memref<1x32xf32, #tpu.memory_space<vmem>>, %arg9: memref<32x32xbf16, #tpu.memory_space<vmem>>, %arg10: memref<1x32xf32, #tpu.memory_space<vmem>>, %arg11: memref<32x128xbf16, #tpu.memory_space<vmem>>, %arg12: memref<32x128xbf16, #tpu.memory_space<vmem>>, %arg13: memref<1x128xf32, #tpu.memory_space<vmem>>, %arg14: memref<1x2x128xf32, #tpu.memory_space<vmem>>, %arg15: memref<2x8x32xf32, #tpu.memory_space<vmem>>, %arg16: memref<2x128xf32, #tpu.memory_space<vmem>>, %arg17: memref<2x32xf32, #tpu.memory_space<vmem>>, %arg18: memref<2x32xf32, #tpu.memory_space<vmem>>, %arg19: memref<2x32xf32, #tpu.memory_space<vmem>>) attributes {dimension_semantics = [#tpu.dimension_semantics<parallel>, #tpu.dimension_semantics<arbitrary>], iteration_bounds = array<i64: 1, 6>, scalar_prefetch = 0 : i64, scratch_operands = 5 : i64, tpu.core_type = #tpu.core_type<tc>, window_params = [{transform_indices = @transform_0, window_bounds = array<i64: 2, 8, 32>}, {pipeline_mode = #tpu.pipeline_mode<synchronous>, transform_indices = @transform_1, window_bounds = array<i64: 128, 128>}, {pipeline_mode = #tpu.pipeline_mode<synchronous>, transform_indices = @transform_2, window_bounds = array<i64: 32, 128>}, {pipeline_mode = #tpu.pipeline_mode<synchronous>, transform_indices = @transform_3, window_bounds = array<i64: 32, 128>}, {pipeline_mode = #tpu.pipeline_mode<synchronous>, transform_indices = @transform_4, window_bounds = array<i64: 1, 128>}, {pipeline_mode = #tpu.pipeline_mode<synchronous>, transform_indices = @transform_5, window_bounds = array<i64: 32, 32>}, {pipeline_mode = #tpu.pipeline_mode<synchronous>, transform_indices = @transform_6, window_bounds = array<i64: 1, 32>}, {pipeline_mode = #tpu.pipeline_mode<synchronous>, transform_indices = @transform_7, window_bounds = array<i64: 32, 32>}, {pipeline_mode = #tpu.pipeline_mode<synchronous>, transform_indices = @transform_8, window_bounds = array<i64: 1, 32>}, {pipeline_mode = #tpu.pipeline_mode<synchronous>, transform_indices = @transform_9, window_bounds = array<i64: 32, 128>}, {pipeline_mode = #tpu.pipeline_mode<synchronous>, transform_indices = @transform_10, window_bounds = array<i64: 32, 128>}, {pipeline_mode = #tpu.pipeline_mode<synchronous>, transform_indices = @transform_11, window_bounds = array<i64: 1, 128>}, {transform_indices = @transform_12, window_bounds = array<i64: 1, 2, 128>}]} {
    %c0 = arith.constant 0 : index
    %c0_0 = arith.constant 0 : index
    %c0_1 = arith.constant 0 : index
    %0 = vector.load %arg2[%c0, %c0_0, %c0_1] : memref<2x8x32xf32, #tpu.memory_space<vmem>>, vector<2x8x32xf32>
    %c0_i32 = arith.constant 0 : i32
    %1 = arith.cmpi eq, %arg1, %c0_i32 : i32
    %2 = arith.extui %1 : i1 to i32
    %c0_i32_2 = arith.constant 0 : i32
    %3 = arith.cmpi ne, %2, %c0_i32_2 : i32
    scf.if %3 {
      %114 = vector.shape_cast %0 : vector<2x8x32xf32> to vector<16x32xf32>
      %115 = arith.truncf %114 : vector<16x32xf32> to vector<16x32xbf16>
      %c0_60 = arith.constant 0 : index
      %c0_61 = arith.constant 0 : index
      %116 = vector.load %arg9[%c0_60, %c0_61] : memref<32x32xbf16, #tpu.memory_space<vmem>>, vector<32x32xbf16>
      %cst_62 = arith.constant dense<0.000000e+00> : vector<16x32xf32>
      %117 = tpu.matmul %115, %116, %cst_62 {dimension_numbers = #tpu.dot_dimension_numbers<[1], [0], [0], [1], [0, 0, 1, 1], [], []>} : vector<16x32xbf16>, vector<32x32xbf16>, vector<16x32xf32> -> vector<16x32xf32>
      %c0_63 = arith.constant 0 : index
      %c0_64 = arith.constant 0 : index
      %118 = vector.load %arg10[%c0_63, %c0_64] : memref<1x32xf32, #tpu.memory_space<vmem>>, vector<1x32xf32>
      %119 = vector.broadcast %118 : vector<1x32xf32> to vector<16x32xf32>
      %120 = arith.addf %117, %119 : vector<16x32xf32>
      %cst_65 = arith.constant 0.000000e+00 : f32
      %121 = vector.broadcast %cst_65 : f32 to vector<16x32xf32>
      %122 = arith.maximumf %120, %121 : vector<16x32xf32>
      %123 = vector.shape_cast %122 : vector<16x32xf32> to vector<2x8x32xf32>
      %c0_66 = arith.constant 0 : index
      %c0_67 = arith.constant 0 : index
      %c0_68 = arith.constant 0 : index
      %124 = vector.load %arg15[%c0_66, %c0_67, %c0_68] : memref<2x8x32xf32, #tpu.memory_space<vmem>>, vector<2x8x32xf32>
      tpu.vector_store %arg15[%c0_66, %c0_67, %c0_68], %123 {strides = array<i32>} : memref<2x8x32xf32, #tpu.memory_space<vmem>>, vector<2x8x32xf32>,
      %cst_69 = arith.constant 0.000000e+00 : f32
      %125 = vector.broadcast %cst_69 : f32 to vector<2x128xf32>
      %c0_70 = arith.constant 0 : index
      %c0_71 = arith.constant 0 : index
      %126 = vector.load %arg3[%c0_70, %c0_71] : memref<128x128xbf16, #tpu.memory_space<vmem>>, vector<1x128xbf16>
      %127 = arith.extf %126 : vector<1x128xbf16> to vector<1x128xf32>
      %128 = vector.broadcast %127 : vector<1x128xf32> to vector<2x128xf32>
      %129 = arith.addf %125, %128 : vector<2x128xf32>
      %c0_72 = arith.constant 0 : index
      %c0_73 = arith.constant 0 : index
      %130 = vector.load %arg16[%c0_72, %c0_73] : memref<2x128xf32, #tpu.memory_space<vmem>>, vector<2x128xf32>
      tpu.vector_store %arg16[%c0_72, %c0_73], %129 {strides = array<i32>} : memref<2x128xf32, #tpu.memory_space<vmem>>, vector<2x128xf32>,
      %131 = vector.extract_strided_slice %0 {offsets = [0, 0, 0], sizes = [2, 1, 32], strides = [1, 1, 1]} : vector<2x8x32xf32> to vector<2x1x32xf32>
      %132 = vector.shape_cast %131 : vector<2x1x32xf32> to vector<2x32xf32>
      %c0_74 = arith.constant 0 : index
      %c0_75 = arith.constant 0 : index
      %133 = vector.load %arg17[%c0_74, %c0_75] : memref<2x32xf32, #tpu.memory_space<vmem>>, vector<2x32xf32>
      tpu.vector_store %arg17[%c0_74, %c0_75], %132 {strides = array<i32>} : memref<2x32xf32, #tpu.memory_space<vmem>>, vector<2x32xf32>,
      %cst_76 = arith.constant 0.000000e+00 : f32
      %134 = vector.broadcast %cst_76 : f32 to vector<2x32xf32>
      %c0_77 = arith.constant 0 : index
      %c0_78 = arith.constant 0 : index
      %135 = vector.load %arg18[%c0_77, %c0_78] : memref<2x32xf32, #tpu.memory_space<vmem>>, vector<2x32xf32>
      tpu.vector_store %arg18[%c0_77, %c0_78], %134 {strides = array<i32>} : memref<2x32xf32, #tpu.memory_space<vmem>>, vector<2x32xf32>,
      %cst_79 = arith.constant 0.000000e+00 : f32
      %136 = vector.broadcast %cst_79 : f32 to vector<2x32xf32>
      %c0_80 = arith.constant 0 : index
      %c0_81 = arith.constant 0 : index
      %137 = vector.load %arg19[%c0_80, %c0_81] : memref<2x32xf32, #tpu.memory_space<vmem>>, vector<2x32xf32>
      tpu.vector_store %arg19[%c0_80, %c0_81], %136 {strides = array<i32>} : memref<2x32xf32, #tpu.memory_space<vmem>>, vector<2x32xf32>,
    } else {
    }
    %c0_3 = arith.constant 0 : index
    %c0_4 = arith.constant 0 : index
    %4 = vector.load %arg16[%c0_3, %c0_4] : memref<2x128xf32, #tpu.memory_space<vmem>>, vector<2x128xf32>
    %c0_5 = arith.constant 0 : index
    %c0_6 = arith.constant 0 : index
    %5 = vector.load %arg17[%c0_5, %c0_6] : memref<2x32xf32, #tpu.memory_space<vmem>>, vector<2x32xf32>
    %c0_7 = arith.constant 0 : index
    %c0_8 = arith.constant 0 : index
    %6 = vector.load %arg18[%c0_7, %c0_8] : memref<2x32xf32, #tpu.memory_space<vmem>>, vector<2x32xf32>
    %c0_9 = arith.constant 0 : index
    %c0_10 = arith.constant 0 : index
    %7 = vector.load %arg19[%c0_9, %c0_10] : memref<2x32xf32, #tpu.memory_space<vmem>>, vector<2x32xf32>
    %8 = arith.truncf %5 : vector<2x32xf32> to vector<2x32xbf16>
    %c0_11 = arith.constant 0 : index
    %c0_12 = arith.constant 0 : index
    %9 = vector.load %arg4[%c0_11, %c0_12] : memref<32x128xbf16, #tpu.memory_space<vmem>>, vector<32x128xbf16>
    %cst = arith.constant dense<0.000000e+00> : vector<2x128xf32>
    %10 = tpu.matmul %8, %9, %cst {dimension_numbers = #tpu.dot_dimension_numbers<[1], [0], [0], [1], [0, 0, 1, 1], [], []>} : vector<2x32xbf16>, vector<32x128xbf16>, vector<2x128xf32> -> vector<2x128xf32>
    %11 = arith.addf %4, %10 : vector<2x128xf32>
    %12 = arith.truncf %6 : vector<2x32xf32> to vector<2x32xbf16>
    %c0_13 = arith.constant 0 : index
    %c0_14 = arith.constant 0 : index
    %13 = vector.load %arg5[%c0_13, %c0_14] : memref<32x128xbf16, #tpu.memory_space<vmem>>, vector<32x128xbf16>
    %cst_15 = arith.constant dense<0.000000e+00> : vector<2x128xf32>
    %14 = tpu.matmul %12, %13, %cst_15 {dimension_numbers = #tpu.dot_dimension_numbers<[1], [0], [0], [1], [0, 0, 1, 1], [], []>} : vector<2x32xbf16>, vector<32x128xbf16>, vector<2x128xf32> -> vector<2x128xf32>
    %15 = arith.addf %11, %14 : vector<2x128xf32>
    %c0_16 = arith.constant 0 : index
    %c0_17 = arith.constant 0 : index
    %16 = vector.load %arg6[%c0_16, %c0_17] : memref<1x128xf32, #tpu.memory_space<vmem>>, vector<1x128xf32>
    %17 = vector.broadcast %16 : vector<1x128xf32> to vector<2x128xf32>
    %18 = arith.addf %15, %17 : vector<2x128xf32>
    %19 = vector.extract_strided_slice %18 {offsets = [0, 0], sizes = [2, 32], strides = [1, 1]} : vector<2x128xf32> to vector<2x32xf32>
    %20 = arith.negf %19 : vector<2x32xf32>
    %21 = math.exp %20 : vector<2x32xf32>
    %cst_18 = arith.constant 1.000000e+00 : f32
    %22 = vector.broadcast %cst_18 : f32 to vector<2x32xf32>
    %23 = arith.addf %22, %21 : vector<2x32xf32>
    %24 = arith.divf %22, %23 : vector<2x32xf32>
    %25 = vector.extract_strided_slice %18 {offsets = [0, 32], sizes = [2, 32], strides = [1, 1]} : vector<2x128xf32> to vector<2x32xf32>
    %26 = arith.negf %25 : vector<2x32xf32>
    %27 = math.exp %26 : vector<2x32xf32>
    %cst_19 = arith.constant 1.000000e+00 : f32
    %28 = vector.broadcast %cst_19 : f32 to vector<2x32xf32>
    %29 = arith.addf %28, %27 : vector<2x32xf32>
    %30 = arith.divf %28, %29 : vector<2x32xf32>
    %31 = vector.extract_strided_slice %18 {offsets = [0, 64], sizes = [2, 32], strides = [1, 1]} : vector<2x128xf32> to vector<2x32xf32>
    %32 = math.tanh %31 : vector<2x32xf32>
    %33 = vector.extract_strided_slice %18 {offsets = [0, 96], sizes = [2, 32], strides = [1, 1]} : vector<2x128xf32> to vector<2x32xf32>
    %34 = arith.negf %33 : vector<2x32xf32>
    %35 = math.exp %34 : vector<2x32xf32>
    %cst_20 = arith.constant 1.000000e+00 : f32
    %36 = vector.broadcast %cst_20 : f32 to vector<2x32xf32>
    %37 = arith.addf %36, %35 : vector<2x32xf32>
    %38 = arith.divf %36, %37 : vector<2x32xf32>
    %39 = arith.mulf %30, %7 : vector<2x32xf32>
    %40 = arith.mulf %24, %32 : vector<2x32xf32>
    %41 = arith.addf %39, %40 : vector<2x32xf32>
    %42 = math.tanh %41 : vector<2x32xf32>
    %43 = arith.mulf %38, %42 : vector<2x32xf32>
    %44 = arith.truncf %43 : vector<2x32xf32> to vector<2x32xbf16>
    %c0_21 = arith.constant 0 : index
    %c0_22 = arith.constant 0 : index
    %45 = vector.load %arg7[%c0_21, %c0_22] : memref<32x32xbf16, #tpu.memory_space<vmem>>, vector<32x32xbf16>
    %cst_23 = arith.constant dense<0.000000e+00> : vector<2x32xf32>
    %46 = tpu.matmul %44, %45, %cst_23 {dimension_numbers = #tpu.dot_dimension_numbers<[1], [0], [0], [1], [0, 0, 1, 1], [], []>} : vector<2x32xbf16>, vector<32x32xbf16>, vector<2x32xf32> -> vector<2x32xf32>
    %c0_24 = arith.constant 0 : index
    %c0_25 = arith.constant 0 : index
    %47 = vector.load %arg8[%c0_24, %c0_25] : memref<1x32xf32, #tpu.memory_space<vmem>>, vector<1x32xf32>
    %48 = vector.broadcast %47 : vector<1x32xf32> to vector<2x32xf32>
    %49 = arith.addf %46, %48 : vector<2x32xf32>
    %cst_26 = arith.constant 0.000000e+00 : f32
    %50 = vector.broadcast %cst_26 : f32 to vector<2x32xf32>
    %51 = arith.maximumf %49, %50 : vector<2x32xf32>
    %52 = vector.shape_cast %51 : vector<2x32xf32> to vector<2x1x32xf32>
    %c0_27 = arith.constant 0 : index
    %c0_28 = arith.constant 0 : index
    %c0_29 = arith.constant 0 : index
    %53 = vector.load %arg15[%c0_27, %c0_28, %c0_29] : memref<2x8x32xf32, #tpu.memory_space<vmem>>, vector<2x8x32xf32>
    "tpu.trace_start"() <{level = 10 : i32, message = "bqm,btm->bqt"}> : () -> ()
    %cst_30 = arith.constant dense<0.000000e+00> : vector<2x1x8xf32>
    %54 = tpu.matmul %52, %53, %cst_30 {dimension_numbers = #tpu.dot_dimension_numbers<[2], [2], [1], [1], [0, 0, 0, 1, 1, 1], [0], [0]>} : vector<2x1x32xf32>, vector<2x8x32xf32>, vector<2x1x8xf32> -> vector<2x1x8xf32>
    "tpu.trace_stop"() : () -> ()
    %55 = vector.shape_cast %54 : vector<2x1x8xf32> to vector<2x8xf32>
    %cst_31 = arith.constant dense<0xFF800000> : vector<2xf32>
    %56 = vector.multi_reduction <maximumf>, %55, %cst_31 [1] : vector<2x8xf32> to vector<2xf32>
    %57 = vector.shape_cast %56 : vector<2xf32> to vector<2x1xf32>
    %58 = vector.broadcast %57 : vector<2x1xf32> to vector<2x8xf32>
    %59 = arith.subf %55, %58 : vector<2x8xf32>
    %60 = math.exp %59 : vector<2x8xf32>
    %cst_32 = arith.constant dense<0.000000e+00> : vector<2xf32>
    %61 = vector.multi_reduction <add>, %60, %cst_32 [1] : vector<2x8xf32> to vector<2xf32>
    %62 = vector.shape_cast %61 : vector<2xf32> to vector<2x1xf32>
    %63 = tpu.reciprocal %62 {approx = true} : vector<2x1xf32> -> vector<2x1xf32>
    %64 = vector.broadcast %63 : vector<2x1xf32> to vector<2x8xf32>
    %65 = arith.mulf %60, %64 : vector<2x8xf32>
    %66 = vector.shape_cast %65 : vector<2x8xf32> to vector<2x1x8xf32>
    "tpu.trace_start"() <{level = 10 : i32, message = "bqt,btd->bqd"}> : () -> ()
    %cst_33 = arith.constant dense<0.000000e+00> : vector<2x1x32xf32>
    %67 = tpu.matmul %66, %0, %cst_33 {dimension_numbers = #tpu.dot_dimension_numbers<[2], [1], [1], [2], [0, 0, 0, 1, 1, 2], [0], [0]>} : vector<2x1x8xf32>, vector<2x8x32xf32>, vector<2x1x32xf32> -> vector<2x1x32xf32>
    "tpu.trace_stop"() : () -> ()
    %68 = vector.shape_cast %67 : vector<2x1x32xf32> to vector<2x32xf32>
    %69 = arith.truncf %43 : vector<2x32xf32> to vector<2x32xbf16>
    %c0_34 = arith.constant 0 : index
    %c0_35 = arith.constant 0 : index
    %70 = vector.load %arg11[%c0_34, %c0_35] : memref<32x128xbf16, #tpu.memory_space<vmem>>, vector<32x128xbf16>
    %cst_36 = arith.constant dense<0.000000e+00> : vector<2x128xf32>
    %71 = tpu.matmul %69, %70, %cst_36 {dimension_numbers = #tpu.dot_dimension_numbers<[1], [0], [0], [1], [0, 0, 1, 1], [], []>} : vector<2x32xbf16>, vector<32x128xbf16>, vector<2x128xf32> -> vector<2x128xf32>
    %72 = arith.truncf %68 : vector<2x32xf32> to vector<2x32xbf16>
    %c0_37 = arith.constant 0 : index
    %c0_38 = arith.constant 0 : index
    %73 = vector.load %arg12[%c0_37, %c0_38] : memref<32x128xbf16, #tpu.memory_space<vmem>>, vector<32x128xbf16>
    %cst_39 = arith.constant dense<0.000000e+00> : vector<2x128xf32>
    %74 = tpu.matmul %72, %73, %cst_39 {dimension_numbers = #tpu.dot_dimension_numbers<[1], [0], [0], [1], [0, 0, 1, 1], [], []>} : vector<2x32xbf16>, vector<32x128xbf16>, vector<2x128xf32> -> vector<2x128xf32>
    %75 = arith.addf %71, %74 : vector<2x128xf32>
    %c0_40 = arith.constant 0 : index
    %c0_41 = arith.constant 0 : index
    %76 = vector.load %arg13[%c0_40, %c0_41] : memref<1x128xf32, #tpu.memory_space<vmem>>, vector<1x128xf32>
    %77 = vector.broadcast %76 : vector<1x128xf32> to vector<2x128xf32>
    %78 = arith.addf %75, %77 : vector<2x128xf32>
    %cst_42 = arith.constant dense<0xFF800000> : vector<2xf32>
    %79 = vector.multi_reduction <maximumf>, %78, %cst_42 [1] : vector<2x128xf32> to vector<2xf32>
    %80 = vector.shape_cast %79 : vector<2xf32> to vector<2x1xf32>
    %81 = vector.broadcast %80 : vector<2x1xf32> to vector<2x128xf32>
    %82 = arith.subf %78, %81 : vector<2x128xf32>
    %83 = vector.broadcast %80 : vector<2x1xf32> to vector<2x128xf32>
    %84 = arith.subf %78, %83 : vector<2x128xf32>
    %85 = math.exp %84 : vector<2x128xf32>
    %cst_43 = arith.constant dense<0.000000e+00> : vector<2xf32>
    %86 = vector.multi_reduction <add>, %85, %cst_43 [1] : vector<2x128xf32> to vector<2xf32>
    %87 = vector.shape_cast %86 : vector<2xf32> to vector<2x1xf32>
    %88 = math.log %87 : vector<2x1xf32>
    %89 = vector.broadcast %88 : vector<2x1xf32> to vector<2x128xf32>
    %90 = arith.subf %82, %89 : vector<2x128xf32>
    %c0_44 = arith.constant 0 : index
    %c0_45 = arith.constant 0 : index
    %c0_46 = arith.constant 0 : index
    %91 = vector.load %arg14[%c0_44, %c0_45, %c0_46] : memref<1x2x128xf32, #tpu.memory_space<vmem>>, vector<1x2x128xf32>
    %92 = vector.shape_cast %91 : vector<1x2x128xf32> to vector<2x128xf32>
    %93 = vector.shape_cast %90 : vector<2x128xf32> to vector<1x2x128xf32>
    tpu.vector_store %arg14[%c0_44, %c0_45, %c0_46], %93 {strides = array<i32>} : memref<1x2x128xf32, #tpu.memory_space<vmem>>, vector<1x2x128xf32>,
    %94 = tpu.iota {dimensions = array<i32: 1>} : vector<2x128xi32>
    %cst_47 = arith.constant dense<0xFF800000> : vector<2xf32>
    %95 = vector.multi_reduction <maximumf>, %90, %cst_47 [1] : vector<2x128xf32> to vector<2xf32>
    %96 = vector.shape_cast %95 : vector<2xf32> to vector<2x1xf32>
    %97 = vector.broadcast %96 : vector<2x1xf32> to vector<2x128xf32>
    %98 = arith.cmpf oeq, %90, %97 : vector<2x128xf32>
    %c128_i32 = arith.constant 128 : i32
    %99 = vector.broadcast %c128_i32 : i32 to vector<2x128xi32>
    %100 = arith.select %98, %94, %99 : vector<2x128xi1>, vector<2x128xi32>
    %cst_48 = arith.constant dense<2147483647> : vector<2xi32>
    %101 = vector.multi_reduction <minsi>, %100, %cst_48 [1] : vector<2x128xi32> to vector<2xi32>
    %102 = vector.shape_cast %101 : vector<2xi32> to vector<2x1xi32>
    %103 = vector.broadcast %102 : vector<2x1xi32> to vector<2x128xi32>
    %104 = arith.cmpi eq, %94, %103 : vector<2x128xi32>
    %105 = arith.extui %104 : vector<2x128xi1> to vector<2x128xi32>
    %106 = arith.sitofp %105 : vector<2x128xi32> to vector<2x128xf32>
    %107 = arith.truncf %106 : vector<2x128xf32> to vector<2x128xbf16>
    %c0_49 = arith.constant 0 : index
    %c0_50 = arith.constant 0 : index
    %108 = vector.load %arg3[%c0_49, %c0_50] : memref<128x128xbf16, #tpu.memory_space<vmem>>, vector<128x128xbf16>
    %cst_51 = arith.constant dense<0.000000e+00> : vector<2x128xf32>
    %109 = tpu.matmul %107, %108, %cst_51 {dimension_numbers = #tpu.dot_dimension_numbers<[1], [0], [0], [1], [0, 0, 1, 1], [], []>} : vector<2x128xbf16>, vector<128x128xbf16>, vector<2x128xf32> -> vector<2x128xf32>
    %c0_52 = arith.constant 0 : index
    %c0_53 = arith.constant 0 : index
    %110 = vector.load %arg16[%c0_52, %c0_53] : memref<2x128xf32, #tpu.memory_space<vmem>>, vector<2x128xf32>
    tpu.vector_store %arg16[%c0_52, %c0_53], %109 {strides = array<i32>} : memref<2x128xf32, #tpu.memory_space<vmem>>, vector<2x128xf32>,
    %c0_54 = arith.constant 0 : index
    %c0_55 = arith.constant 0 : index
    %111 = vector.load %arg17[%c0_54, %c0_55] : memref<2x32xf32, #tpu.memory_space<vmem>>, vector<2x32xf32>
    tpu.vector_store %arg17[%c0_54, %c0_55], %68 {strides = array<i32>} : memref<2x32xf32, #tpu.memory_space<vmem>>, vector<2x32xf32>,
    %c0_56 = arith.constant 0 : index
    %c0_57 = arith.constant 0 : index
    %112 = vector.load %arg18[%c0_56, %c0_57] : memref<2x32xf32, #tpu.memory_space<vmem>>, vector<2x32xf32>
    tpu.vector_store %arg18[%c0_56, %c0_57], %43 {strides = array<i32>} : memref<2x32xf32, #tpu.memory_space<vmem>>, vector<2x32xf32>,
    %c0_58 = arith.constant 0 : index
    %c0_59 = arith.constant 0 : index
    %113 = vector.load %arg19[%c0_58, %c0_59] : memref<2x32xf32, #tpu.memory_space<vmem>>, vector<2x32xf32>
    tpu.vector_store %arg19[%c0_58, %c0_59], %41 {strides = array<i32>} : memref<2x32xf32, #tpu.memory_space<vmem>>, vector<2x32xf32>,
    return
  }
  func.func @transform_0(%arg0: i32, %arg1: i32) -> (i32, i32, i32) {
    %c0_i32 = arith.constant 0 : i32
    %c0_i32_0 = arith.constant 0 : i32
    %c0_i32_1 = arith.constant 0 : i32
    return %arg0, %c0_i32, %c0_i32_0 : i32, i32, i32
  }
  func.func @transform_1(%arg0: i32, %arg1: i32) -> (i32, i32) {
    %c0_i32 = arith.constant 0 : i32
    %c0_i32_0 = arith.constant 0 : i32
    %c0_i32_1 = arith.constant 0 : i32
    return %c0_i32, %c0_i32_0 : i32, i32
  }
  func.func @transform_2(%arg0: i32, %arg1: i32) -> (i32, i32) {
    %c0_i32 = arith.constant 0 : i32
    %c0_i32_0 = arith.constant 0 : i32
    %c0_i32_1 = arith.constant 0 : i32
    return %c0_i32, %c0_i32_0 : i32, i32
  }
  func.func @transform_3(%arg0: i32, %arg1: i32) -> (i32, i32) {
    %c0_i32 = arith.constant 0 : i32
    %c0_i32_0 = arith.constant 0 : i32
    %c0_i32_1 = arith.constant 0 : i32
    return %c0_i32, %c0_i32_0 : i32, i32
  }
  func.func @transform_4(%arg0: i32, %arg1: i32) -> (i32, i32) {
    %c0_i32 = arith.constant 0 : i32
    %c0_i32_0 = arith.constant 0 : i32
    %c0_i32_1 = arith.constant 0 : i32
    return %c0_i32, %c0_i32_0 : i32, i32
  }
  func.func @transform_5(%arg0: i32, %arg1: i32) -> (i32, i32) {
    %c0_i32 = arith.constant 0 : i32
    %c0_i32_0 = arith.constant 0 : i32
    %c0_i32_1 = arith.constant 0 : i32
    return %c0_i32, %c0_i32_0 : i32, i32
  }
  func.func @transform_6(%arg0: i32, %arg1: i32) -> (i32, i32) {
    %c0_i32 = arith.constant 0 : i32
    %c0_i32_0 = arith.constant 0 : i32
    %c0_i32_1 = arith.constant 0 : i32
    return %c0_i32, %c0_i32_0 : i32, i32
  }
  func.func @transform_7(%arg0: i32, %arg1: i32) -> (i32, i32) {
    %c0_i32 = arith.constant 0 : i32
    %c0_i32_0 = arith.constant 0 : i32
    %c0_i32_1 = arith.constant 0 : i32
    return %c0_i32, %c0_i32_0 : i32, i32
  }
  func.func @transform_8(%arg0: i32, %arg1: i32) -> (i32, i32) {
    %c0_i32 = arith.constant 0 : i32
    %c0_i32_0 = arith.constant 0 : i32
    %c0_i32_1 = arith.constant 0 : i32
    return %c0_i32, %c0_i32_0 : i32, i32
  }
  func.func @transform_9(%arg0: i32, %arg1: i32) -> (i32, i32) {
    %c0_i32 = arith.constant 0 : i32
    %c0_i32_0 = arith.constant 0 : i32
    %c0_i32_1 = arith.constant 0 : i32
    return %c0_i32, %c0_i32_0 : i32, i32
  }
  func.func @transform_10(%arg0: i32, %arg1: i32) -> (i32, i32) {
    %c0_i32 = arith.constant 0 : i32
    %c0_i32_0 = arith.constant 0 : i32
    %c0_i32_1 = arith.constant 0 : i32
    return %c0_i32, %c0_i32_0 : i32, i32
  }
  func.func @transform_11(%arg0: i32, %arg1: i32) -> (i32, i32) {
    %c0_i32 = arith.constant 0 : i32
    %c0_i32_0 = arith.constant 0 : i32
    %c0_i32_1 = arith.constant 0 : i32
    return %c0_i32, %c0_i32_0 : i32, i32
  }
  func.func @transform_12(%arg0: i32, %arg1: i32) -> (i32, i32, i32) {
    %c0_i32 = arith.constant 0 : i32
    %c0_i32_0 = arith.constant 0 : i32
    return %arg1, %arg0, %c0_i32 : i32, i32, i32
  }
}

module attributes {stable_mosaic.version = 11 : i64} {
  func.func @speller_kernel(%arg0: i32, %arg1: i32, %arg2: memref<2x8x32xf32, #tpu.memory_space<vmem>>, %arg3: memref<128x128xbf16, #tpu.memory_space<vmem>>, %arg4: memref<32x128xbf16, #tpu.memory_space<vmem>>, %arg5: memref<32x128xbf16, #tpu.memory_space<vmem>>, %arg6: memref<1x128xf32, #tpu.memory_space<vmem>>, %arg7: memref<32x32xbf16, #tpu.memory_space<vmem>>, %arg8: memref<1x32xf32, #tpu.memory_space<vmem>>, %arg9: memref<32x32xbf16, #tpu.memory_space<vmem>>, %arg10: memref<1x32xf32, #tpu.memory_space<vmem>>, %arg11: memref<32x128xbf16, #tpu.memory_space<vmem>>, %arg12: memref<32x128xbf16, #tpu.memory_space<vmem>>, %arg13: memref<1x128xf32, #tpu.memory_space<vmem>>, %arg14: memref<1x2x128xf32, #tpu.memory_space<vmem>>, %arg15: memref<2x8x32xf32, #tpu.memory_space<vmem>>, %arg16: memref<2x128xf32, #tpu.memory_space<vmem>>, %arg17: memref<2x32xf32, #tpu.memory_space<vmem>>, %arg18: memref<2x32xf32, #tpu.memory_space<vmem>>, %arg19: memref<2x32xf32, #tpu.memory_space<vmem>>) attributes {dimension_semantics = [#tpu.dimension_semantics<parallel>, #tpu.dimension_semantics<arbitrary>], iteration_bounds = array<i64: 1, 6>, scalar_prefetch = 0 : i64, scratch_operands = 5 : i64, tpu.core_type = #tpu.core_type<tc>, window_params = [{transform_indices = @transform_0, window_bounds = array<i64: 2, 8, 32>}, {pipeline_mode = #tpu.pipeline_mode<synchronous>, transform_indices = @transform_1, window_bounds = array<i64: 128, 128>}, {pipeline_mode = #tpu.pipeline_mode<synchronous>, transform_indices = @transform_2, window_bounds = array<i64: 32, 128>}, {pipeline_mode = #tpu.pipeline_mode<synchronous>, transform_indices = @transform_3, window_bounds = array<i64: 32, 128>}, {pipeline_mode = #tpu.pipeline_mode<synchronous>, transform_indices = @transform_4, window_bounds = array<i64: 1, 128>}, {pipeline_mode = #tpu.pipeline_mode<synchronous>, transform_indices = @transform_5, window_bounds = array<i64: 32, 32>}, {pipeline_mode = #tpu.pipeline_mode<synchronous>, transform_indices = @transform_6, window_bounds = array<i64: 1, 32>}, {pipeline_mode = #tpu.pipeline_mode<synchronous>, transform_indices = @transform_7, window_bounds = array<i64: 32, 32>}, {pipeline_mode = #tpu.pipeline_mode<synchronous>, transform_indices = @transform_8, window_bounds = array<i64: 1, 32>}, {pipeline_mode = #tpu.pipeline_mode<synchronous>, transform_indices = @transform_9, window_bounds = array<i64: 32, 128>}, {pipeline_mode = #tpu.pipeline_mode<synchronous>, transform_indices = @transform_10, window_bounds = array<i64: 32, 128>}, {pipeline_mode = #tpu.pipeline_mode<synchronous>, transform_indices = @transform_11, window_bounds = array<i64: 1, 128>}, {transform_indices = @transform_12, window_bounds = array<i64: 1, 2, 128>}]} {
    %c0 = arith.constant 0 : index
    %c0_0 = arith.constant 0 : index
    %c0_1 = arith.constant 0 : index
    %0 = vector.load %arg2[%c0, %c0_0, %c0_1] : memref<2x8x32xf32, #tpu.memory_space<vmem>>, vector<2x8x32xf32>
    %c0_i32 = arith.constant 0 : i32
    %1 = arith.cmpi eq, %arg1, %c0_i32 : i32
    %2 = arith.extui %1 : i1 to i32
    %c0_i32_2 = arith.constant 0 : i32
    %3 = arith.cmpi ne, %2, %c0_i32_2 : i32
    scf.if %3 {
      %114 = vector.shape_cast %0 : vector<2x8x32xf32> to vector<16x32xf32>
      %115 = arith.truncf %114 : vector<16x32xf32> to vector<16x32xbf16>
      %c0_60 = arith.constant 0 : index
      %c0_61 = arith.constant 0 : index
      %116 = vector.load %arg9[%c0_60, %c0_61] : memref<32x32xbf16, #tpu.memory_space<vmem>>, vector<32x32xbf16>
      %cst_62 = arith.constant dense<0.000000e+00> : vector<16x32xf32>
      %117 = tpu.matmul %115, %116, %cst_62 {dimension_numbers = #tpu.dot_dimension_numbers<[1], [0], [0], [1], [0, 0, 1, 1], [], []>} : vector<16x32xbf16>, vector<32x32xbf16>, vector<16x32xf32> -> vector<16x32xf32>
      %c0_63 = arith.constant 0 : index
      %c0_64 = arith.constant 0 : index
      %118 = vector.load %arg10[%c0_63, %c0_64] : memref<1x32xf32, #tpu.memory_space<vmem>>, vector<1x32xf32>
      %119 = vector.broadcast %118 : vector<1x32xf32> to vector<16x32xf32>
      %120 = arith.addf %117, %119 : vector<16x32xf32>
      %cst_65 = arith.constant 0.000000e+00 : f32
      %121 = vector.broadcast %cst_65 : f32 to vector<16x32xf32>
      %122 = arith.maximumf %120, %121 : vector<16x32xf32>
      %123 = vector.shape_cast %122 : vector<16x32xf32> to vector<2x8x32xf32>
      %c0_66 = arith.constant 0 : index
      %c0_67 = arith.constant 0 : index
      %c0_68 = arith.constant 0 : index
      %124 = vector.load %arg15[%c0_66, %c0_67, %c0_68] : memref<2x8x32xf32, #tpu.memory_space<vmem>>, vector<2x8x32xf32>
      tpu.vector_store %arg15[%c0_66, %c0_67, %c0_68], %123 {strides = array<i32>} : memref<2x8x32xf32, #tpu.memory_space<vmem>>, vector<2x8x32xf32>,
      %cst_69 = arith.constant 0.000000e+00 : f32
      %125 = vector.broadcast %cst_69 : f32 to vector<2x128xf32>
      %c0_70 = arith.constant 0 : index
      %c0_71 = arith.constant 0 : index
      %126 = vector.load %arg3[%c0_70, %c0_71] : memref<128x128xbf16, #tpu.memory_space<vmem>>, vector<1x128xbf16>
      %127 = arith.extf %126 : vector<1x128xbf16> to vector<1x128xf32>
      %128 = vector.broadcast %127 : vector<1x128xf32> to vector<2x128xf32>
      %129 = arith.addf %125, %128 : vector<2x128xf32>
      %c0_72 = arith.constant 0 : index
      %c0_73 = arith.constant 0 : index
      %130 = vector.load %arg16[%c0_72, %c0_73] : memref<2x128xf32, #tpu.memory_space<vmem>>, vector<2x128xf32>
      tpu.vector_store %arg16[%c0_72, %c0_73], %129 {strides = array<i32>} : memref<2x128xf32, #tpu.memory_space<vmem>>, vector<2x128xf32>,
      %131 = vector.extract_strided_slice %0 {offsets = [0, 0, 0], sizes = [2, 1, 32], strides = [1, 1, 1]} : vector<2x8x32xf32> to vector<2x1x32xf32>
      %132 = vector.shape_cast %131 : vector<2x1x32xf32> to vector<2x32xf32>
      %c0_74 = arith.constant 0 : index
      %c0_75 = arith.constant 0 : index
      %133 = vector.load %arg17[%c0_74, %c0_75] : memref<2x32xf32, #tpu.memory_space<vmem>>, vector<2x32xf32>
      tpu.vector_store %arg17[%c0_74, %c0_75], %132 {strides = array<i32>} : memref<2x32xf32, #tpu.memory_space<vmem>>, vector<2x32xf32>,
      %cst_76 = arith.constant 0.000000e+00 : f32
      %134 = vector.broadcast %cst_76 : f32 to vector<2x32xf32>
      %c0_77 = arith.constant 0 : index
      %c0_78 = arith.constant 0 : index
      %135 = vector.load %arg18[%c0_77, %c0_78] : memref<2x32xf32, #tpu.memory_space<vmem>>, vector<2x32xf32>
      tpu.vector_store %arg18[%c0_77, %c0_78], %134 {strides = array<i32>} : memref<2x32xf32, #tpu.memory_space<vmem>>, vector<2x32xf32>,
      %cst_79 = arith.constant 0.000000e+00 : f32
      %136 = vector.broadcast %cst_79 : f32 to vector<2x32xf32>
      %c0_80 = arith.constant 0 : index
      %c0_81 = arith.constant 0 : index
      %137 = vector.load %arg19[%c0_80, %c0_81] : memref<2x32xf32, #tpu.memory_space<vmem>>, vector<2x32xf32>
      tpu.vector_store %arg19[%c0_80, %c0_81], %136 {strides = array<i32>} : memref<2x32xf32, #tpu.memory_space<vmem>>, vector<2x32xf32>,
    } else {
    }
    %c0_3 = arith.constant 0 : index
    %c0_4 = arith.constant 0 : index
    %4 = vector.load %arg16[%c0_3, %c0_4] : memref<2x128xf32, #tpu.memory_space<vmem>>, vector<2x128xf32>
    %c0_5 = arith.constant 0 : index
    %c0_6 = arith.constant 0 : index
    %5 = vector.load %arg17[%c0_5, %c0_6] : memref<2x32xf32, #tpu.memory_space<vmem>>, vector<2x32xf32>
    %c0_7 = arith.constant 0 : index
    %c0_8 = arith.constant 0 : index
    %6 = vector.load %arg18[%c0_7, %c0_8] : memref<2x32xf32, #tpu.memory_space<vmem>>, vector<2x32xf32>
    %c0_9 = arith.constant 0 : index
    %c0_10 = arith.constant 0 : index
    %7 = vector.load %arg19[%c0_9, %c0_10] : memref<2x32xf32, #tpu.memory_space<vmem>>, vector<2x32xf32>
    %8 = arith.truncf %5 : vector<2x32xf32> to vector<2x32xbf16>
    %c0_11 = arith.constant 0 : index
    %c0_12 = arith.constant 0 : index
    %9 = vector.load %arg4[%c0_11, %c0_12] : memref<32x128xbf16, #tpu.memory_space<vmem>>, vector<32x128xbf16>
    %cst = arith.constant dense<0.000000e+00> : vector<2x128xf32>
    %10 = tpu.matmul %8, %9, %cst {dimension_numbers = #tpu.dot_dimension_numbers<[1], [0], [0], [1], [0, 0, 1, 1], [], []>} : vector<2x32xbf16>, vector<32x128xbf16>, vector<2x128xf32> -> vector<2x128xf32>
    %11 = arith.addf %4, %10 : vector<2x128xf32>
    %12 = arith.truncf %6 : vector<2x32xf32> to vector<2x32xbf16>
    %c0_13 = arith.constant 0 : index
    %c0_14 = arith.constant 0 : index
    %13 = vector.load %arg5[%c0_13, %c0_14] : memref<32x128xbf16, #tpu.memory_space<vmem>>, vector<32x128xbf16>
    %cst_15 = arith.constant dense<0.000000e+00> : vector<2x128xf32>
    %14 = tpu.matmul %12, %13, %cst_15 {dimension_numbers = #tpu.dot_dimension_numbers<[1], [0], [0], [1], [0, 0, 1, 1], [], []>} : vector<2x32xbf16>, vector<32x128xbf16>, vector<2x128xf32> -> vector<2x128xf32>
    %15 = arith.addf %11, %14 : vector<2x128xf32>
    %c0_16 = arith.constant 0 : index
    %c0_17 = arith.constant 0 : index
    %16 = vector.load %arg6[%c0_16, %c0_17] : memref<1x128xf32, #tpu.memory_space<vmem>>, vector<1x128xf32>
    %17 = vector.broadcast %16 : vector<1x128xf32> to vector<2x128xf32>
    %18 = arith.addf %15, %17 : vector<2x128xf32>
    %19 = vector.extract_strided_slice %18 {offsets = [0, 0], sizes = [2, 32], strides = [1, 1]} : vector<2x128xf32> to vector<2x32xf32>
    %20 = arith.negf %19 : vector<2x32xf32>
    %21 = math.exp %20 : vector<2x32xf32>
    %cst_18 = arith.constant 1.000000e+00 : f32
    %22 = vector.broadcast %cst_18 : f32 to vector<2x32xf32>
    %23 = arith.addf %22, %21 : vector<2x32xf32>
    %24 = arith.divf %22, %23 : vector<2x32xf32>
    %25 = vector.extract_strided_slice %18 {offsets = [0, 32], sizes = [2, 32], strides = [1, 1]} : vector<2x128xf32> to vector<2x32xf32>
    %26 = arith.negf %25 : vector<2x32xf32>
    %27 = math.exp %26 : vector<2x32xf32>
    %cst_19 = arith.constant 1.000000e+00 : f32
    %28 = vector.broadcast %cst_19 : f32 to vector<2x32xf32>
    %29 = arith.addf %28, %27 : vector<2x32xf32>
    %30 = arith.divf %28, %29 : vector<2x32xf32>
    %31 = vector.extract_strided_slice %18 {offsets = [0, 64], sizes = [2, 32], strides = [1, 1]} : vector<2x128xf32> to vector<2x32xf32>
    %32 = math.tanh %31 : vector<2x32xf32>
    %33 = vector.extract_strided_slice %18 {offsets = [0, 96], sizes = [2, 32], strides = [1, 1]} : vector<2x128xf32> to vector<2x32xf32>
    %34 = arith.negf %33 : vector<2x32xf32>
    %35 = math.exp %34 : vector<2x32xf32>
    %cst_20 = arith.constant 1.000000e+00 : f32
    %36 = vector.broadcast %cst_20 : f32 to vector<2x32xf32>
    %37 = arith.addf %36, %35 : vector<2x32xf32>
    %38 = arith.divf %36, %37 : vector<2x32xf32>
    %39 = arith.mulf %30, %7 : vector<2x32xf32>
    %40 = arith.mulf %24, %32 : vector<2x32xf32>
    %41 = arith.addf %39, %40 : vector<2x32xf32>
    %42 = math.tanh %41 : vector<2x32xf32>
    %43 = arith.mulf %38, %42 : vector<2x32xf32>
    %44 = arith.truncf %43 : vector<2x32xf32> to vector<2x32xbf16>
    %c0_21 = arith.constant 0 : index
    %c0_22 = arith.constant 0 : index
    %45 = vector.load %arg7[%c0_21, %c0_22] : memref<32x32xbf16, #tpu.memory_space<vmem>>, vector<32x32xbf16>
    %cst_23 = arith.constant dense<0.000000e+00> : vector<2x32xf32>
    %46 = tpu.matmul %44, %45, %cst_23 {dimension_numbers = #tpu.dot_dimension_numbers<[1], [0], [0], [1], [0, 0, 1, 1], [], []>} : vector<2x32xbf16>, vector<32x32xbf16>, vector<2x32xf32> -> vector<2x32xf32>
    %c0_24 = arith.constant 0 : index
    %c0_25 = arith.constant 0 : index
    %47 = vector.load %arg8[%c0_24, %c0_25] : memref<1x32xf32, #tpu.memory_space<vmem>>, vector<1x32xf32>
    %48 = vector.broadcast %47 : vector<1x32xf32> to vector<2x32xf32>
    %49 = arith.addf %46, %48 : vector<2x32xf32>
    %cst_26 = arith.constant 0.000000e+00 : f32
    %50 = vector.broadcast %cst_26 : f32 to vector<2x32xf32>
    %51 = arith.maximumf %49, %50 : vector<2x32xf32>
    %52 = vector.shape_cast %51 : vector<2x32xf32> to vector<2x1x32xf32>
    %c0_27 = arith.constant 0 : index
    %c0_28 = arith.constant 0 : index
    %c0_29 = arith.constant 0 : index
    %53 = vector.load %arg15[%c0_27, %c0_28, %c0_29] : memref<2x8x32xf32, #tpu.memory_space<vmem>>, vector<2x8x32xf32>
    "tpu.trace_start"() <{level = 10 : i32, message = "bqm,btm->bqt"}> : () -> ()
    %cst_30 = arith.constant dense<0.000000e+00> : vector<2x1x8xf32>
    %54 = tpu.matmul %52, %53, %cst_30 {dimension_numbers = #tpu.dot_dimension_numbers<[2], [2], [1], [1], [0, 0, 0, 1, 1, 1], [0], [0]>} : vector<2x1x32xf32>, vector<2x8x32xf32>, vector<2x1x8xf32> -> vector<2x1x8xf32>
    "tpu.trace_stop"() : () -> ()
    %55 = vector.shape_cast %54 : vector<2x1x8xf32> to vector<2x8xf32>
    %cst_31 = arith.constant dense<0xFF800000> : vector<2xf32>
    %56 = vector.multi_reduction <maximumf>, %55, %cst_31 [1] : vector<2x8xf32> to vector<2xf32>
    %57 = vector.shape_cast %56 : vector<2xf32> to vector<2x1xf32>
    %58 = vector.broadcast %57 : vector<2x1xf32> to vector<2x8xf32>
    %59 = arith.subf %55, %58 : vector<2x8xf32>
    %60 = math.exp %59 : vector<2x8xf32>
    %cst_32 = arith.constant dense<0.000000e+00> : vector<2xf32>
    %61 = vector.multi_reduction <add>, %60, %cst_32 [1] : vector<2x8xf32> to vector<2xf32>
    %62 = vector.shape_cast %61 : vector<2xf32> to vector<2x1xf32>
    %63 = tpu.reciprocal %62 {approx = true} : vector<2x1xf32> -> vector<2x1xf32>
    %64 = vector.broadcast %63 : vector<2x1xf32> to vector<2x8xf32>
    %65 = arith.mulf %60, %64 : vector<2x8xf32>
    %66 = vector.shape_cast %65 : vector<2x8xf32> to vector<2x1x8xf32>
    "tpu.trace_start"() <{level = 10 : i32, message = "bqt,btd->bqd"}> : () -> ()
    %cst_33 = arith.constant dense<0.000000e+00> : vector<2x1x32xf32>
    %67 = tpu.matmul %66, %0, %cst_33 {dimension_numbers = #tpu.dot_dimension_numbers<[2], [1], [1], [2], [0, 0, 0, 1, 1, 2], [0], [0]>} : vector<2x1x8xf32>, vector<2x8x32xf32>, vector<2x1x32xf32> -> vector<2x1x32xf32>
    "tpu.trace_stop"() : () -> ()
    %68 = vector.shape_cast %67 : vector<2x1x32xf32> to vector<2x32xf32>
    %69 = arith.truncf %43 : vector<2x32xf32> to vector<2x32xbf16>
    %c0_34 = arith.constant 0 : index
    %c0_35 = arith.constant 0 : index
    %70 = vector.load %arg11[%c0_34, %c0_35] : memref<32x128xbf16, #tpu.memory_space<vmem>>, vector<32x128xbf16>
    %cst_36 = arith.constant dense<0.000000e+00> : vector<2x128xf32>
    %71 = tpu.matmul %69, %70, %cst_36 {dimension_numbers = #tpu.dot_dimension_numbers<[1], [0], [0], [1], [0, 0, 1, 1], [], []>} : vector<2x32xbf16>, vector<32x128xbf16>, vector<2x128xf32> -> vector<2x128xf32>
    %72 = arith.truncf %68 : vector<2x32xf32> to vector<2x32xbf16>
    %c0_37 = arith.constant 0 : index
    %c0_38 = arith.constant 0 : index
    %73 = vector.load %arg12[%c0_37, %c0_38] : memref<32x128xbf16, #tpu.memory_space<vmem>>, vector<32x128xbf16>
    %cst_39 = arith.constant dense<0.000000e+00> : vector<2x128xf32>
    %74 = tpu.matmul %72, %73, %cst_39 {dimension_numbers = #tpu.dot_dimension_numbers<[1], [0], [0], [1], [0, 0, 1, 1], [], []>} : vector<2x32xbf16>, vector<32x128xbf16>, vector<2x128xf32> -> vector<2x128xf32>
    %75 = arith.addf %71, %74 : vector<2x128xf32>
    %c0_40 = arith.constant 0 : index
    %c0_41 = arith.constant 0 : index
    %76 = vector.load %arg13[%c0_40, %c0_41] : memref<1x128xf32, #tpu.memory_space<vmem>>, vector<1x128xf32>
    %77 = vector.broadcast %76 : vector<1x128xf32> to vector<2x128xf32>
    %78 = arith.addf %75, %77 : vector<2x128xf32>
    %cst_42 = arith.constant dense<0xFF800000> : vector<2xf32>
    %79 = vector.multi_reduction <maximumf>, %78, %cst_42 [1] : vector<2x128xf32> to vector<2xf32>
    %80 = vector.shape_cast %79 : vector<2xf32> to vector<2x1xf32>
    %81 = vector.broadcast %80 : vector<2x1xf32> to vector<2x128xf32>
    %82 = arith.subf %78, %81 : vector<2x128xf32>
    %83 = vector.broadcast %80 : vector<2x1xf32> to vector<2x128xf32>
    %84 = arith.subf %78, %83 : vector<2x128xf32>
    %85 = math.exp %84 : vector<2x128xf32>
    %cst_43 = arith.constant dense<0.000000e+00> : vector<2xf32>
    %86 = vector.multi_reduction <add>, %85, %cst_43 [1] : vector<2x128xf32> to vector<2xf32>
    %87 = vector.shape_cast %86 : vector<2xf32> to vector<2x1xf32>
    %88 = math.log %87 : vector<2x1xf32>
    %89 = vector.broadcast %88 : vector<2x1xf32> to vector<2x128xf32>
    %90 = arith.subf %82, %89 : vector<2x128xf32>
    %c0_44 = arith.constant 0 : index
    %c0_45 = arith.constant 0 : index
    %c0_46 = arith.constant 0 : index
    %91 = vector.load %arg14[%c0_44, %c0_45, %c0_46] : memref<1x2x128xf32, #tpu.memory_space<vmem>>, vector<1x2x128xf32>
    %92 = vector.shape_cast %91 : vector<1x2x128xf32> to vector<2x128xf32>
    %93 = vector.shape_cast %90 : vector<2x128xf32> to vector<1x2x128xf32>
    tpu.vector_store %arg14[%c0_44, %c0_45, %c0_46], %93 {strides = array<i32>} : memref<1x2x128xf32, #tpu.memory_space<vmem>>, vector<1x2x128xf32>,
    %94 = tpu.iota {dimensions = array<i32: 1>} : vector<2x128xi32>
    %cst_47 = arith.constant dense<0xFF800000> : vector<2xf32>
    %95 = vector.multi_reduction <maximumf>, %90, %cst_47 [1] : vector<2x128xf32> to vector<2xf32>
    %96 = vector.shape_cast %95 : vector<2xf32> to vector<2x1xf32>
    %97 = vector.broadcast %96 : vector<2x1xf32> to vector<2x128xf32>
    %98 = arith.cmpf oeq, %90, %97 : vector<2x128xf32>
    %c128_i32 = arith.constant 128 : i32
    %99 = vector.broadcast %c128_i32 : i32 to vector<2x128xi32>
    %100 = arith.select %98, %94, %99 : vector<2x128xi1>, vector<2x128xi32>
    %cst_48 = arith.constant dense<2147483647> : vector<2xi32>
    %101 = vector.multi_reduction <minsi>, %100, %cst_48 [1] : vector<2x128xi32> to vector<2xi32>
    %102 = vector.shape_cast %101 : vector<2xi32> to vector<2x1xi32>
    %103 = vector.broadcast %102 : vector<2x1xi32> to vector<2x128xi32>
    %104 = arith.cmpi eq, %94, %103 : vector<2x128xi32>
    %105 = arith.extui %104 : vector<2x128xi1> to vector<2x128xi32>
    %106 = arith.sitofp %105 : vector<2x128xi32> to vector<2x128xf32>
    %107 = arith.truncf %106 : vector<2x128xf32> to vector<2x128xbf16>
    %c0_49 = arith.constant 0 : index
    %c0_50 = arith.constant 0 : index
    %108 = vector.load %arg3[%c0_49, %c0_50] : memref<128x128xbf16, #tpu.memory_space<vmem>>, vector<128x128xbf16>
    %cst_51 = arith.constant dense<0.000000e+00> : vector<2x128xf32>
    %109 = tpu.matmul %107, %108, %cst_51 {dimension_numbers = #tpu.dot_dimension_numbers<[1], [0], [0], [1], [0, 0, 1, 1], [], []>} : vector<2x128xbf16>, vector<128x128xbf16>, vector<2x128xf32> -> vector<2x128xf32>
    %c0_52 = arith.constant 0 : index
    %c0_53 = arith.constant 0 : index
    %110 = vector.load %arg16[%c0_52, %c0_53] : memref<2x128xf32, #tpu.memory_space<vmem>>, vector<2x128xf32>
    tpu.vector_store %arg16[%c0_52, %c0_53], %109 {strides = array<i32>} : memref<2x128xf32, #tpu.memory_space<vmem>>, vector<2x128xf32>,
    %c0_54 = arith.constant 0 : index
    %c0_55 = arith.constant 0 : index
    %111 = vector.load %arg17[%c0_54, %c0_55] : memref<2x32xf32, #tpu.memory_space<vmem>>, vector<2x32xf32>
    tpu.vector_store %arg17[%c0_54, %c0_55], %68 {strides = array<i32>} : memref<2x32xf32, #tpu.memory_space<vmem>>, vector<2x32xf32>,
    %c0_56 = arith.constant 0 : index
    %c0_57 = arith.constant 0 : index
    %112 = vector.load %arg18[%c0_56, %c0_57] : memref<2x32xf32, #tpu.memory_space<vmem>>, vector<2x32xf32>
    tpu.vector_store %arg18[%c0_56, %c0_57], %43 {strides = array<i32>} : memref<2x32xf32, #tpu.memory_space<vmem>>, vector<2x32xf32>,
    %c0_58 = arith.constant 0 : index
    %c0_59 = arith.constant 0 : index
    %113 = vector.load %arg19[%c0_58, %c0_59] : memref<2x32xf32, #tpu.memory_space<vmem>>, vector<2x32xf32>
    tpu.vector_store %arg19[%c0_58, %c0_59], %41 {strides = array<i32>} : memref<2x32xf32, #tpu.memory_space<vmem>>, vector<2x32xf32>,
    return
  }
  func.func @transform_0(%arg0: i32, %arg1: i32) -> (i32, i32, i32) {
    %c0_i32 = arith.constant 0 : i32
    %c0_i32_0 = arith.constant 0 : i32
    %c0_i32_1 = arith.constant 0 : i32
    return %arg0, %c0_i32, %c0_i32_0 : i32, i32, i32
  }
  func.func @transform_1(%arg0: i32, %arg1: i32) -> (i32, i32) {
    %c0_i32 = arith.constant 0 : i32
    %c0_i32_0 = arith.constant 0 : i32
    %c0_i32_1 = arith.constant 0 : i32
    return %c0_i32, %c0_i32_0 : i32, i32
  }
  func.func @transform_2(%arg0: i32, %arg1: i32) -> (i32, i32) {
    %c0_i32 = arith.constant 0 : i32
    %c0_i32_0 = arith.constant 0 : i32
    %c0_i32_1 = arith.constant 0 : i32
    return %c0_i32, %c0_i32_0 : i32, i32
  }
  func.func @transform_3(%arg0: i32, %arg1: i32) -> (i32, i32) {
    %c0_i32 = arith.constant 0 : i32
    %c0_i32_0 = arith.constant 0 : i32
    %c0_i32_1 = arith.constant 0 : i32
    return %c0_i32, %c0_i32_0 : i32, i32
  }
  func.func @transform_4(%arg0: i32, %arg1: i32) -> (i32, i32) {
    %c0_i32 = arith.constant 0 : i32
    %c0_i32_0 = arith.constant 0 : i32
    %c0_i32_1 = arith.constant 0 : i32
    return %c0_i32, %c0_i32_0 : i32, i32
  }
  func.func @transform_5(%arg0: i32, %arg1: i32) -> (i32, i32) {
    %c0_i32 = arith.constant 0 : i32
    %c0_i32_0 = arith.constant 0 : i32
    %c0_i32_1 = arith.constant 0 : i32
    return %c0_i32, %c0_i32_0 : i32, i32
  }
  func.func @transform_6(%arg0: i32, %arg1: i32) -> (i32, i32) {
    %c0_i32 = arith.constant 0 : i32
    %c0_i32_0 = arith.constant 0 : i32
    %c0_i32_1 = arith.constant 0 : i32
    return %c0_i32, %c0_i32_0 : i32, i32
  }
  func.func @transform_7(%arg0: i32, %arg1: i32) -> (i32, i32) {
    %c0_i32 = arith.constant 0 : i32
    %c0_i32_0 = arith.constant 0 : i32
    %c0_i32_1 = arith.constant 0 : i32
    return %c0_i32, %c0_i32_0 : i32, i32
  }
  func.func @transform_8(%arg0: i32, %arg1: i32) -> (i32, i32) {
    %c0_i32 = arith.constant 0 : i32
    %c0_i32_0 = arith.constant 0 : i32
    %c0_i32_1 = arith.constant 0 : i32
    return %c0_i32, %c0_i32_0 : i32, i32
  }
  func.func @transform_9(%arg0: i32, %arg1: i32) -> (i32, i32) {
    %c0_i32 = arith.constant 0 : i32
    %c0_i32_0 = arith.constant 0 : i32
    %c0_i32_1 = arith.constant 0 : i32
    return %c0_i32, %c0_i32_0 : i32, i32
  }
  func.func @transform_10(%arg0: i32, %arg1: i32) -> (i32, i32) {
    %c0_i32 = arith.constant 0 : i32
    %c0_i32_0 = arith.constant 0 : i32
    %c0_i32_1 = arith.constant 0 : i32
    return %c0_i32, %c0_i32_0 : i32, i32
  }
  func.func @transform_11(%arg0: i32, %arg1: i32) -> (i32, i32) {
    %c0_i32 = arith.constant 0 : i32
    %c0_i32_0 = arith.constant 0 : i32
    %c0_i32_1 = arith.constant 0 : i32
    return %c0_i32, %c0_i32_0 : i32, i32
  }
  func.func @transform_12(%arg0: i32, %arg1: i32) -> (i32, i32, i32) {
    %c0_i32 = arith.constant 0 : i32
    %c0_i32_0 = arith.constant 0 : i32
    return %arg1, %arg0, %c0_i32 : i32, i32, i32
  }
}

</mosaic_0001>

<llo_original>
// kernel: tpu_custom_call.1
$region0: #{tpu_custom_call.1}
  #allocation0 [shape = 'u32[]', space=smem, size = 0x4, offset = 0x4, fixed_abs, tag = 'smem constant byte address 0x4 - core index']
  #allocation1 [shape = 'u32[72,128]{1,0:T(1,128)}', space=vmem, size = 0x9000, scoped, tag = 'internal scratch']
  #allocation2 [shape = 'f32[2,8,32]{2,1,0:T(8,128)}', space=vmem, size = 0x2000, scoped, tag = 'scratch operand']
  #allocation3 [shape = 'f32[2,128]{1,0:T(2,128)}', space=vmem, size = 0x400, scoped, tag = 'scratch operand']
  #allocation4 [shape = 'f32[2,32]{1,0:T(2,128)}', space=vmem, size = 0x400, scoped, tag = 'scratch operand']
  #allocation5 [shape = 'f32[2,32]{1,0:T(2,128)}', space=vmem, size = 0x400, scoped, tag = 'scratch operand']
  #allocation6 [shape = 'f32[2,32]{1,0:T(2,128)}', space=vmem, size = 0x400, scoped, tag = 'scratch operand']
  %s0 = inlined_call_operand.hbm [shape: f32[2,8,32], index: 0, kind: input, shape index: {}]
  %s1 = inlined_call_operand.hbm [shape: bf16[128,128], index: 1, kind: input, shape index: {}]
  %s2 = inlined_call_operand.hbm [shape: bf16[32,128], index: 2, kind: input, shape index: {}]
  %s3 = inlined_call_operand.hbm [shape: bf16[32,128], index: 3, kind: input, shape index: {}]
  %s4 = inlined_call_operand.vmem [shape: f32[1,128], index: 4, kind: input, shape index: {}]
  %s5 = inlined_call_operand.hbm [shape: bf16[32,32], index: 5, kind: input, shape index: {}]
  %s6 = inlined_call_operand.vmem [shape: f32[1,32], index: 6, kind: input, shape index: {}]
  %s7 = inlined_call_operand.hbm [shape: bf16[32,32], index: 7, kind: input, shape index: {}]
  %s8 = inlined_call_operand.vmem [shape: f32[1,32], index: 8, kind: input, shape index: {}]
  %s9 = inlined_call_operand.hbm [shape: bf16[32,128], index: 9, kind: input, shape index: {}]
  %s10 = inlined_call_operand.hbm [shape: bf16[32,128], index: 10, kind: input, shape index: {}]
  %s11 = inlined_call_operand.vmem [shape: f32[1,128], index: 11, kind: input, shape index: {}]
  %s12 = inlined_call_operand.hbm [shape: f32[6,2,128], index: 12, kind: output, shape index: {}]
  %s13 = sld [smem:[#allocation0]]
  $region117: #{tpu_custom_call.1} parent=0
    _
  %s15 = ssub.s32 1, %s13
  %s16 = scalar_select 0, %s15, %s13
  $region1: #{tpu_custom_call.1} parent=0
    #allocation7 [shape = 'u8[8192]{0}', space=vmem, size = 0x2000, scoped, tag = 'input window, operand 0, single buffered']
    #allocation8 [shape = 's32[2]{0}', space=sflag, size = 0x8, scoped, tag = 'scoped memory for tpu_custom_call.1']
    #allocation9 [shape = 's32[2]{0}', space=sflag, size = 0x8, scoped, tag = 'scoped memory for tpu_custom_call.1']
    #allocation10 [shape = 'u8[32768]{0}', space=vmem, size = 0x8000, scoped, tag = 'input window, operand 1, single buffered']
    #allocation11 [shape = 's32[1]{0}', space=sflag, size = 0x4, scoped, tag = 'scoped memory for tpu_custom_call.1']
    #allocation12 [shape = 'u8[8192]{0}', space=vmem, size = 0x2000, scoped, tag = 'input window, operand 2, single buffered']
    #allocation13 [shape = 'u8[8192]{0}', space=vmem, size = 0x2000, scoped, tag = 'input window, operand 3, single buffered']
    #allocation14 [shape = 's32[1]{0}', space=sflag, size = 0x4, scoped, tag = 'scoped memory for tpu_custom_call.1']
    #allocation15 [shape = 'u8[8192]{0}', space=vmem, size = 0x2000, scoped, tag = 'input window, operand 5, single buffered']
    #allocation16 [shape = 'u8[8192]{0}', space=vmem, size = 0x2000, scoped, tag = 'input window, operand 7, single buffered']
    #allocation17 [shape = 's32[1]{0}', space=sflag, size = 0x4, scoped, tag = 'scoped memory for tpu_custom_call.1']
    #allocation18 [shape = 'u8[8192]{0}', space=vmem, size = 0x2000, scoped, tag = 'input window, operand 9, single buffered']
    #allocation19 [shape = 'u8[8192]{0}', space=vmem, size = 0x2000, scoped, tag = 'input window, operand 10, single buffered']
    #allocation20 [shape = 's32[1]{0}', space=sflag, size = 0x4, scoped, tag = 'scoped memory for tpu_custom_call.1']
    #allocation21 [shape = 'u8[2048]{0}', space=vmem, size = 0x800, scoped, tag = 'output window, operand 0']
    %17 = vsyncpa [#allocation8], 0
    %18 = vsyncpa [#allocation11], 0
    %19 = vsyncpa [#allocation14], 0
    %20 = vsyncpa [#allocation17], 0
    %21 = vsyncpa [#allocation20], 0
    %22 = vsyncpa [#allocation9], 0
    %s23 = scalar_lea.sflag [#allocation9], 1
    %24 = vsyncpa %s23, 0
    loop: start=0, step=1, limit=8
    $region2: #{tpu_custom_call.1} parent=1 // loop_pre_header
      _
    $region3: #{tpu_custom_call.1} parent=1 // loop_header
      %s26 = sphi 0, %s30
      %p27 = scmp.ge.s32.totalorder %s26, 8
      %s33 = sphi 0, %s45
      %s34 = sphi 0, %s41
      %s35 = sphi 0, %s33
      %s36 = sphi 0, %s34
      %s37 = sphi 0, %s35
      %s38 = sphi 0, %s36
      %s48 = sphi 0, %s50
      %s51 = sphi 0, %s48
      %s52 = sphi 0, %s51
      %s68 = sphi 0, %s52
      %s72 = sphi 0, %s72
      %s74 = sphi 0, %s72
      %s75 = sphi 0, %s74
      %s89 = sphi 0, %s75
      %s93 = sphi 0, %s93
      %s95 = sphi 0, %s93
      %s96 = sphi 0, %s95
      %s110 = sphi 0, %s96
      %s114 = sphi 0, %s114
      %s116 = sphi 0, %s114
      %s117 = sphi 0, %s116
      %s131 = sphi 0, %s117
      %s135 = sphi 0, %s135
      %s137 = sphi 0, %s135
      %s138 = sphi 0, %s137
      %s152 = sphi 0, %s138
      %s156 = sphi 0, %s156
      %s158 = sphi 0, %s156
      %s159 = sphi 0, %s158
      %s173 = sphi 0, %s159
      %s177 = sphi 0, %s177
      %s179 = sphi 0, %s177
      %s180 = sphi 0, %s179
      %s194 = sphi 0, %s180
      %s198 = sphi 0, %s198
      %s200 = sphi 0, %s198
      %s201 = sphi 0, %s200
      %s215 = sphi 0, %s201
      %s219 = sphi 0, %s219
      %s221 = sphi 0, %s219
      %s222 = sphi 0, %s221
      %s236 = sphi 0, %s222
      %s240 = sphi 0, %s240
      %s242 = sphi 0, %s240
      %s243 = sphi 0, %s242
      %s257 = sphi 0, %s243
      %s261 = sphi 0, %s261
      %s263 = sphi 0, %s261
      %s264 = sphi 0, %s263
      %s278 = sphi 0, %s264
      %s282 = sphi 0, %s282
      %s284 = sphi 0, %s282
      %s285 = sphi 0, %s284
      %s299 = sphi 0, %s285
      %s307 = sphi 0, %s309
      %s310 = sphi 0, %s307
      %s311 = sphi 0, %s310
      %s327 = sphi 0, %s311
    $region4: #{tpu_custom_call.1} parent=1 // loop_header_branch
      %29 = sbr.rel (%p27) target = $region8
    $region5: #{tpu_custom_call.1} parent=1 // loop_body
      %s31 = ssub.s32 %s26, 1
      %s32 = ssub.s32 %s26, 2
      %s39 = sadd.s32 1, %s34
      %p40 = scmp.ge.s32.totalorder %s39, 6
      %s41 = scalar_select %p40, 0, %s39
      %s42 = sadd.s32 1, %s33
      %s43 = scalar_select %p40, %s42, %s33
      %p44 = scmp.ge.s32.totalorder %s43, 1
      %s45 = scalar_select %p44, 0, %s43
      %s46 = ssub.s32 %s33, %s45
      %p47 = scmp.eq.s32.totalorder %s46, 0
      %s49 = sadd.s32 %s48, 1
      %s50 = scalar_select %p47, %s48, %s49
      %p53 = pneg %p47
      %p54 = scmp.eq.s32.totalorder %s26, 5
      %p55 = por %p53, %p54
      %p56 = scmp.ne.s32.totalorder %s48, %s51
      %p57 = scmp.eq.s32.totalorder %s26, 0
      %p58 = por %p56, %p57
      %p59 = scmp.ne.s32.totalorder %s48, %s51
      %p60 = scmp.eq.s32.totalorder %s31, 5
      %p61 = por %p59, %p60
      %p62 = scmp.ne.s32.totalorder %s51, %s52
      %p63 = scmp.eq.s32.totalorder %s31, 0
      %p64 = por %p62, %p63
      %p65 = scmp.ne.s32.totalorder %s51, %s52
      %p66 = scmp.eq.s32.totalorder %s32, 5
      %p67 = por %p65, %p66
      %p69 = scmp.ne.s32.totalorder %s52, %s68
      %p70 = scmp.eq.s32.totalorder %s32, 0
      %p71 = por %p69, %p70
      %s73 = sadd.s32 %s72, 1
      %p76 = scmp.eq.s32.totalorder %s26, 5
      %p77 = scmp.ne.s32.totalorder %s72, %s74
      %p78 = scmp.eq.s32.totalorder %s26, 0
      %p79 = por %p77, %p78
      %p80 = scmp.ne.s32.totalorder %s72, %s74
      %p81 = scmp.eq.s32.totalorder %s31, 5
      %p82 = por %p80, %p81
      %p83 = scmp.ne.s32.totalorder %s74, %s75
      %p84 = scmp.eq.s32.totalorder %s31, 0
      %p85 = por %p83, %p84
      %p86 = scmp.ne.s32.totalorder %s74, %s75
      %p87 = scmp.eq.s32.totalorder %s32, 5
      %p88 = por %p86, %p87
      %p90 = scmp.ne.s32.totalorder %s75, %s89
      %p91 = scmp.eq.s32.totalorder %s32, 0
      %p92 = por %p90, %p91
      %s94 = sadd.s32 %s93, 1
      %p97 = scmp.eq.s32.totalorder %s26, 5
      %p98 = scmp.ne.s32.totalorder %s93, %s95
      %p99 = scmp.eq.s32.totalorder %s26, 0
      %p100 = por %p98, %p99
      %p101 = scmp.ne.s32.totalorder %s93, %s95
      %p102 = scmp.eq.s32.totalorder %s31, 5
      %p103 = por %p101, %p102
      %p104 = scmp.ne.s32.totalorder %s95, %s96
      %p105 = scmp.eq.s32.totalorder %s31, 0
      %p106 = por %p104, %p105
      %p107 = scmp.ne.s32.totalorder %s95, %s96
      %p108 = scmp.eq.s32.totalorder %s32, 5
      %p109 = por %p107, %p108
      %p111 = scmp.ne.s32.totalorder %s96, %s110
      %p112 = scmp.eq.s32.totalorder %s32, 0
      %p113 = por %p111, %p112
      %s115 = sadd.s32 %s114, 1
      %p118 = scmp.eq.s32.totalorder %s26, 5
      %p119 = scmp.ne.s32.totalorder %s114, %s116
      %p120 = scmp.eq.s32.totalorder %s26, 0
      %p121 = por %p119, %p120
      %p122 = scmp.ne.s32.totalorder %s114, %s116
      %p123 = scmp.eq.s32.totalorder %s31, 5
      %p124 = por %p122, %p123
      %p125 = scmp.ne.s32.totalorder %s116, %s117
      %p126 = scmp.eq.s32.totalorder %s31, 0
      %p127 = por %p125, %p126
      %p128 = scmp.ne.s32.totalorder %s116, %s117
      %p129 = scmp.eq.s32.totalorder %s32, 5
      %p130 = por %p128, %p129
      %p132 = scmp.ne.s32.totalorder %s117, %s131
      %p133 = scmp.eq.s32.totalorder %s32, 0
      %p134 = por %p132, %p133
      %s136 = sadd.s32 %s135, 1
      %p139 = scmp.eq.s32.totalorder %s26, 5
      %p140 = scmp.ne.s32.totalorder %s135, %s137
      %p141 = scmp.eq.s32.totalorder %s26, 0
      %p142 = por %p140, %p141
      %p143 = scmp.ne.s32.totalorder %s135, %s137
      %p144 = scmp.eq.s32.totalorder %s31, 5
      %p145 = por %p143, %p144
      %p146 = scmp.ne.s32.totalorder %s137, %s138
      %p147 = scmp.eq.s32.totalorder %s31, 0
      %p148 = por %p146, %p147
      %p149 = scmp.ne.s32.totalorder %s137, %s138
      %p150 = scmp.eq.s32.totalorder %s32, 5
      %p151 = por %p149, %p150
      %p153 = scmp.ne.s32.totalorder %s138, %s152
      %p154 = scmp.eq.s32.totalorder %s32, 0
      %p155 = por %p153, %p154
      %s157 = sadd.s32 %s156, 1
      %p160 = scmp.eq.s32.totalorder %s26, 5
      %p161 = scmp.ne.s32.totalorder %s156, %s158
      %p162 = scmp.eq.s32.totalorder %s26, 0
      %p163 = por %p161, %p162
      %p164 = scmp.ne.s32.totalorder %s156, %s158
      %p165 = scmp.eq.s32.totalorder %s31, 5
      %p166 = por %p164, %p165
      %p167 = scmp.ne.s32.totalorder %s158, %s159
      %p168 = scmp.eq.s32.totalorder %s31, 0
      %p169 = por %p167, %p168
      %p170 = scmp.ne.s32.totalorder %s158, %s159
      %p171 = scmp.eq.s32.totalorder %s32, 5
      %p172 = por %p170, %p171
      %p174 = scmp.ne.s32.totalorder %s159, %s173
      %p175 = scmp.eq.s32.totalorder %s32, 0
      %p176 = por %p174, %p175
      %s178 = sadd.s32 %s177, 1
      %p181 = scmp.eq.s32.totalorder %s26, 5
      %p182 = scmp.ne.s32.totalorder %s177, %s179
      %p183 = scmp.eq.s32.totalorder %s26, 0
      %p184 = por %p182, %p183
      %p185 = scmp.ne.s32.totalorder %s177, %s179
      %p186 = scmp.eq.s32.totalorder %s31, 5
      %p187 = por %p185, %p186
      %p188 = scmp.ne.s32.totalorder %s179, %s180
      %p189 = scmp.eq.s32.totalorder %s31, 0
      %p190 = por %p188, %p189
      %p191 = scmp.ne.s32.totalorder %s179, %s180
      %p192 = scmp.eq.s32.totalorder %s32, 5
      %p193 = por %p191, %p192
      %p195 = scmp.ne.s32.totalorder %s180, %s194
      %p196 = scmp.eq.s32.totalorder %s32, 0
      %p197 = por %p195, %p196
      %s199 = sadd.s32 %s198, 1
      %p202 = scmp.eq.s32.totalorder %s26, 5
      %p203 = scmp.ne.s32.totalorder %s198, %s200
      %p204 = scmp.eq.s32.totalorder %s26, 0
      %p205 = por %p203, %p204
      %p206 = scmp.ne.s32.totalorder %s198, %s200
      %p207 = scmp.eq.s32.totalorder %s31, 5
      %p208 = por %p206, %p207
      %p209 = scmp.ne.s32.totalorder %s200, %s201
      %p210 = scmp.eq.s32.totalorder %s31, 0
      %p211 = por %p209, %p210
      %p212 = scmp.ne.s32.totalorder %s200, %s201
      %p213 = scmp.eq.s32.totalorder %s32, 5
      %p214 = por %p212, %p213
      %p216 = scmp.ne.s32.totalorder %s201, %s215
      %p217 = scmp.eq.s32.totalorder %s32, 0
      %p218 = por %p216, %p217
      %s220 = sadd.s32 %s219, 1
      %p223 = scmp.eq.s32.totalorder %s26, 5
      %p224 = scmp.ne.s32.totalorder %s219, %s221
      %p225 = scmp.eq.s32.totalorder %s26, 0
      %p226 = por %p224, %p225
      %p227 = scmp.ne.s32.totalorder %s219, %s221
      %p228 = scmp.eq.s32.totalorder %s31, 5
      %p229 = por %p227, %p228
      %p230 = scmp.ne.s32.totalorder %s221, %s222
      %p231 = scmp.eq.s32.totalorder %s31, 0
      %p232 = por %p230, %p231
      %p233 = scmp.ne.s32.totalorder %s221, %s222
      %p234 = scmp.eq.s32.totalorder %s32, 5
      %p235 = por %p233, %p234
      %p237 = scmp.ne.s32.totalorder %s222, %s236
      %p238 = scmp.eq.s32.totalorder %s32, 0
      %p239 = por %p237, %p238
      %s241 = sadd.s32 %s240, 1
      %p244 = scmp.eq.s32.totalorder %s26, 5
      %p245 = scmp.ne.s32.totalorder %s240, %s242
      %p246 = scmp.eq.s32.totalorder %s26, 0
      %p247 = por %p245, %p246
      %p248 = scmp.ne.s32.totalorder %s240, %s242
      %p249 = scmp.eq.s32.totalorder %s31, 5
      %p250 = por %p248, %p249
      %p251 = scmp.ne.s32.totalorder %s242, %s243
      %p252 = scmp.eq.s32.totalorder %s31, 0
      %p253 = por %p251, %p252
      %p254 = scmp.ne.s32.totalorder %s242, %s243
      %p255 = scmp.eq.s32.totalorder %s32, 5
      %p256 = por %p254, %p255
      %p258 = scmp.ne.s32.totalorder %s243, %s257
      %p259 = scmp.eq.s32.totalorder %s32, 0
      %p260 = por %p258, %p259
      %s262 = sadd.s32 %s261, 1
      %p265 = scmp.eq.s32.totalorder %s26, 5
      %p266 = scmp.ne.s32.totalorder %s261, %s263
      %p267 = scmp.eq.s32.totalorder %s26, 0
      %p268 = por %p266, %p267
      %p269 = scmp.ne.s32.totalorder %s261, %s263
      %p270 = scmp.eq.s32.totalorder %s31, 5
      %p271 = por %p269, %p270
      %p272 = scmp.ne.s32.totalorder %s263, %s264
      %p273 = scmp.eq.s32.totalorder %s31, 0
      %p274 = por %p272, %p273
      %p275 = scmp.ne.s32.totalorder %s263, %s264
      %p276 = scmp.eq.s32.totalorder %s32, 5
      %p277 = por %p275, %p276
      %p279 = scmp.ne.s32.totalorder %s264, %s278
      %p280 = scmp.eq.s32.totalorder %s32, 0
      %p281 = por %p279, %p280
      %s283 = sadd.s32 %s282, 1
      %p286 = scmp.eq.s32.totalorder %s26, 5
      %p287 = scmp.ne.s32.totalorder %s282, %s284
      %p288 = scmp.eq.s32.totalorder %s26, 0
      %p289 = por %p287, %p288
      %p290 = scmp.ne.s32.totalorder %s282, %s284
      %p291 = scmp.eq.s32.totalorder %s31, 5
      %p292 = por %p290, %p291
      %p293 = scmp.ne.s32.totalorder %s284, %s285
      %p294 = scmp.eq.s32.totalorder %s31, 0
      %p295 = por %p293, %p294
      %p296 = scmp.ne.s32.totalorder %s284, %s285
      %p297 = scmp.eq.s32.totalorder %s32, 5
      %p298 = por %p296, %p297
      %p300 = scmp.ne.s32.totalorder %s285, %s299
      %p301 = scmp.eq.s32.totalorder %s32, 0
      %p302 = por %p300, %p301
      %s303 = ssub.s32 %s34, %s41
      %s304 = ssub.s32 %s33, %s45
      %s305 = sor.u32 %s303, %s304
      %p306 = scmp.eq.s32.totalorder %s305, 0
      %s308 = sadd.s32 %s307, 1
      %s309 = scalar_select %p306, %s307, %s308
      %p312 = pneg %p306
      %p313 = scmp.eq.s32.totalorder %s26, 5
      %p314 = por %p312, %p313
      %p315 = scmp.ne.s32.totalorder %s307, %s310
      %p316 = scmp.eq.s32.totalorder %s26, 0
      %p317 = por %p315, %p316
      %p318 = scmp.ne.s32.totalorder %s307, %s310
      %p319 = scmp.eq.s32.totalorder %s31, 5
      %p320 = por %p318, %p319
      %p321 = scmp.ne.s32.totalorder %s310, %s311
      %p322 = scmp.eq.s32.totalorder %s31, 0
      %p323 = por %p321, %p322
      %p324 = scmp.ne.s32.totalorder %s310, %s311
      %p325 = scmp.eq.s32.totalorder %s32, 5
      %p326 = por %p324, %p325
      %p328 = scmp.ne.s32.totalorder %s311, %s327
      %p329 = scmp.eq.s32.totalorder %s32, 0
      %p330 = por %p328, %p329
      %p331 = scmp.le.s32.totalorder 1, %s26
      %p332 = scmp.lt.s32.totalorder %s26, 7
      %p333 = pnand %p331, %p332
      %p334 = pneg %p333
      // Predicated region
      $region9: #{tpu_custom_call.1} parent=5 // pred_check
        _
      $region10: #{tpu_custom_call.1} parent=5 // pred_check_branch
        %336 = sbr.rel (%p333) target = $region12
      $region11: #{tpu_custom_call.1} parent=5 // pred_region
        %s337 = ssub.s32 %s26, 1
        // Predicated region
        $region13: #{tpu_custom_call.1} parent=11 // pred_check
          %p338 = pneg %p64
        $region14: #{tpu_custom_call.1} parent=11 // pred_check_branch
          %340 = sbr.rel (%p338) target = $region16
        $region15: #{tpu_custom_call.1} parent=11 // pred_region
          %s341 = smul.u32 2, %s35
          %343 = vsyncadd [#allocation8], 0
          %s344 = smul.addr %s341, 8
          %s345 = scalar_lea.hbm %s0, %s344
          %s346 = sshll.u32 %s345, 4
          %s347 = int_to_ptr.hbm [resolvable:$true] %s346
          %s348 = sshll.u32 [#allocation7], 4
          %s349 = int_to_ptr.vmem [resolvable:$true] %s348
          %354 = dma.hbm_to_vmem [thread:$0]  %s347, 256, %s349, [#allocation8], 128, 128, 8
        $region16: #{tpu_custom_call.1} parent=11 // pred_fallthru
          _
        // Predicated region
        $region17: #{tpu_custom_call.1} parent=11 // pred_check
          %p355 = pneg %p85
        $region18: #{tpu_custom_call.1} parent=11 // pred_check_branch
          %357 = sbr.rel (%p355) target = $region20
        $region19: #{tpu_custom_call.1} parent=11 // pred_region
          %359 = vsyncadd [#allocation11], 0
          %s360 = sshll.u32 %s1, 4
          %s361 = int_to_ptr.hbm [resolvable:$true] %s360
          %s362 = sshll.u32 [#allocation10], 4
          %s363 = int_to_ptr.vmem [resolvable:$true] %s362
          %368 = dma.hbm_to_vmem [thread:$0]  %s361, 1024, %s363, [#allocation11], 64, 64, 4
        $region20: #{tpu_custom_call.1} parent=11 // pred_fallthru
          _
        // Predicated region
        $region21: #{tpu_custom_call.1} parent=11 // pred_check
          %p369 = pneg %p106
        $region22: #{tpu_custom_call.1} parent=11 // pred_check_branch
          %371 = sbr.rel (%p369) target = $region24
        $region23: #{tpu_custom_call.1} parent=11 // pred_region
          %373 = vsyncadd [#allocation11], 0
          %s374 = sshll.u32 %s2, 4
          %s375 = int_to_ptr.hbm [resolvable:$true] %s374
          %s376 = sshll.u32 [#allocation12], 4
          %s377 = int_to_ptr.vmem [resolvable:$true] %s376
          %382 = dma.hbm_to_vmem [thread:$0]  %s375, 256, %s377, [#allocation11], 64, 64, 4
        $region24: #{tpu_custom_call.1} parent=11 // pred_fallthru
          _
        // Predicated region
        $region25: #{tpu_custom_call.1} parent=11 // pred_check
          %p383 = pneg %p127
        $region26: #{tpu_custom_call.1} parent=11 // pred_check_branch
          %385 = sbr.rel (%p383) target = $region28
        $region27: #{tpu_custom_call.1} parent=11 // pred_region
          %387 = vsyncadd [#allocation14], 0
          %s388 = sshll.u32 %s3, 4
          %s389 = int_to_ptr.hbm [resolvable:$true] %s388
          %s390 = sshll.u32 [#allocation13], 4
          %s391 = int_to_ptr.vmem [resolvable:$true] %s390
          %396 = dma.hbm_to_vmem [thread:$0]  %s389, 256, %s391, [#allocation14], 64, 64, 4
        $region28: #{tpu_custom_call.1} parent=11 // pred_fallthru
          _
        // Predicated region
        $region29: #{tpu_custom_call.1} parent=11 // pred_check
          %p397 = pneg %p148
        $region30: #{tpu_custom_call.1} parent=11 // pred_check_branch
          %399 = sbr.rel (%p397) target = $region32
        $region31: #{tpu_custom_call.1} parent=11 // pred_region
          _
        $region32: #{tpu_custom_call.1} parent=11 // pred_fallthru
          _
        // Predicated region
        $region33: #{tpu_custom_call.1} parent=11 // pred_check
          %p400 = pneg %p169
        $region34: #{tpu_custom_call.1} parent=11 // pred_check_branch
          %402 = sbr.rel (%p400) target = $region36
        $region35: #{tpu_custom_call.1} parent=11 // pred_region
          %404 = vsyncadd [#allocation14], 0
          %s405 = sshll.u32 %s5, 4
          %s406 = int_to_ptr.hbm [resolvable:$true] %s405
          %s407 = sshll.u32 [#allocation15], 4
          %s408 = int_to_ptr.vmem [resolvable:$true] %s407
          %413 = dma.hbm_to_vmem [thread:$0]  %s406, 256, %s408, [#allocation14], 64, 64, 4
        $region36: #{tpu_custom_call.1} parent=11 // pred_fallthru
          _
        // Predicated region
        $region37: #{tpu_custom_call.1} parent=11 // pred_check
          %p414 = pneg %p190
        $region38: #{tpu_custom_call.1} parent=11 // pred_check_branch
          %416 = sbr.rel (%p414) target = $region40
        $region39: #{tpu_custom_call.1} parent=11 // pred_region
          _
        $region40: #{tpu_custom_call.1} parent=11 // pred_fallthru
          _
        // Predicated region
        $region41: #{tpu_custom_call.1} parent=11 // pred_check
          %p417 = pneg %p211
        $region42: #{tpu_custom_call.1} parent=11 // pred_check_branch
          %419 = sbr.rel (%p417) target = $region44
        $region43: #{tpu_custom_call.1} parent=11 // pred_region
          %421 = vsyncadd [#allocation17], 0
          %s422 = sshll.u32 %s7, 4
          %s423 = int_to_ptr.hbm [resolvable:$true] %s422
          %s424 = sshll.u32 [#allocation16], 4
          %s425 = int_to_ptr.vmem [resolvable:$true] %s424
          %430 = dma.hbm_to_vmem [thread:$0]  %s423, 256, %s425, [#allocation17], 64, 64, 4
        $region44: #{tpu_custom_call.1} parent=11 // pred_fallthru
          _
        // Predicated region
        $region45: #{tpu_custom_call.1} parent=11 // pred_check
          %p431 = pneg %p232
        $region46: #{tpu_custom_call.1} parent=11 // pred_check_branch
          %433 = sbr.rel (%p431) target = $region48
        $region47: #{tpu_custom_call.1} parent=11 // pred_region
          _
        $region48: #{tpu_custom_call.1} parent=11 // pred_fallthru
          _
        // Predicated region
        $region49: #{tpu_custom_call.1} parent=11 // pred_check
          %p434 = pneg %p253
        $region50: #{tpu_custom_call.1} parent=11 // pred_check_branch
          %436 = sbr.rel (%p434) target = $region52
        $region51: #{tpu_custom_call.1} parent=11 // pred_region
          %438 = vsyncadd [#allocation17], 0
          %s439 = sshll.u32 %s9, 4
          %s440 = int_to_ptr.hbm [resolvable:$true] %s439
          %s441 = sshll.u32 [#allocation18], 4
          %s442 = int_to_ptr.vmem [resolvable:$true] %s441
          %447 = dma.hbm_to_vmem [thread:$0]  %s440, 256, %s442, [#allocation17], 64, 64, 4
        $region52: #{tpu_custom_call.1} parent=11 // pred_fallthru
          _
        // Predicated region
        $region53: #{tpu_custom_call.1} parent=11 // pred_check
          %p448 = pneg %p274
        $region54: #{tpu_custom_call.1} parent=11 // pred_check_branch
          %450 = sbr.rel (%p448) target = $region56
        $region55: #{tpu_custom_call.1} parent=11 // pred_region
          %452 = vsyncadd [#allocation20], 0
          %s453 = sshll.u32 %s10, 4
          %s454 = int_to_ptr.hbm [resolvable:$true] %s453
          %s455 = sshll.u32 [#allocation19], 4
          %s456 = int_to_ptr.vmem [resolvable:$true] %s455
          %461 = dma.hbm_to_vmem [thread:$0]  %s454, 256, %s456, [#allocation20], 64, 64, 4
        $region56: #{tpu_custom_call.1} parent=11 // pred_fallthru
          _
        // Predicated region
        $region57: #{tpu_custom_call.1} parent=11 // pred_check
          %p462 = pneg %p295
        $region58: #{tpu_custom_call.1} parent=11 // pred_check_branch
          %464 = sbr.rel (%p462) target = $region60
        $region59: #{tpu_custom_call.1} parent=11 // pred_region
          _
        $region60: #{tpu_custom_call.1} parent=11 // pred_fallthru
          _
      $region12: #{tpu_custom_call.1} parent=5 // pred_fallthru
        _
      %p465 = scmp.lt.s32.totalorder %s26, 6
      // Predicated region
      $region61: #{tpu_custom_call.1} parent=5 // pred_check
        %p466 = pneg %p465
      $region62: #{tpu_custom_call.1} parent=5 // pred_check_branch
        %468 = sbr.rel (%p466) target = $region64
      $region63: #{tpu_custom_call.1} parent=5 // pred_region
        _
      $region64: #{tpu_custom_call.1} parent=5 // pred_fallthru
        _
      %p469 = scmp.le.s32.totalorder 1, %s26
      %p470 = scmp.lt.s32.totalorder %s26, 7
      %p471 = pnand %p469, %p470
      %p472 = pneg %p471
      // Predicated region
      $region65: #{tpu_custom_call.1} parent=5 // pred_check
        _
      $region66: #{tpu_custom_call.1} parent=5 // pred_check_branch
        %474 = sbr.rel (%p471) target = $region68
      $region67: #{tpu_custom_call.1} parent=5 // pred_region
        %s475 = ssub.s32 %s26, 1
        // Predicated region
        $region69: #{tpu_custom_call.1} parent=67 // pred_check
          %p476 = pneg %p64
        $region70: #{tpu_custom_call.1} parent=67 // pred_check_branch
          %478 = sbr.rel (%p476) target = $region72
        $region71: #{tpu_custom_call.1} parent=67 // pred_region
          %480 = dma.done [#allocation8], 256
        $region72: #{tpu_custom_call.1} parent=67 // pred_fallthru
          _
        // Predicated region
        $region73: #{tpu_custom_call.1} parent=67 // pred_check
          %p481 = pneg %p85
        $region74: #{tpu_custom_call.1} parent=67 // pred_check_branch
          %483 = sbr.rel (%p481) target = $region76
        $region75: #{tpu_custom_call.1} parent=67 // pred_region
          %485 = dma.done [#allocation11], 1024
        $region76: #{tpu_custom_call.1} parent=67 // pred_fallthru
          _
        // Predicated region
        $region77: #{tpu_custom_call.1} parent=67 // pred_check
          %p486 = pneg %p106
        $region78: #{tpu_custom_call.1} parent=67 // pred_check_branch
          %488 = sbr.rel (%p486) target = $region80
        $region79: #{tpu_custom_call.1} parent=67 // pred_region
          %490 = dma.done [#allocation11], 256
        $region80: #{tpu_custom_call.1} parent=67 // pred_fallthru
          _
        // Predicated region
        $region81: #{tpu_custom_call.1} parent=67 // pred_check
          %p491 = pneg %p127
        $region82: #{tpu_custom_call.1} parent=67 // pred_check_branch
          %493 = sbr.rel (%p491) target = $region84
        $region83: #{tpu_custom_call.1} parent=67 // pred_region
          %495 = dma.done [#allocation14], 256
        $region84: #{tpu_custom_call.1} parent=67 // pred_fallthru
          _
        // Predicated region
        $region85: #{tpu_custom_call.1} parent=67 // pred_check
          %p496 = pneg %p169
        $region86: #{tpu_custom_call.1} parent=67 // pred_check_branch
          %498 = sbr.rel (%p496) target = $region88
        $region87: #{tpu_custom_call.1} parent=67 // pred_region
          %500 = dma.done [#allocation14], 256
        $region88: #{tpu_custom_call.1} parent=67 // pred_fallthru
          _
        // Predicated region
        $region89: #{tpu_custom_call.1} parent=67 // pred_check
          %p501 = pneg %p211
        $region90: #{tpu_custom_call.1} parent=67 // pred_check_branch
          %503 = sbr.rel (%p501) target = $region92
        $region91: #{tpu_custom_call.1} parent=67 // pred_region
          %505 = dma.done [#allocation17], 256
        $region92: #{tpu_custom_call.1} parent=67 // pred_fallthru
          _
        // Predicated region
        $region93: #{tpu_custom_call.1} parent=67 // pred_check
          %p506 = pneg %p253
        $region94: #{tpu_custom_call.1} parent=67 // pred_check_branch
          %508 = sbr.rel (%p506) target = $region96
        $region95: #{tpu_custom_call.1} parent=67 // pred_region
          %510 = dma.done [#allocation17], 256
        $region96: #{tpu_custom_call.1} parent=67 // pred_fallthru
          _
        // Predicated region
        $region97: #{tpu_custom_call.1} parent=67 // pred_check
          %p511 = pneg %p274
        $region98: #{tpu_custom_call.1} parent=67 // pred_check_branch
          %513 = sbr.rel (%p511) target = $region100
        $region99: #{tpu_custom_call.1} parent=67 // pred_region
          %515 = dma.done [#allocation20], 256
        $region100: #{tpu_custom_call.1} parent=67 // pred_fallthru
          _
        %p516 = pneg %p64
        %p517 = pneg %p61
        %p518 = pneg %p85
        %p519 = pneg %p82
        %p520 = pneg %p106
        %p521 = pneg %p103
        %p522 = pneg %p127
        %p523 = pneg %p124
        %p524 = pneg %p148
        %p525 = pneg %p145
        %p526 = pneg %p169
        %p527 = pneg %p166
        %p528 = pneg %p190
        %p529 = pneg %p187
        %p530 = pneg %p211
        %p531 = pneg %p208
        %p532 = pneg %p232
        %p533 = pneg %p229
        %p534 = pneg %p253
        %p535 = pneg %p250
        %p536 = pneg %p274
        %p537 = pneg %p271
        %p538 = pneg %p295
        %p539 = pneg %p292
        %p540 = pneg %p323
        %p541 = pneg %p320
        %s542 = sand.u32 %s310, 1
        %s543 = scalar_lea.sflag [#allocation9], %s542
        %s544 = sand.u32 %s310, 1
        %s545 = smul.addr %s544, 2
        %s546 = scalar_lea.vmem [#allocation21], %s545
        %s547 = smul.u32 2, %s35
        %v549 = vld [vmem:[#allocation7] sm:$0xff]
        %v550 = vld [vmem:[#allocation7 + $0x8] sm:$0xff]
        %p551 = scmp.eq.s32.totalorder %s36, 0
        // Predicated region
        $region101: #{tpu_custom_call.1} parent=67 // pred_check
          %p552 = pneg %p551
        $region102: #{tpu_custom_call.1} parent=67 // pred_check_branch
          %554 = sbr.rel (%p552) target = $region104
        $region103: #{tpu_custom_call.1} parent=67 // pred_region
          %v555 = vpack.c.bf16 %v550, %v549
          %v556 = vld [vmem:[#allocation16] sm:$0xf]
          %v557 = vld [vmem:[#allocation16 + $0x4] sm:$0xf]
          %v558 = vld [vmem:[#allocation16 + $0x8] sm:$0xf]
          %v559 = vld [vmem:[#allocation16 + $0xc] sm:$0xf]
          %v560 = vld [vmem:[%s8] sm:$0x1]
          %v562 = vperm.slane %v560, 0
          %v568 = vunpack.c.l.b16 %v556
          %v569 = vunpack.c.l.b16 %v557
          %v570 = vunpack.c.l.b16 %v558
          %v571 = vunpack.c.l.b16 %v559
          %v572 = vpack.c.b16 %v569, %v568
          %v573 = vpack.c.b16 %v571, %v570
          %vm576 = vcmask 261120
          %v578 = vsel %vm576, %v555, 0
          %580 = vmatpush.bf16.msra.mxu0 0
          %581 = vmatpush.bf16.msra.mxu0 0
          %582 = vmatpush.bf16.msra.mxu0 0
          %583 = vmatpush.bf16.msra.mxu0 0
          %584 = vmatpush.bf16.msra.mxu0 0
          %585 = vmatpush.bf16.msra.mxu0 0
          %586 = vmatpush.bf16.msra.mxu0 %v573
          %587 = vmatpush.bf16.msra.mxu0 %v572
          %588 = vmatmul.bf16.gmra.mxu0 %v578
          %v589 = vpop.f32.mrf.mxu0
          %v590 = vadd.f32 %v562, %v589
          %v591 = vpop.f32.mrf.mxu0
          %v592 = vadd.f32 %v562, %v591
          %593 = vdwg.mxu0
          %v594 = vmax.f32 %v590, 0.0
          %v595 = vmax.f32 %v592, 0.0
          %596 = vst.msk [vmem:[#allocation2] sm:$0xff] %vm576, %v594
          %597 = vst.msk [vmem:[#allocation2 + $0x8] sm:$0xff] %vm576, %v595
          %v598 = vld [vmem:[#allocation10] sm:$0x1]
          %v599 = vunpack.c.l.bf16 %v598
          %v600 = vperm.slane %v599, 0
          %v601 = vadd.f32 %v600, 0.0
          %602 = vst [vmem:[#allocation3] sm:$0x3] %v601
          %v605 = vrot.slane %v550, 7
          %vm606 = vcmask 1041409
          %v607 = vsel %vm606, %v605, %v549
          %vm609 = vcmask 254976
          %610 = vst.msk [vmem:[#allocation4] sm:$0x3] %vm609, %v607
          %611 = vst.msk [vmem:[#allocation5] sm:$0x3] %vm609, 0.0
          %612 = vst.msk [vmem:[#allocation6] sm:$0x3] %vm609, 0.0
        $region104: #{tpu_custom_call.1} parent=67 // pred_fallthru
          _
        %v613 = vld [vmem:[#allocation3] sm:$0x3]
        %v614 = vld [vmem:[#allocation4] sm:$0x3]
        %v615 = vld [vmem:[#allocation5] sm:$0x3]
        %v616 = vld [vmem:[#allocation6] sm:$0x3]
        %v617 = vpack.c.bf16 %v614, %v614
        %v618 = vld [vmem:[#allocation12] sm:$0xf]
        %v619 = vld [vmem:[#allocation12 + $0x4] sm:$0xf]
        %v620 = vld [vmem:[#allocation12 + $0x8] sm:$0xf]
        %v621 = vld [vmem:[#allocation12 + $0xc] sm:$0xf]
        %v626 = vunpack.c.l.b16 %v618
        %v627 = vunpack.c.l.b16 %v619
        %v628 = vunpack.c.l.b16 %v620
        %v629 = vunpack.c.l.b16 %v621
        %v630 = vpack.c.b16 %v627, %v626
        %v631 = vpack.c.b16 %v629, %v628
        %vm634 = vcmask 261120
        %v636 = vsel %vm634, %v617, 0
        %638 = vmatpush.bf16.msra.mxu0 0
        %639 = vmatpush.bf16.msra.mxu0 0
        %640 = vmatpush.bf16.msra.mxu0 0
        %641 = vmatpush.bf16.msra.mxu0 0
        %642 = vmatpush.bf16.msra.mxu0 0
        %643 = vmatpush.bf16.msra.mxu0 0
        %644 = vmatpush.bf16.msra.mxu0 %v631
        %645 = vmatpush.bf16.msra.mxu0 %v630
        %646 = vmatmul.bf16.gmra.mxu0 %v636
        %v647 = vpop.f32.mrf.mxu0
        %v648 = vadd.f32 0.0, %v647
        %v649 = vpop.f32.mrf.mxu0
        %650 = vdwg.mxu0
        %v651 = vadd.f32 %v613, %v648
        %v652 = vpack.c.bf16 %v615, %v615
        %v653 = vld [vmem:[#allocation13] sm:$0xf]
        %v654 = vld [vmem:[#allocation13 + $0x4] sm:$0xf]
        %v655 = vld [vmem:[#allocation13 + $0x8] sm:$0xf]
        %v656 = vld [vmem:[#allocation13 + $0xc] sm:$0xf]
        %v661 = vunpack.c.l.b16 %v653
        %v662 = vunpack.c.l.b16 %v654
        %v663 = vunpack.c.l.b16 %v655
        %v664 = vunpack.c.l.b16 %v656
        %v665 = vpack.c.b16 %v662, %v661
        %v666 = vpack.c.b16 %v664, %v663
        %v670 = vsel %vm634, %v652, 0
        %672 = vmatpush.bf16.msra.mxu0 0
        %673 = vmatpush.bf16.msra.mxu0 0
        %674 = vmatpush.bf16.msra.mxu0 0
        %675 = vmatpush.bf16.msra.mxu0 0
        %676 = vmatpush.bf16.msra.mxu0 0
        %677 = vmatpush.bf16.msra.mxu0 0
        %678 = vmatpush.bf16.msra.mxu0 %v666
        %679 = vmatpush.bf16.msra.mxu0 %v665
        %680 = vmatmul.bf16.gmra.mxu0 %v670
        %v681 = vpop.f32.mrf.mxu0
        %v682 = vadd.f32 0.0, %v681
        %v683 = vpop.f32.mrf.mxu0
        %684 = vdwg.mxu0
        %v685 = vadd.f32 %v651, %v682
        %v686 = vld [vmem:[%s4] sm:$0x1]
        %v688 = vperm.slane %v686, 0
        %v690 = vadd.f32 %v685, %v688
        %v691 = vxor.u32 %v690, 2147483648
        %v692 = vmul.f32 %v691, 1.442695
        %v693 = vpow.pop %v692
        %v694 = vadd.f32 %v693, 1.0
        %v695 = vrcp.pop %v694
        %v696 = vmul.f32 %v694, %v695
        %v697 = vsub.f32 1.0, %v696
        %v698 = vmul.f32 %v695, %v697
        %v699 = vadd.f32 %v695, %v698
        %vm700 = vweird.f32 %v694
        %vm701 = vweird.f32 %v695
        %vm702 = vmor %vm700, %vm701
        %v703 = vsel %vm702, %v695, %v699
        %v704 = vand.u32 2147483647, %v694
        %vm705 = vcmp.eq.f32.partialorder %v704, 8.507059e+37
        %v706 = vand.u32 %v694, 2147483648
        %v707 = vor.u32 1.1754944e-38, %v706
        %v708 = vsel %vm705, %v707, %v703
        %v709 = vmul.f32 1.0, %v708
        %v710 = vtanh.pop %v690
        %712 = vrot.lane.b32.xlu0 %v616, 32
        %v713 = vpop.permute.xlu0 %712
        %v715 = vmul.f32 %v709, %v713
        %717 = vrot.lane.b32.xlu0 %v710, 64
        %v718 = vpop.permute.xlu0 %717
        %v720 = vmul.f32 %v709, %v718
        %722 = vrot.lane.b32.xlu0 %v720, 32
        %v723 = vpop.permute.xlu0 %722
        %v725 = vadd.f32 %v715, %v723
        %v726 = vtanh.pop %v725
        %728 = vrot.lane.b32.xlu0 %v726, 64
        %v729 = vpop.permute.xlu0 %728
        %v731 = vmul.f32 %v709, %v729
        %v732 = vpack.c.bf16 %v731, %v731
        %v733 = vld [vmem:[#allocation15] sm:$0xf]
        %v734 = vld [vmem:[#allocation15 + $0x4] sm:$0xf]
        %v735 = vld [vmem:[#allocation15 + $0x8] sm:$0xf]
        %v736 = vld [vmem:[#allocation15 + $0xc] sm:$0xf]
        %v737 = vld [vmem:[%s6] sm:$0x1]
        %v739 = vperm.slane %v737, 0
        %742 = vrot.lane.b32.xlu0 %v732, 32
        %v743 = vpop.permute.xlu0 %742
        %v748 = vunpack.c.l.b16 %v733
        %v749 = vunpack.c.l.b16 %v734
        %v750 = vunpack.c.l.b16 %v735
        %v751 = vunpack.c.l.b16 %v736
        %v752 = vpack.c.b16 %v749, %v748
        %v753 = vpack.c.b16 %v751, %v750
        %v757 = vsel %vm634, %v743, 0
        %759 = vmatpush.bf16.msra.mxu0 0
        %760 = vmatpush.bf16.msra.mxu0 0
        %761 = vmatpush.bf16.msra.mxu0 0
        %762 = vmatpush.bf16.msra.mxu0 0
        %763 = vmatpush.bf16.msra.mxu0 0
        %764 = vmatpush.bf16.msra.mxu0 0
        %765 = vmatpush.bf16.msra.mxu0 %v753
        %766 = vmatpush.bf16.msra.mxu0 %v752
        %767 = vmatmul.bf16.gmra.mxu0 %v757
        %v768 = vpop.f32.mrf.mxu0
        %v769 = vadd.f32 %v739, %v768
        %v770 = vpop.f32.mrf.mxu0
        %771 = vdwg.mxu0
        %v772 = vmax.f32 %v769, 0.0
        %v774 = vrot.slane %v772, 1
        %v775 = vld [vmem:[#allocation2] sm:$0xff]
        %v776 = vld [vmem:[#allocation2 + $0x8] sm:$0xff]
        %v777 = vsel %vm634, %v772, 0
        %v780 = vsel %vm634, %v775, 0
        %782 = vmatpush.xpose.msra.mxu0 0.0
        %783 = vmatpush.xpose.msra.mxu0 0.0
        %784 = vmatpush.xpose.msra.mxu0 0.0
        %785 = vmatpush.xpose.msra.mxu0 0.0
        %786 = vmatpush.xpose.msra.mxu0 0.0
        %787 = vmatpush.xpose.msra.mxu0 0.0
        %788 = vmatpush.xpose.msra.mxu0 0.0
        %789 = vmatpush.xpose.msra.mxu0 0.0
        %790 = vmatpush.xpose.msra.mxu0 0.0
        %791 = vmatpush.xpose.msra.mxu0 0.0
        %792 = vmatpush.xpose.msra.mxu0 0.0
        %793 = vmatpush.xpose.msra.mxu0 0.0
        %794 = vmatpush.xpose.msra.mxu0 0.0
        %795 = vmatpush.xpose.msra.mxu0 0.0
        %796 = vmatpush.xpose.msra.mxu0 0.0
        %797 = vmatpush.xpose.msra.mxu0 %v780
        %798 = vmatmul.f32.gmra.mxu0 %v777
        %v799 = vpop.f32.mrf.mxu0
        %v800 = vadd.f32 0.0, %v799
        %801 = vdwg.mxu0
        %v802 = vsel %vm634, %v774, 0
        %v805 = vsel %vm634, %v776, 0
        %807 = vmatpush.xpose.msra.mxu0 0.0
        %808 = vmatpush.xpose.msra.mxu0 0.0
        %809 = vmatpush.xpose.msra.mxu0 0.0
        %810 = vmatpush.xpose.msra.mxu0 0.0
        %811 = vmatpush.xpose.msra.mxu0 0.0
        %812 = vmatpush.xpose.msra.mxu0 0.0
        %813 = vmatpush.xpose.msra.mxu0 0.0
        %814 = vmatpush.xpose.msra.mxu0 0.0
        %815 = vmatpush.xpose.msra.mxu0 0.0
        %816 = vmatpush.xpose.msra.mxu0 0.0
        %817 = vmatpush.xpose.msra.mxu0 0.0
        %818 = vmatpush.xpose.msra.mxu0 0.0
        %819 = vmatpush.xpose.msra.mxu0 0.0
        %820 = vmatpush.xpose.msra.mxu0 0.0
        %821 = vmatpush.xpose.msra.mxu0 0.0
        %822 = vmatpush.xpose.msra.mxu0 %v805
        %823 = vmatmul.f32.gmra.mxu0 %v802
        %v824 = vpop.f32.mrf.mxu0
        %v825 = vadd.f32 0.0, %v824
        %826 = vdwg.mxu0
        %v829 = vrot.slane %v825, 7
        %vm830 = vcmask 1041409
        %v831 = vsel %vm830, %v829, %v800
        %vm833 = vcmask 58368
        %v834 = vsel %vm833, %v831, -inf
        %835 = vmax.xlane.f32.xlu0 %v834
        %v836 = vpop.xlane.xlu0 %835
        %v838 = vrot.slane %v836, 1
        %v841 = vsub.f32 %v800, %v836
        %v842 = vsub.f32 %v825, %v838
        %v843 = vmul.f32 %v841, 1.442695
        %v844 = vpow.pop %v843
        %v845 = vmul.f32 %v842, 1.442695
        %v846 = vpow.pop %v845
        %v849 = vrot.slane %v846, 7
        %v850 = vsel %vm830, %v849, %v844
        %v852 = vsel %vm833, %v850, 0.0
        %853 = vadd.xlane.f32.xlu0 %v852
        %v854 = vpop.xlane.xlu0 %853
        %v855 = vrcp.pop %v854
        %v857 = vrot.slane %v855, 1
        %v860 = vmul.f32 %v844, %v855
        %v861 = vmul.f32 %v846, %v857
        %vm862 = vcmask 64512
        %v864 = vsel %vm862, %v860, 0
        %866 = vmatpush.msra.mxu0 0.0
        %867 = vmatpush.msra.mxu0 0.0
        %868 = vmatpush.msra.mxu0 0.0
        %869 = vmatpush.msra.mxu0 0.0
        %870 = vmatpush.msra.mxu0 0.0
        %871 = vmatpush.msra.mxu0 0.0
        %872 = vmatpush.msra.mxu0 0.0
        %873 = vmatpush.msra.mxu0 0.0
        %874 = vmatpush.msra.mxu0 0.0
        %875 = vmatpush.msra.mxu0 0.0
        %876 = vmatpush.msra.mxu0 0.0
        %877 = vmatpush.msra.mxu0 0.0
        %878 = vmatpush.msra.mxu0 0.0
        %879 = vmatpush.msra.mxu0 0.0
        %880 = vmatpush.msra.mxu0 0.0
        %881 = vmatpush.msra.mxu0 %v549
        %882 = vmatmul.f32.gmra.mxu0 %v864
        %v883 = vpop.f32.mrf.mxu0
        %v884 = vadd.f32 0.0, %v883
        %885 = vdwg.mxu0
        %v887 = vsel %vm862, %v861, 0
        %889 = vmatpush.msra.mxu0 0.0
        %890 = vmatpush.msra.mxu0 0.0
        %891 = vmatpush.msra.mxu0 0.0
        %892 = vmatpush.msra.mxu0 0.0
        %893 = vmatpush.msra.mxu0 0.0
        %894 = vmatpush.msra.mxu0 0.0
        %895 = vmatpush.msra.mxu0 0.0
        %896 = vmatpush.msra.mxu0 0.0
        %897 = vmatpush.msra.mxu0 0.0
        %898 = vmatpush.msra.mxu0 0.0
        %899 = vmatpush.msra.mxu0 0.0
        %900 = vmatpush.msra.mxu0 0.0
        %901 = vmatpush.msra.mxu0 0.0
        %902 = vmatpush.msra.mxu0 0.0
        %903 = vmatpush.msra.mxu0 0.0
        %904 = vmatpush.msra.mxu0 %v550
        %905 = vmatmul.f32.gmra.mxu0 %v887
        %v906 = vpop.f32.mrf.mxu0
        %v907 = vadd.f32 0.0, %v906
        %908 = vdwg.mxu0
        %v909 = vld [vmem:[#allocation18] sm:$0xf]
        %v910 = vld [vmem:[#allocation18 + $0x4] sm:$0xf]
        %v911 = vld [vmem:[#allocation18 + $0x8] sm:$0xf]
        %v912 = vld [vmem:[#allocation18 + $0xc] sm:$0xf]
        %v913 = vpack.c.bf16 %v884, %v884
        %v914 = vpack.c.bf16 %v907, %v907
        %v915 = vld [vmem:[#allocation19] sm:$0xf]
        %v916 = vld [vmem:[#allocation19 + $0x4] sm:$0xf]
        %v917 = vld [vmem:[#allocation19 + $0x8] sm:$0xf]
        %v918 = vld [vmem:[#allocation19 + $0xc] sm:$0xf]
        %v921 = vunpack.c.l.b16 %v913
        %v922 = vunpack.c.l.b16 %v914
        %v923 = vrot.slane %v922, 7
        %v924 = vsel %vm830, %v923, %v921
        %v925 = vpack.c.b16 %v924, %v924
        %v930 = vunpack.c.l.b16 %v915
        %v931 = vunpack.c.l.b16 %v916
        %v932 = vunpack.c.l.b16 %v917
        %v933 = vunpack.c.l.b16 %v918
        %v934 = vpack.c.b16 %v931, %v930
        %v935 = vpack.c.b16 %v933, %v932
        %v939 = vsel %vm634, %v925, 0
        %941 = vmatpush.bf16.msra.mxu0 0
        %942 = vmatpush.bf16.msra.mxu0 0
        %943 = vmatpush.bf16.msra.mxu0 0
        %944 = vmatpush.bf16.msra.mxu0 0
        %945 = vmatpush.bf16.msra.mxu0 0
        %946 = vmatpush.bf16.msra.mxu0 0
        %947 = vmatpush.bf16.msra.mxu0 %v935
        %948 = vmatpush.bf16.msra.mxu0 %v934
        %949 = vmatmul.bf16.gmra.mxu0 %v939
        %v950 = vpop.f32.mrf.mxu0
        %v951 = vadd.f32 0.0, %v950
        %v952 = vpop.f32.mrf.mxu0
        %953 = vdwg.mxu0
        %v958 = vunpack.c.l.b16 %v909
        %v959 = vunpack.c.l.b16 %v910
        %v960 = vunpack.c.l.b16 %v911
        %v961 = vunpack.c.l.b16 %v912
        %v962 = vpack.c.b16 %v959, %v958
        %v963 = vpack.c.b16 %v961, %v960
        %966 = vmatpush.bf16.msra.mxu0 0
        %967 = vmatpush.bf16.msra.mxu0 0
        %968 = vmatpush.bf16.msra.mxu0 0
        %969 = vmatpush.bf16.msra.mxu0 0
        %970 = vmatpush.bf16.msra.mxu0 0
        %971 = vmatpush.bf16.msra.mxu0 0
        %972 = vmatpush.bf16.msra.mxu0 %v963
        %973 = vmatpush.bf16.msra.mxu0 %v962
        %974 = vmatmul.bf16.gmra.mxu0 %v757
        %v975 = vpop.f32.mrf.mxu0
        %v976 = vadd.f32 %v951, %v975
        %v977 = vpop.f32.mrf.mxu0
        %978 = vdwg.mxu0
        %v979 = vld [vmem:[%s11] sm:$0x1]
        %v981 = vperm.slane %v979, 0
        %v983 = vadd.f32 %v976, %v981
        %vm984 = vcmask 1041408
        %v985 = vsel %vm984, %v983, -inf
        %986 = vmax.xlane.f32.xlu0 %v985
        %v987 = vpop.xlane.xlu0 %986
        %v988 = vsub.f32 %v983, %v987
        %v989 = vmul.f32 %v988, 1.442695
        %v990 = vpow.pop %v989
        %v991 = vsel %vm984, %v990, 0.0
        %992 = vadd.xlane.f32.xlu0 %v991
        %v993 = vpop.xlane.xlu0 %992
        %v994 = vlog2.pop %v993
        %v995 = vmul.f32 %v994, 0.6931472
        %v996 = vsub.f32 %v988, %v995
        %997 = vst [vmem:[%s546] sm:$0x3] %v996
        %v998 = vlaneseq
        %v999 = vand.u32 %v998, 127
        %v1000 = vsel %vm984, %v996, -inf
        %1001 = vmax.xlane.f32.xlu0 %v1000
        %v1002 = vpop.xlane.xlu0 %1001
        %vm1003 = vcmp.eq.f32.partialorder %v996, %v1002
        %v1004 = vsel %vm1003, %v999, 128
        %v1005 = vsel %vm984, %v1004, 2147483647
        %v1006 = vand.u32 %v1005, 65535
        %v1007 = vshra.s32 %v1005, 16
        %v1008 = vcvt.s32.f32 %v1006
        %v1009 = vcvt.s32.f32 %v1007
        %1010 = vmin.xlane.f32.xlu0 %v1009
        %v1011 = vpop.xlane.xlu0 %1010
        %vm1012 = vcmp.eq.f32.partialorder %v1009, %v1011
        %v1013 = vsel %vm1012, %v1008, inf
        %1014 = vmin.xlane.f32.xlu0 %v1013
        %v1015 = vpop.xlane.xlu0 %1014
        %v1016 = vcvt.f32.s32 %v1015
        %v1017 = vcvt.f32.s32 %v1011
        %v1018 = vshll.u32 %v1017, 16
        %v1019 = vadd.s32 %v1018, %v1016
        %vm1020 = vcmp.eq.s32.totalorder %v999, %v1019
        %v1021 = vsel %vm1020, 1, 0
        %v1022 = vcvt.s32.f32 %v1021
        %v1023 = vpack.c.bf16 %v1022, %v1022
        %v1024 = vld [vmem:[#allocation10] sm:$0xf]
        %v1025 = vld [vmem:[#allocation10 + $0x4] sm:$0xf]
        %v1026 = vld [vmem:[#allocation10 + $0x8] sm:$0xf]
        %v1027 = vld [vmem:[#allocation10 + $0xc] sm:$0xf]
        %v1028 = vld [vmem:[#allocation10 + $0x10] sm:$0xf]
        %v1029 = vld [vmem:[#allocation10 + $0x14] sm:$0xf]
        %v1030 = vld [vmem:[#allocation10 + $0x18] sm:$0xf]
        %v1031 = vld [vmem:[#allocation10 + $0x1c] sm:$0xf]
        %v1032 = vld [vmem:[#allocation10 + $0x20] sm:$0xf]
        %v1033 = vld [vmem:[#allocation10 + $0x24] sm:$0xf]
        %v1034 = vld [vmem:[#allocation10 + $0x28] sm:$0xf]
        %v1035 = vld [vmem:[#allocation10 + $0x2c] sm:$0xf]
        %v1036 = vld [vmem:[#allocation10 + $0x30] sm:$0xf]
        %v1037 = vld [vmem:[#allocation10 + $0x34] sm:$0xf]
        %v1038 = vld [vmem:[#allocation10 + $0x38] sm:$0xf]
        %v1039 = vld [vmem:[#allocation10 + $0x3c] sm:$0xf]
        %v1056 = vunpack.c.l.b16 %v1024
        %v1057 = vunpack.c.l.b16 %v1025
        %v1058 = vunpack.c.l.b16 %v1026
        %v1059 = vunpack.c.l.b16 %v1027
        %v1060 = vunpack.c.l.b16 %v1028
        %v1061 = vunpack.c.l.b16 %v1029
        %v1062 = vunpack.c.l.b16 %v1030
        %v1063 = vunpack.c.l.b16 %v1031
        %v1064 = vunpack.c.l.b16 %v1032
        %v1065 = vunpack.c.l.b16 %v1033
        %v1066 = vunpack.c.l.b16 %v1034
        %v1067 = vunpack.c.l.b16 %v1035
        %v1068 = vunpack.c.l.b16 %v1036
        %v1069 = vunpack.c.l.b16 %v1037
        %v1070 = vunpack.c.l.b16 %v1038
        %v1071 = vunpack.c.l.b16 %v1039
        %v1072 = vpack.c.b16 %v1057, %v1056
        %v1073 = vpack.c.b16 %v1059, %v1058
        %v1074 = vpack.c.b16 %v1061, %v1060
        %v1075 = vpack.c.b16 %v1063, %v1062
        %v1076 = vpack.c.b16 %v1065, %v1064
        %v1077 = vpack.c.b16 %v1067, %v1066
        %v1078 = vpack.c.b16 %v1069, %v1068
        %v1079 = vpack.c.b16 %v1071, %v1070
        %1088 = vmatpush.bf16.msra.mxu0 %v1079
        %1089 = vmatpush.bf16.msra.mxu0 %v1078
        %1090 = vmatpush.bf16.msra.mxu0 %v1077
        %1091 = vmatpush.bf16.msra.mxu0 %v1076
        %1092 = vmatpush.bf16.msra.mxu0 %v1075
        %1093 = vmatpush.bf16.msra.mxu0 %v1074
        %1094 = vmatpush.bf16.msra.mxu0 %v1073
        %1095 = vmatpush.bf16.msra.mxu0 %v1072
        %1096 = vmatmul.bf16.gmra.mxu0 %v1023
        %v1097 = vpop.f32.mrf.mxu0
        %v1098 = vadd.f32 0.0, %v1097
        %v1099 = vpop.f32.mrf.mxu0
        %1100 = vdwg.mxu0
        %1101 = vst [vmem:[#allocation3] sm:$0x3] %v1098
        %v1104 = vrot.slane %v907, 7
        %v1105 = vsel %vm830, %v1104, %v884
        %vm1107 = vcmask 254976
        %1108 = vst.msk [vmem:[#allocation4] sm:$0x3] %vm1107, %v1105
        %1110 = vrot.lane.b32.xlu0 %v731, 32
        %v1111 = vpop.permute.xlu0 %1110
        %1113 = vst.msk [vmem:[#allocation5] sm:$0x3] %vm1107, %v1111
        %1115 = vrot.lane.b32.xlu0 %v725, 96
        %v1116 = vpop.permute.xlu0 %1115
        %1118 = vst.msk [vmem:[#allocation6] sm:$0x3] %vm1107, %v1116
        %s1119 = sand.u32 %s310, 1
        %s1120 = scalar_lea.sflag [#allocation9], %s1119
        %s1121 = sand.u32 %s310, 1
        %s1122 = smul.addr %s1121, 2
        %s1123 = scalar_lea.vmem [#allocation21], %s1122
        // Predicated region
        $region105: #{tpu_custom_call.1} parent=67 // pred_check
          %p1124 = pneg %p320
        $region106: #{tpu_custom_call.1} parent=67 // pred_check_branch
          %1126 = sbr.rel (%p1124) target = $region108
        $region107: #{tpu_custom_call.1} parent=67 // pred_region
          %1128 = vsyncadd %s1120, 0
          %s1129 = sadd.s32 %s35, %s36
          %s1130 = smul.addr %s1129, 2
          %s1131 = scalar_lea.hbm %s12, %s1130
          %s1133 = sshll.u32 %s1123, 4
          %s1134 = int_to_ptr.vmem [resolvable:$true] %s1133
          %s1135 = sshll.u32 %s1131, 4
          %s1136 = int_to_ptr.hbm [resolvable:$true] %s1135
          %1138 = dma.vmem_to_hbm [thread:$0]  %s1134, 32, %s1136, %s1120
        $region108: #{tpu_custom_call.1} parent=67 // pred_fallthru
          _
      $region68: #{tpu_custom_call.1} parent=5 // pred_fallthru
        _
      %p1139 = scmp.le.s32.totalorder 2, %s26
      // Predicated region
      $region109: #{tpu_custom_call.1} parent=5 // pred_check
        %p1140 = pneg %p1139
      $region110: #{tpu_custom_call.1} parent=5 // pred_check_branch
        %1142 = sbr.rel (%p1140) target = $region112
      $region111: #{tpu_custom_call.1} parent=5 // pred_region
        %s1143 = ssub.s32 %s26, 2
        // Predicated region
        $region113: #{tpu_custom_call.1} parent=111 // pred_check
          %p1144 = pneg %p326
        $region114: #{tpu_custom_call.1} parent=111 // pred_check_branch
          %1146 = sbr.rel (%p1144) target = $region116
        $region115: #{tpu_custom_call.1} parent=111 // pred_region
          %s1147 = sand.u32 %s311, 1
          %s1148 = scalar_lea.sflag [#allocation9], %s1147
          %s1149 = sand.u32 %s311, 1
          %s1150 = smul.addr %s1149, 2
          %s1151 = scalar_lea.vmem [#allocation21], %s1150
          %1153 = dma.done %s1148, 32
        $region116: #{tpu_custom_call.1} parent=111 // pred_fallthru
          _
      $region112: #{tpu_custom_call.1} parent=5 // pred_fallthru
        _
    $region6: #{tpu_custom_call.1} parent=1 // loop_footer
      %s30 = sadd.s32 1, %s26
    $region7: #{tpu_custom_call.1} parent=1 // loop_footer_branch
      %25 = sbr.rel target = $region3
    $region8: #{tpu_custom_call.1} parent=1 // loop_exit
      _
    %1154 = vsyncpa [#allocation8], 1
    %s1155 = scalar_lea.sflag [#allocation8], 1
    %1156 = vsyncpa %s1155, 1
    %1157 = vsyncpa [#allocation11], 1
    %1158 = vsyncpa [#allocation14], 1
    %1159 = vsyncpa [#allocation17], 1
    %1160 = vsyncpa [#allocation20], 1
    %1161 = vsyncpa [#allocation9], 1
    %s1162 = scalar_lea.sflag [#allocation9], 1
    %1163 = vsyncpa %s1162, 1

// kernel: tpu_custom_call.1
$region0: #{tpu_custom_call.1}
  #allocation0 [shape = 'u32[]', space=smem, size = 0x4, offset = 0x4, fixed_abs, tag = 'smem constant byte address 0x4 - core index']
  #allocation1 [shape = 'u32[72,128]{1,0:T(1,128)}', space=vmem, size = 0x9000, scoped, tag = 'internal scratch']
  #allocation2 [shape = 'f32[2,8,32]{2,1,0:T(8,128)}', space=vmem, size = 0x2000, scoped, tag = 'scratch operand']
  #allocation3 [shape = 'f32[2,128]{1,0:T(2,128)}', space=vmem, size = 0x400, scoped, tag = 'scratch operand']
  #allocation4 [shape = 'f32[2,32]{1,0:T(2,128)}', space=vmem, size = 0x400, scoped, tag = 'scratch operand']
  #allocation5 [shape = 'f32[2,32]{1,0:T(2,128)}', space=vmem, size = 0x400, scoped, tag = 'scratch operand']
  #allocation6 [shape = 'f32[2,32]{1,0:T(2,128)}', space=vmem, size = 0x400, scoped, tag = 'scratch operand']
  %s0 = inlined_call_operand.hbm [shape: f32[2,8,32], index: 0, kind: input, shape index: {}]
  %s1 = inlined_call_operand.hbm [shape: bf16[128,128], index: 1, kind: input, shape index: {}]
  %s2 = inlined_call_operand.hbm [shape: bf16[32,128], index: 2, kind: input, shape index: {}]
  %s3 = inlined_call_operand.hbm [shape: bf16[32,128], index: 3, kind: input, shape index: {}]
  %s4 = inlined_call_operand.vmem [shape: f32[1,128], index: 4, kind: input, shape index: {}]
  %s5 = inlined_call_operand.hbm [shape: bf16[32,32], index: 5, kind: input, shape index: {}]
  %s6 = inlined_call_operand.vmem [shape: f32[1,32], index: 6, kind: input, shape index: {}]
  %s7 = inlined_call_operand.hbm [shape: bf16[32,32], index: 7, kind: input, shape index: {}]
  %s8 = inlined_call_operand.vmem [shape: f32[1,32], index: 8, kind: input, shape index: {}]
  %s9 = inlined_call_operand.hbm [shape: bf16[32,128], index: 9, kind: input, shape index: {}]
  %s10 = inlined_call_operand.hbm [shape: bf16[32,128], index: 10, kind: input, shape index: {}]
  %s11 = inlined_call_operand.vmem [shape: f32[1,128], index: 11, kind: input, shape index: {}]
  %s12 = inlined_call_operand.hbm [shape: f32[6,2,128], index: 12, kind: output, shape index: {}]
  %s13 = sld [smem:[#allocation0]]
  $region117: #{tpu_custom_call.1} parent=0
    _
  %s15 = ssub.s32 1, %s13
  %s16 = scalar_select 0, %s15, %s13
  $region1: #{tpu_custom_call.1} parent=0
    #allocation7 [shape = 'u8[8192]{0}', space=vmem, size = 0x2000, scoped, tag = 'input window, operand 0, single buffered']
    #allocation8 [shape = 's32[2]{0}', space=sflag, size = 0x8, scoped, tag = 'scoped memory for tpu_custom_call.1']
    #allocation9 [shape = 's32[2]{0}', space=sflag, size = 0x8, scoped, tag = 'scoped memory for tpu_custom_call.1']
    #allocation10 [shape = 'u8[32768]{0}', space=vmem, size = 0x8000, scoped, tag = 'input window, operand 1, single buffered']
    #allocation11 [shape = 's32[1]{0}', space=sflag, size = 0x4, scoped, tag = 'scoped memory for tpu_custom_call.1']
    #allocation12 [shape = 'u8[8192]{0}', space=vmem, size = 0x2000, scoped, tag = 'input window, operand 2, single buffered']
    #allocation13 [shape = 'u8[8192]{0}', space=vmem, size = 0x2000, scoped, tag = 'input window, operand 3, single buffered']
    #allocation14 [shape = 's32[1]{0}', space=sflag, size = 0x4, scoped, tag = 'scoped memory for tpu_custom_call.1']
    #allocation15 [shape = 'u8[8192]{0}', space=vmem, size = 0x2000, scoped, tag = 'input window, operand 5, single buffered']
    #allocation16 [shape = 'u8[8192]{0}', space=vmem, size = 0x2000, scoped, tag = 'input window, operand 7, single buffered']
    #allocation17 [shape = 's32[1]{0}', space=sflag, size = 0x4, scoped, tag = 'scoped memory for tpu_custom_call.1']
    #allocation18 [shape = 'u8[8192]{0}', space=vmem, size = 0x2000, scoped, tag = 'input window, operand 9, single buffered']
    #allocation19 [shape = 'u8[8192]{0}', space=vmem, size = 0x2000, scoped, tag = 'input window, operand 10, single buffered']
    #allocation20 [shape = 's32[1]{0}', space=sflag, size = 0x4, scoped, tag = 'scoped memory for tpu_custom_call.1']
    #allocation21 [shape = 'u8[2048]{0}', space=vmem, size = 0x800, scoped, tag = 'output window, operand 0']
    %17 = vsyncpa [#allocation8], 0
    %18 = vsyncpa [#allocation11], 0
    %19 = vsyncpa [#allocation14], 0
    %20 = vsyncpa [#allocation17], 0
    %21 = vsyncpa [#allocation20], 0
    %22 = vsyncpa [#allocation9], 0
    %s23 = scalar_lea.sflag [#allocation9], 1
    %24 = vsyncpa %s23, 0
    loop: start=0, step=1, limit=8
    $region2: #{tpu_custom_call.1} parent=1 // loop_pre_header
      _
    $region3: #{tpu_custom_call.1} parent=1 // loop_header
      %s26 = sphi 0, %s30
      %p27 = scmp.ge.s32.totalorder %s26, 8
      %s33 = sphi 0, %s45
      %s34 = sphi 0, %s41
      %s35 = sphi 0, %s33
      %s36 = sphi 0, %s34
      %s37 = sphi 0, %s35
      %s38 = sphi 0, %s36
      %s48 = sphi 0, %s50
      %s51 = sphi 0, %s48
      %s52 = sphi 0, %s51
      %s68 = sphi 0, %s52
      %s72 = sphi 0, %s72
      %s74 = sphi 0, %s72
      %s75 = sphi 0, %s74
      %s89 = sphi 0, %s75
      %s93 = sphi 0, %s93
      %s95 = sphi 0, %s93
      %s96 = sphi 0, %s95
      %s110 = sphi 0, %s96
      %s114 = sphi 0, %s114
      %s116 = sphi 0, %s114
      %s117 = sphi 0, %s116
      %s131 = sphi 0, %s117
      %s135 = sphi 0, %s135
      %s137 = sphi 0, %s135
      %s138 = sphi 0, %s137
      %s152 = sphi 0, %s138
      %s156 = sphi 0, %s156
      %s158 = sphi 0, %s156
      %s159 = sphi 0, %s158
      %s173 = sphi 0, %s159
      %s177 = sphi 0, %s177
      %s179 = sphi 0, %s177
      %s180 = sphi 0, %s179
      %s194 = sphi 0, %s180
      %s198 = sphi 0, %s198
      %s200 = sphi 0, %s198
      %s201 = sphi 0, %s200
      %s215 = sphi 0, %s201
      %s219 = sphi 0, %s219
      %s221 = sphi 0, %s219
      %s222 = sphi 0, %s221
      %s236 = sphi 0, %s222
      %s240 = sphi 0, %s240
      %s242 = sphi 0, %s240
      %s243 = sphi 0, %s242
      %s257 = sphi 0, %s243
      %s261 = sphi 0, %s261
      %s263 = sphi 0, %s261
      %s264 = sphi 0, %s263
      %s278 = sphi 0, %s264
      %s282 = sphi 0, %s282
      %s284 = sphi 0, %s282
      %s285 = sphi 0, %s284
      %s299 = sphi 0, %s285
      %s307 = sphi 0, %s309
      %s310 = sphi 0, %s307
      %s311 = sphi 0, %s310
      %s327 = sphi 0, %s311
    $region4: #{tpu_custom_call.1} parent=1 // loop_header_branch
      %29 = sbr.rel (%p27) target = $region8
    $region5: #{tpu_custom_call.1} parent=1 // loop_body
      %s31 = ssub.s32 %s26, 1
      %s32 = ssub.s32 %s26, 2
      %s39 = sadd.s32 1, %s34
      %p40 = scmp.ge.s32.totalorder %s39, 6
      %s41 = scalar_select %p40, 0, %s39
      %s42 = sadd.s32 1, %s33
      %s43 = scalar_select %p40, %s42, %s33
      %p44 = scmp.ge.s32.totalorder %s43, 1
      %s45 = scalar_select %p44, 0, %s43
      %s46 = ssub.s32 %s33, %s45
      %p47 = scmp.eq.s32.totalorder %s46, 0
      %s49 = sadd.s32 %s48, 1
      %s50 = scalar_select %p47, %s48, %s49
      %p53 = pneg %p47
      %p54 = scmp.eq.s32.totalorder %s26, 5
      %p55 = por %p53, %p54
      %p56 = scmp.ne.s32.totalorder %s48, %s51
      %p57 = scmp.eq.s32.totalorder %s26, 0
      %p58 = por %p56, %p57
      %p59 = scmp.ne.s32.totalorder %s48, %s51
      %p60 = scmp.eq.s32.totalorder %s31, 5
      %p61 = por %p59, %p60
      %p62 = scmp.ne.s32.totalorder %s51, %s52
      %p63 = scmp.eq.s32.totalorder %s31, 0
      %p64 = por %p62, %p63
      %p65 = scmp.ne.s32.totalorder %s51, %s52
      %p66 = scmp.eq.s32.totalorder %s32, 5
      %p67 = por %p65, %p66
      %p69 = scmp.ne.s32.totalorder %s52, %s68
      %p70 = scmp.eq.s32.totalorder %s32, 0
      %p71 = por %p69, %p70
      %s73 = sadd.s32 %s72, 1
      %p76 = scmp.eq.s32.totalorder %s26, 5
      %p77 = scmp.ne.s32.totalorder %s72, %s74
      %p78 = scmp.eq.s32.totalorder %s26, 0
      %p79 = por %p77, %p78
      %p80 = scmp.ne.s32.totalorder %s72, %s74
      %p81 = scmp.eq.s32.totalorder %s31, 5
      %p82 = por %p80, %p81
      %p83 = scmp.ne.s32.totalorder %s74, %s75
      %p84 = scmp.eq.s32.totalorder %s31, 0
      %p85 = por %p83, %p84
      %p86 = scmp.ne.s32.totalorder %s74, %s75
      %p87 = scmp.eq.s32.totalorder %s32, 5
      %p88 = por %p86, %p87
      %p90 = scmp.ne.s32.totalorder %s75, %s89
      %p91 = scmp.eq.s32.totalorder %s32, 0
      %p92 = por %p90, %p91
      %s94 = sadd.s32 %s93, 1
      %p97 = scmp.eq.s32.totalorder %s26, 5
      %p98 = scmp.ne.s32.totalorder %s93, %s95
      %p99 = scmp.eq.s32.totalorder %s26, 0
      %p100 = por %p98, %p99
      %p101 = scmp.ne.s32.totalorder %s93, %s95
      %p102 = scmp.eq.s32.totalorder %s31, 5
      %p103 = por %p101, %p102
      %p104 = scmp.ne.s32.totalorder %s95, %s96
      %p105 = scmp.eq.s32.totalorder %s31, 0
      %p106 = por %p104, %p105
      %p107 = scmp.ne.s32.totalorder %s95, %s96
      %p108 = scmp.eq.s32.totalorder %s32, 5
      %p109 = por %p107, %p108
      %p111 = scmp.ne.s32.totalorder %s96, %s110
      %p112 = scmp.eq.s32.totalorder %s32, 0
      %p113 = por %p111, %p112
      %s115 = sadd.s32 %s114, 1
      %p118 = scmp.eq.s32.totalorder %s26, 5
      %p119 = scmp.ne.s32.totalorder %s114, %s116
      %p120 = scmp.eq.s32.totalorder %s26, 0
      %p121 = por %p119, %p120
      %p122 = scmp.ne.s32.totalorder %s114, %s116
      %p123 = scmp.eq.s32.totalorder %s31, 5
      %p124 = por %p122, %p123
      %p125 = scmp.ne.s32.totalorder %s116, %s117
      %p126 = scmp.eq.s32.totalorder %s31, 0
      %p127 = por %p125, %p126
      %p128 = scmp.ne.s32.totalorder %s116, %s117
      %p129 = scmp.eq.s32.totalorder %s32, 5
      %p130 = por %p128, %p129
      %p132 = scmp.ne.s32.totalorder %s117, %s131
      %p133 = scmp.eq.s32.totalorder %s32, 0
      %p134 = por %p132, %p133
      %s136 = sadd.s32 %s135, 1
      %p139 = scmp.eq.s32.totalorder %s26, 5
      %p140 = scmp.ne.s32.totalorder %s135, %s137
      %p141 = scmp.eq.s32.totalorder %s26, 0
      %p142 = por %p140, %p141
      %p143 = scmp.ne.s32.totalorder %s135, %s137
      %p144 = scmp.eq.s32.totalorder %s31, 5
      %p145 = por %p143, %p144
      %p146 = scmp.ne.s32.totalorder %s137, %s138
      %p147 = scmp.eq.s32.totalorder %s31, 0
      %p148 = por %p146, %p147
      %p149 = scmp.ne.s32.totalorder %s137, %s138
      %p150 = scmp.eq.s32.totalorder %s32, 5
      %p151 = por %p149, %p150
      %p153 = scmp.ne.s32.totalorder %s138, %s152
      %p154 = scmp.eq.s32.totalorder %s32, 0
      %p155 = por %p153, %p154
      %s157 = sadd.s32 %s156, 1
      %p160 = scmp.eq.s32.totalorder %s26, 5
      %p161 = scmp.ne.s32.totalorder %s156, %s158
      %p162 = scmp.eq.s32.totalorder %s26, 0
      %p163 = por %p161, %p162
      %p164 = scmp.ne.s32.totalorder %s156, %s158
      %p165 = scmp.eq.s32.totalorder %s31, 5
      %p166 = por %p164, %p165
      %p167 = scmp.ne.s32.totalorder %s158, %s159
      %p168 = scmp.eq.s32.totalorder %s31, 0
      %p169 = por %p167, %p168
      %p170 = scmp.ne.s32.totalorder %s158, %s159
      %p171 = scmp.eq.s32.totalorder %s32, 5
      %p172 = por %p170, %p171
      %p174 = scmp.ne.s32.totalorder %s159, %s173
      %p175 = scmp.eq.s32.totalorder %s32, 0
      %p176 = por %p174, %p175
      %s178 = sadd.s32 %s177, 1
      %p181 = scmp.eq.s32.totalorder %s26, 5
      %p182 = scmp.ne.s32.totalorder %s177, %s179
      %p183 = scmp.eq.s32.totalorder %s26, 0
      %p184 = por %p182, %p183
      %p185 = scmp.ne.s32.totalorder %s177, %s179
      %p186 = scmp.eq.s32.totalorder %s31, 5
      %p187 = por %p185, %p186
      %p188 = scmp.ne.s32.totalorder %s179, %s180
      %p189 = scmp.eq.s32.totalorder %s31, 0
      %p190 = por %p188, %p189
      %p191 = scmp.ne.s32.totalorder %s179, %s180
      %p192 = scmp.eq.s32.totalorder %s32, 5
      %p193 = por %p191, %p192
      %p195 = scmp.ne.s32.totalorder %s180, %s194
      %p196 = scmp.eq.s32.totalorder %s32, 0
      %p197 = por %p195, %p196
      %s199 = sadd.s32 %s198, 1
      %p202 = scmp.eq.s32.totalorder %s26, 5
      %p203 = scmp.ne.s32.totalorder %s198, %s200
      %p204 = scmp.eq.s32.totalorder %s26, 0
      %p205 = por %p203, %p204
      %p206 = scmp.ne.s32.totalorder %s198, %s200
      %p207 = scmp.eq.s32.totalorder %s31, 5
      %p208 = por %p206, %p207
      %p209 = scmp.ne.s32.totalorder %s200, %s201
      %p210 = scmp.eq.s32.totalorder %s31, 0
      %p211 = por %p209, %p210
      %p212 = scmp.ne.s32.totalorder %s200, %s201
      %p213 = scmp.eq.s32.totalorder %s32, 5
      %p214 = por %p212, %p213
      %p216 = scmp.ne.s32.totalorder %s201, %s215
      %p217 = scmp.eq.s32.totalorder %s32, 0
      %p218 = por %p216, %p217
      %s220 = sadd.s32 %s219, 1
      %p223 = scmp.eq.s32.totalorder %s26, 5
      %p224 = scmp.ne.s32.totalorder %s219, %s221
      %p225 = scmp.eq.s32.totalorder %s26, 0
      %p226 = por %p224, %p225
      %p227 = scmp.ne.s32.totalorder %s219, %s221
      %p228 = scmp.eq.s32.totalorder %s31, 5
      %p229 = por %p227, %p228
      %p230 = scmp.ne.s32.totalorder %s221, %s222
      %p231 = scmp.eq.s32.totalorder %s31, 0
      %p232 = por %p230, %p231
      %p233 = scmp.ne.s32.totalorder %s221, %s222
      %p234 = scmp.eq.s32.totalorder %s32, 5
      %p235 = por %p233, %p234
      %p237 = scmp.ne.s32.totalorder %s222, %s236
      %p238 = scmp.eq.s32.totalorder %s32, 0
      %p239 = por %p237, %p238
      %s241 = sadd.s32 %s240, 1
      %p244 = scmp.eq.s32.totalorder %s26, 5
      %p245 = scmp.ne.s32.totalorder %s240, %s242
      %p246 = scmp.eq.s32.totalorder %s26, 0
      %p247 = por %p245, %p246
      %p248 = scmp.ne.s32.totalorder %s240, %s242
      %p249 = scmp.eq.s32.totalorder %s31, 5
      %p250 = por %p248, %p249
      %p251 = scmp.ne.s32.totalorder %s242, %s243
      %p252 = scmp.eq.s32.totalorder %s31, 0
      %p253 = por %p251, %p252
      %p254 = scmp.ne.s32.totalorder %s242, %s243
      %p255 = scmp.eq.s32.totalorder %s32, 5
      %p256 = por %p254, %p255
      %p258 = scmp.ne.s32.totalorder %s243, %s257
      %p259 = scmp.eq.s32.totalorder %s32, 0
      %p260 = por %p258, %p259
      %s262 = sadd.s32 %s261, 1
      %p265 = scmp.eq.s32.totalorder %s26, 5
      %p266 = scmp.ne.s32.totalorder %s261, %s263
      %p267 = scmp.eq.s32.totalorder %s26, 0
      %p268 = por %p266, %p267
      %p269 = scmp.ne.s32.totalorder %s261, %s263
      %p270 = scmp.eq.s32.totalorder %s31, 5
      %p271 = por %p269, %p270
      %p272 = scmp.ne.s32.totalorder %s263, %s264
      %p273 = scmp.eq.s32.totalorder %s31, 0
      %p274 = por %p272, %p273
      %p275 = scmp.ne.s32.totalorder %s263, %s264
      %p276 = scmp.eq.s32.totalorder %s32, 5
      %p277 = por %p275, %p276
      %p279 = scmp.ne.s32.totalorder %s264, %s278
      %p280 = scmp.eq.s32.totalorder %s32, 0
      %p281 = por %p279, %p280
      %s283 = sadd.s32 %s282, 1
      %p286 = scmp.eq.s32.totalorder %s26, 5
      %p287 = scmp.ne.s32.totalorder %s282, %s284
      %p288 = scmp.eq.s32.totalorder %s26, 0
      %p289 = por %p287, %p288
      %p290 = scmp.ne.s32.totalorder %s282, %s284
      %p291 = scmp.eq.s32.totalorder %s31, 5
      %p292 = por %p290, %p291
      %p293 = scmp.ne.s32.totalorder %s284, %s285
      %p294 = scmp.eq.s32.totalorder %s31, 0
      %p295 = por %p293, %p294
      %p296 = scmp.ne.s32.totalorder %s284, %s285
      %p297 = scmp.eq.s32.totalorder %s32, 5
      %p298 = por %p296, %p297
      %p300 = scmp.ne.s32.totalorder %s285, %s299
      %p301 = scmp.eq.s32.totalorder %s32, 0
      %p302 = por %p300, %p301
      %s303 = ssub.s32 %s34, %s41
      %s304 = ssub.s32 %s33, %s45
      %s305 = sor.u32 %s303, %s304
      %p306 = scmp.eq.s32.totalorder %s305, 0
      %s308 = sadd.s32 %s307, 1
      %s309 = scalar_select %p306, %s307, %s308
      %p312 = pneg %p306
      %p313 = scmp.eq.s32.totalorder %s26, 5
      %p314 = por %p312, %p313
      %p315 = scmp.ne.s32.totalorder %s307, %s310
      %p316 = scmp.eq.s32.totalorder %s26, 0
      %p317 = por %p315, %p316
      %p318 = scmp.ne.s32.totalorder %s307, %s310
      %p319 = scmp.eq.s32.totalorder %s31, 5
      %p320 = por %p318, %p319
      %p321 = scmp.ne.s32.totalorder %s310, %s311
      %p322 = scmp.eq.s32.totalorder %s31, 0
      %p323 = por %p321, %p322
      %p324 = scmp.ne.s32.totalorder %s310, %s311
      %p325 = scmp.eq.s32.totalorder %s32, 5
      %p326 = por %p324, %p325
      %p328 = scmp.ne.s32.totalorder %s311, %s327
      %p329 = scmp.eq.s32.totalorder %s32, 0
      %p330 = por %p328, %p329
      %p331 = scmp.le.s32.totalorder 1, %s26
      %p332 = scmp.lt.s32.totalorder %s26, 7
      %p333 = pnand %p331, %p332
      %p334 = pneg %p333
      // Predicated region
      $region9: #{tpu_custom_call.1} parent=5 // pred_check
        _
      $region10: #{tpu_custom_call.1} parent=5 // pred_check_branch
        %336 = sbr.rel (%p333) target = $region12
      $region11: #{tpu_custom_call.1} parent=5 // pred_region
        %s337 = ssub.s32 %s26, 1
        // Predicated region
        $region13: #{tpu_custom_call.1} parent=11 // pred_check
          %p338 = pneg %p64
        $region14: #{tpu_custom_call.1} parent=11 // pred_check_branch
          %340 = sbr.rel (%p338) target = $region16
        $region15: #{tpu_custom_call.1} parent=11 // pred_region
          %s341 = smul.u32 2, %s35
          %343 = vsyncadd [#allocation8], 0
          %s344 = smul.addr %s341, 8
          %s345 = scalar_lea.hbm %s0, %s344
          %s346 = sshll.u32 %s345, 4
          %s347 = int_to_ptr.hbm [resolvable:$true] %s346
          %s348 = sshll.u32 [#allocation7], 4
          %s349 = int_to_ptr.vmem [resolvable:$true] %s348
          %354 = dma.hbm_to_vmem [thread:$0]  %s347, 256, %s349, [#allocation8], 128, 128, 8
        $region16: #{tpu_custom_call.1} parent=11 // pred_fallthru
          _
        // Predicated region
        $region17: #{tpu_custom_call.1} parent=11 // pred_check
          %p355 = pneg %p85
        $region18: #{tpu_custom_call.1} parent=11 // pred_check_branch
          %357 = sbr.rel (%p355) target = $region20
        $region19: #{tpu_custom_call.1} parent=11 // pred_region
          %359 = vsyncadd [#allocation11], 0
          %s360 = sshll.u32 %s1, 4
          %s361 = int_to_ptr.hbm [resolvable:$true] %s360
          %s362 = sshll.u32 [#allocation10], 4
          %s363 = int_to_ptr.vmem [resolvable:$true] %s362
          %368 = dma.hbm_to_vmem [thread:$0]  %s361, 1024, %s363, [#allocation11], 64, 64, 4
        $region20: #{tpu_custom_call.1} parent=11 // pred_fallthru
          _
        // Predicated region
        $region21: #{tpu_custom_call.1} parent=11 // pred_check
          %p369 = pneg %p106
        $region22: #{tpu_custom_call.1} parent=11 // pred_check_branch
          %371 = sbr.rel (%p369) target = $region24
        $region23: #{tpu_custom_call.1} parent=11 // pred_region
          %373 = vsyncadd [#allocation11], 0
          %s374 = sshll.u32 %s2, 4
          %s375 = int_to_ptr.hbm [resolvable:$true] %s374
          %s376 = sshll.u32 [#allocation12], 4
          %s377 = int_to_ptr.vmem [resolvable:$true] %s376
          %382 = dma.hbm_to_vmem [thread:$0]  %s375, 256, %s377, [#allocation11], 64, 64, 4
        $region24: #{tpu_custom_call.1} parent=11 // pred_fallthru
          _
        // Predicated region
        $region25: #{tpu_custom_call.1} parent=11 // pred_check
          %p383 = pneg %p127
        $region26: #{tpu_custom_call.1} parent=11 // pred_check_branch
          %385 = sbr.rel (%p383) target = $region28
        $region27: #{tpu_custom_call.1} parent=11 // pred_region
          %387 = vsyncadd [#allocation14], 0
          %s388 = sshll.u32 %s3, 4
          %s389 = int_to_ptr.hbm [resolvable:$true] %s388
          %s390 = sshll.u32 [#allocation13], 4
          %s391 = int_to_ptr.vmem [resolvable:$true] %s390
          %396 = dma.hbm_to_vmem [thread:$0]  %s389, 256, %s391, [#allocation14], 64, 64, 4
        $region28: #{tpu_custom_call.1} parent=11 // pred_fallthru
          _
        // Predicated region
        $region29: #{tpu_custom_call.1} parent=11 // pred_check
          %p397 = pneg %p148
        $region30: #{tpu_custom_call.1} parent=11 // pred_check_branch
          %399 = sbr.rel (%p397) target = $region32
        $region31: #{tpu_custom_call.1} parent=11 // pred_region
          _
        $region32: #{tpu_custom_call.1} parent=11 // pred_fallthru
          _
        // Predicated region
        $region33: #{tpu_custom_call.1} parent=11 // pred_check
          %p400 = pneg %p169
        $region34: #{tpu_custom_call.1} parent=11 // pred_check_branch
          %402 = sbr.rel (%p400) target = $region36
        $region35: #{tpu_custom_call.1} parent=11 // pred_region
          %404 = vsyncadd [#allocation14], 0
          %s405 = sshll.u32 %s5, 4
          %s406 = int_to_ptr.hbm [resolvable:$true] %s405
          %s407 = sshll.u32 [#allocation15], 4
          %s408 = int_to_ptr.vmem [resolvable:$true] %s407
          %413 = dma.hbm_to_vmem [thread:$0]  %s406, 256, %s408, [#allocation14], 64, 64, 4
        $region36: #{tpu_custom_call.1} parent=11 // pred_fallthru
          _
        // Predicated region
        $region37: #{tpu_custom_call.1} parent=11 // pred_check
          %p414 = pneg %p190
        $region38: #{tpu_custom_call.1} parent=11 // pred_check_branch
          %416 = sbr.rel (%p414) target = $region40
        $region39: #{tpu_custom_call.1} parent=11 // pred_region
          _
        $region40: #{tpu_custom_call.1} parent=11 // pred_fallthru
          _
        // Predicated region
        $region41: #{tpu_custom_call.1} parent=11 // pred_check
          %p417 = pneg %p211
        $region42: #{tpu_custom_call.1} parent=11 // pred_check_branch
          %419 = sbr.rel (%p417) target = $region44
        $region43: #{tpu_custom_call.1} parent=11 // pred_region
          %421 = vsyncadd [#allocation17], 0
          %s422 = sshll.u32 %s7, 4
          %s423 = int_to_ptr.hbm [resolvable:$true] %s422
          %s424 = sshll.u32 [#allocation16], 4
          %s425 = int_to_ptr.vmem [resolvable:$true] %s424
          %430 = dma.hbm_to_vmem [thread:$0]  %s423, 256, %s425, [#allocation17], 64, 64, 4
        $region44: #{tpu_custom_call.1} parent=11 // pred_fallthru
          _
        // Predicated region
        $region45: #{tpu_custom_call.1} parent=11 // pred_check
          %p431 = pneg %p232
        $region46: #{tpu_custom_call.1} parent=11 // pred_check_branch
          %433 = sbr.rel (%p431) target = $region48
        $region47: #{tpu_custom_call.1} parent=11 // pred_region
          _
        $region48: #{tpu_custom_call.1} parent=11 // pred_fallthru
          _
        // Predicated region
        $region49: #{tpu_custom_call.1} parent=11 // pred_check
          %p434 = pneg %p253
        $region50: #{tpu_custom_call.1} parent=11 // pred_check_branch
          %436 = sbr.rel (%p434) target = $region52
        $region51: #{tpu_custom_call.1} parent=11 // pred_region
          %438 = vsyncadd [#allocation17], 0
          %s439 = sshll.u32 %s9, 4
          %s440 = int_to_ptr.hbm [resolvable:$true] %s439
          %s441 = sshll.u32 [#allocation18], 4
          %s442 = int_to_ptr.vmem [resolvable:$true] %s441
          %447 = dma.hbm_to_vmem [thread:$0]  %s440, 256, %s442, [#allocation17], 64, 64, 4
        $region52: #{tpu_custom_call.1} parent=11 // pred_fallthru
          _
        // Predicated region
        $region53: #{tpu_custom_call.1} parent=11 // pred_check
          %p448 = pneg %p274
        $region54: #{tpu_custom_call.1} parent=11 // pred_check_branch
          %450 = sbr.rel (%p448) target = $region56
        $region55: #{tpu_custom_call.1} parent=11 // pred_region
          %452 = vsyncadd [#allocation20], 0
          %s453 = sshll.u32 %s10, 4
          %s454 = int_to_ptr.hbm [resolvable:$true] %s453
          %s455 = sshll.u32 [#allocation19], 4
          %s456 = int_to_ptr.vmem [resolvable:$true] %s455
          %461 = dma.hbm_to_vmem [thread:$0]  %s454, 256, %s456, [#allocation20], 64, 64, 4
        $region56: #{tpu_custom_call.1} parent=11 // pred_fallthru
          _
        // Predicated region
        $region57: #{tpu_custom_call.1} parent=11 // pred_check
          %p462 = pneg %p295
        $region58: #{tpu_custom_call.1} parent=11 // pred_check_branch
          %464 = sbr.rel (%p462) target = $region60
        $region59: #{tpu_custom_call.1} parent=11 // pred_region
          _
        $region60: #{tpu_custom_call.1} parent=11 // pred_fallthru
          _
      $region12: #{tpu_custom_call.1} parent=5 // pred_fallthru
        _
      %p465 = scmp.lt.s32.totalorder %s26, 6
      // Predicated region
      $region61: #{tpu_custom_call.1} parent=5 // pred_check
        %p466 = pneg %p465
      $region62: #{tpu_custom_call.1} parent=5 // pred_check_branch
        %468 = sbr.rel (%p466) target = $region64
      $region63: #{tpu_custom_call.1} parent=5 // pred_region
        _
      $region64: #{tpu_custom_call.1} parent=5 // pred_fallthru
        _
      %p469 = scmp.le.s32.totalorder 1, %s26
      %p470 = scmp.lt.s32.totalorder %s26, 7
      %p471 = pnand %p469, %p470
      %p472 = pneg %p471
      // Predicated region
      $region65: #{tpu_custom_call.1} parent=5 // pred_check
        _
      $region66: #{tpu_custom_call.1} parent=5 // pred_check_branch
        %474 = sbr.rel (%p471) target = $region68
      $region67: #{tpu_custom_call.1} parent=5 // pred_region
        %s475 = ssub.s32 %s26, 1
        // Predicated region
        $region69: #{tpu_custom_call.1} parent=67 // pred_check
          %p476 = pneg %p64
        $region70: #{tpu_custom_call.1} parent=67 // pred_check_branch
          %478 = sbr.rel (%p476) target = $region72
        $region71: #{tpu_custom_call.1} parent=67 // pred_region
          %480 = dma.done [#allocation8], 256
        $region72: #{tpu_custom_call.1} parent=67 // pred_fallthru
          _
        // Predicated region
        $region73: #{tpu_custom_call.1} parent=67 // pred_check
          %p481 = pneg %p85
        $region74: #{tpu_custom_call.1} parent=67 // pred_check_branch
          %483 = sbr.rel (%p481) target = $region76
        $region75: #{tpu_custom_call.1} parent=67 // pred_region
          %485 = dma.done [#allocation11], 1024
        $region76: #{tpu_custom_call.1} parent=67 // pred_fallthru
          _
        // Predicated region
        $region77: #{tpu_custom_call.1} parent=67 // pred_check
          %p486 = pneg %p106
        $region78: #{tpu_custom_call.1} parent=67 // pred_check_branch
          %488 = sbr.rel (%p486) target = $region80
        $region79: #{tpu_custom_call.1} parent=67 // pred_region
          %490 = dma.done [#allocation11], 256
        $region80: #{tpu_custom_call.1} parent=67 // pred_fallthru
          _
        // Predicated region
        $region81: #{tpu_custom_call.1} parent=67 // pred_check
          %p491 = pneg %p127
        $region82: #{tpu_custom_call.1} parent=67 // pred_check_branch
          %493 = sbr.rel (%p491) target = $region84
        $region83: #{tpu_custom_call.1} parent=67 // pred_region
          %495 = dma.done [#allocation14], 256
        $region84: #{tpu_custom_call.1} parent=67 // pred_fallthru
          _
        // Predicated region
        $region85: #{tpu_custom_call.1} parent=67 // pred_check
          %p496 = pneg %p169
        $region86: #{tpu_custom_call.1} parent=67 // pred_check_branch
          %498 = sbr.rel (%p496) target = $region88
        $region87: #{tpu_custom_call.1} parent=67 // pred_region
          %500 = dma.done [#allocation14], 256
        $region88: #{tpu_custom_call.1} parent=67 // pred_fallthru
          _
        // Predicated region
        $region89: #{tpu_custom_call.1} parent=67 // pred_check
          %p501 = pneg %p211
        $region90: #{tpu_custom_call.1} parent=67 // pred_check_branch
          %503 = sbr.rel (%p501) target = $region92
        $region91: #{tpu_custom_call.1} parent=67 // pred_region
          %505 = dma.done [#allocation17], 256
        $region92: #{tpu_custom_call.1} parent=67 // pred_fallthru
          _
        // Predicated region
        $region93: #{tpu_custom_call.1} parent=67 // pred_check
          %p506 = pneg %p253
        $region94: #{tpu_custom_call.1} parent=67 // pred_check_branch
          %508 = sbr.rel (%p506) target = $region96
        $region95: #{tpu_custom_call.1} parent=67 // pred_region
          %510 = dma.done [#allocation17], 256
        $region96: #{tpu_custom_call.1} parent=67 // pred_fallthru
          _
        // Predicated region
        $region97: #{tpu_custom_call.1} parent=67 // pred_check
          %p511 = pneg %p274
        $region98: #{tpu_custom_call.1} parent=67 // pred_check_branch
          %513 = sbr.rel (%p511) target = $region100
        $region99: #{tpu_custom_call.1} parent=67 // pred_region
          %515 = dma.done [#allocation20], 256
        $region100: #{tpu_custom_call.1} parent=67 // pred_fallthru
          _
        %p516 = pneg %p64
        %p517 = pneg %p61
        %p518 = pneg %p85
        %p519 = pneg %p82
        %p520 = pneg %p106
        %p521 = pneg %p103
        %p522 = pneg %p127
        %p523 = pneg %p124
        %p524 = pneg %p148
        %p525 = pneg %p145
        %p526 = pneg %p169
        %p527 = pneg %p166
        %p528 = pneg %p190
        %p529 = pneg %p187
        %p530 = pneg %p211
        %p531 = pneg %p208
        %p532 = pneg %p232
        %p533 = pneg %p229
        %p534 = pneg %p253
        %p535 = pneg %p250
        %p536 = pneg %p274
        %p537 = pneg %p271
        %p538 = pneg %p295
        %p539 = pneg %p292
        %p540 = pneg %p323
        %p541 = pneg %p320
        %s542 = sand.u32 %s310, 1
        %s543 = scalar_lea.sflag [#allocation9], %s542
        %s544 = sand.u32 %s310, 1
        %s545 = smul.addr %s544, 2
        %s546 = scalar_lea.vmem [#allocation21], %s545
        %s547 = smul.u32 2, %s35
        %v549 = vld [vmem:[#allocation7] sm:$0xff]
        %v550 = vld [vmem:[#allocation7 + $0x8] sm:$0xff]
        %p551 = scmp.eq.s32.totalorder %s36, 0
        // Predicated region
        $region101: #{tpu_custom_call.1} parent=67 // pred_check
          %p552 = pneg %p551
        $region102: #{tpu_custom_call.1} parent=67 // pred_check_branch
          %554 = sbr.rel (%p552) target = $region104
        $region103: #{tpu_custom_call.1} parent=67 // pred_region
          %v555 = vpack.c.bf16 %v550, %v549
          %v556 = vld [vmem:[#allocation16] sm:$0xf]
          %v557 = vld [vmem:[#allocation16 + $0x4] sm:$0xf]
          %v558 = vld [vmem:[#allocation16 + $0x8] sm:$0xf]
          %v559 = vld [vmem:[#allocation16 + $0xc] sm:$0xf]
          %v560 = vld [vmem:[%s8] sm:$0x1]
          %v562 = vperm.slane %v560, 0
          %v568 = vunpack.c.l.b16 %v556
          %v569 = vunpack.c.l.b16 %v557
          %v570 = vunpack.c.l.b16 %v558
          %v571 = vunpack.c.l.b16 %v559
          %v572 = vpack.c.b16 %v569, %v568
          %v573 = vpack.c.b16 %v571, %v570
          %vm576 = vcmask 261120
          %v578 = vsel %vm576, %v555, 0
          %580 = vmatpush.bf16.msra.mxu0 0
          %581 = vmatpush.bf16.msra.mxu0 0
          %582 = vmatpush.bf16.msra.mxu0 0
          %583 = vmatpush.bf16.msra.mxu0 0
          %584 = vmatpush.bf16.msra.mxu0 0
          %585 = vmatpush.bf16.msra.mxu0 0
          %586 = vmatpush.bf16.msra.mxu0 %v573
          %587 = vmatpush.bf16.msra.mxu0 %v572
          %588 = vmatmul.bf16.gmra.mxu0 %v578
          %v589 = vpop.f32.mrf.mxu0
          %v590 = vadd.f32 %v562, %v589
          %v591 = vpop.f32.mrf.mxu0
          %v592 = vadd.f32 %v562, %v591
          %593 = vdwg.mxu0
          %v594 = vmax.f32 %v590, 0.0
          %v595 = vmax.f32 %v592, 0.0
          %596 = vst.msk [vmem:[#allocation2] sm:$0xff] %vm576, %v594
          %597 = vst.msk [vmem:[#allocation2 + $0x8] sm:$0xff] %vm576, %v595
          %v598 = vld [vmem:[#allocation10] sm:$0x1]
          %v599 = vunpack.c.l.bf16 %v598
          %v600 = vperm.slane %v599, 0
          %v601 = vadd.f32 %v600, 0.0
          %602 = vst [vmem:[#allocation3] sm:$0x3] %v601
          %v605 = vrot.slane %v550, 7
          %vm606 = vcmask 1041409
          %v607 = vsel %vm606, %v605, %v549
          %vm609 = vcmask 254976
          %610 = vst.msk [vmem:[#allocation4] sm:$0x3] %vm609, %v607
          %611 = vst.msk [vmem:[#allocation5] sm:$0x3] %vm609, 0.0
          %612 = vst.msk [vmem:[#allocation6] sm:$0x3] %vm609, 0.0
        $region104: #{tpu_custom_call.1} parent=67 // pred_fallthru
          _
        %v613 = vld [vmem:[#allocation3] sm:$0x3]
        %v614 = vld [vmem:[#allocation4] sm:$0x3]
        %v615 = vld [vmem:[#allocation5] sm:$0x3]
        %v616 = vld [vmem:[#allocation6] sm:$0x3]
        %v617 = vpack.c.bf16 %v614, %v614
        %v618 = vld [vmem:[#allocation12] sm:$0xf]
        %v619 = vld [vmem:[#allocation12 + $0x4] sm:$0xf]
        %v620 = vld [vmem:[#allocation12 + $0x8] sm:$0xf]
        %v621 = vld [vmem:[#allocation12 + $0xc] sm:$0xf]
        %v626 = vunpack.c.l.b16 %v618
        %v627 = vunpack.c.l.b16 %v619
        %v628 = vunpack.c.l.b16 %v620
        %v629 = vunpack.c.l.b16 %v621
        %v630 = vpack.c.b16 %v627, %v626
        %v631 = vpack.c.b16 %v629, %v628
        %vm634 = vcmask 261120
        %v636 = vsel %vm634, %v617, 0
        %638 = vmatpush.bf16.msra.mxu0 0
        %639 = vmatpush.bf16.msra.mxu0 0
        %640 = vmatpush.bf16.msra.mxu0 0
        %641 = vmatpush.bf16.msra.mxu0 0
        %642 = vmatpush.bf16.msra.mxu0 0
        %643 = vmatpush.bf16.msra.mxu0 0
        %644 = vmatpush.bf16.msra.mxu0 %v631
        %645 = vmatpush.bf16.msra.mxu0 %v630
        %646 = vmatmul.bf16.gmra.mxu0 %v636
        %v647 = vpop.f32.mrf.mxu0
        %v648 = vadd.f32 0.0, %v647
        %v649 = vpop.f32.mrf.mxu0
        %650 = vdwg.mxu0
        %v651 = vadd.f32 %v613, %v648
        %v652 = vpack.c.bf16 %v615, %v615
        %v653 = vld [vmem:[#allocation13] sm:$0xf]
        %v654 = vld [vmem:[#allocation13 + $0x4] sm:$0xf]
        %v655 = vld [vmem:[#allocation13 + $0x8] sm:$0xf]
        %v656 = vld [vmem:[#allocation13 + $0xc] sm:$0xf]
        %v661 = vunpack.c.l.b16 %v653
        %v662 = vunpack.c.l.b16 %v654
        %v663 = vunpack.c.l.b16 %v655
        %v664 = vunpack.c.l.b16 %v656
        %v665 = vpack.c.b16 %v662, %v661
        %v666 = vpack.c.b16 %v664, %v663
        %v670 = vsel %vm634, %v652, 0
        %672 = vmatpush.bf16.msra.mxu0 0
        %673 = vmatpush.bf16.msra.mxu0 0
        %674 = vmatpush.bf16.msra.mxu0 0
        %675 = vmatpush.bf16.msra.mxu0 0
        %676 = vmatpush.bf16.msra.mxu0 0
        %677 = vmatpush.bf16.msra.mxu0 0
        %678 = vmatpush.bf16.msra.mxu0 %v666
        %679 = vmatpush.bf16.msra.mxu0 %v665
        %680 = vmatmul.bf16.gmra.mxu0 %v670
        %v681 = vpop.f32.mrf.mxu0
        %v682 = vadd.f32 0.0, %v681
        %v683 = vpop.f32.mrf.mxu0
        %684 = vdwg.mxu0
        %v685 = vadd.f32 %v651, %v682
        %v686 = vld [vmem:[%s4] sm:$0x1]
        %v688 = vperm.slane %v686, 0
        %v690 = vadd.f32 %v685, %v688
        %v691 = vxor.u32 %v690, 2147483648
        %v692 = vmul.f32 %v691, 1.442695
        %v693 = vpow.pop %v692
        %v694 = vadd.f32 %v693, 1.0
        %v695 = vrcp.pop %v694
        %v696 = vmul.f32 %v694, %v695
        %v697 = vsub.f32 1.0, %v696
        %v698 = vmul.f32 %v695, %v697
        %v699 = vadd.f32 %v695, %v698
        %vm700 = vweird.f32 %v694
        %vm701 = vweird.f32 %v695
        %vm702 = vmor %vm700, %vm701
        %v703 = vsel %vm702, %v695, %v699
        %v704 = vand.u32 2147483647, %v694
        %vm705 = vcmp.eq.f32.partialorder %v704, 8.507059e+37
        %v706 = vand.u32 %v694, 2147483648
        %v707 = vor.u32 1.1754944e-38, %v706
        %v708 = vsel %vm705, %v707, %v703
        %v709 = vmul.f32 1.0, %v708
        %v710 = vtanh.pop %v690
        %712 = vrot.lane.b32.xlu0 %v616, 32
        %v713 = vpop.permute.xlu0 %712
        %v715 = vmul.f32 %v709, %v713
        %717 = vrot.lane.b32.xlu0 %v710, 64
        %v718 = vpop.permute.xlu0 %717
        %v720 = vmul.f32 %v709, %v718
        %722 = vrot.lane.b32.xlu0 %v720, 32
        %v723 = vpop.permute.xlu0 %722
        %v725 = vadd.f32 %v715, %v723
        %v726 = vtanh.pop %v725
        %728 = vrot.lane.b32.xlu0 %v726, 64
        %v729 = vpop.permute.xlu0 %728
        %v731 = vmul.f32 %v709, %v729
        %v732 = vpack.c.bf16 %v731, %v731
        %v733 = vld [vmem:[#allocation15] sm:$0xf]
        %v734 = vld [vmem:[#allocation15 + $0x4] sm:$0xf]
        %v735 = vld [vmem:[#allocation15 + $0x8] sm:$0xf]
        %v736 = vld [vmem:[#allocation15 + $0xc] sm:$0xf]
        %v737 = vld [vmem:[%s6] sm:$0x1]
        %v739 = vperm.slane %v737, 0
        %742 = vrot.lane.b32.xlu0 %v732, 32
        %v743 = vpop.permute.xlu0 %742
        %v748 = vunpack.c.l.b16 %v733
        %v749 = vunpack.c.l.b16 %v734
        %v750 = vunpack.c.l.b16 %v735
        %v751 = vunpack.c.l.b16 %v736
        %v752 = vpack.c.b16 %v749, %v748
        %v753 = vpack.c.b16 %v751, %v750
        %v757 = vsel %vm634, %v743, 0
        %759 = vmatpush.bf16.msra.mxu0 0
        %760 = vmatpush.bf16.msra.mxu0 0
        %761 = vmatpush.bf16.msra.mxu0 0
        %762 = vmatpush.bf16.msra.mxu0 0
        %763 = vmatpush.bf16.msra.mxu0 0
        %764 = vmatpush.bf16.msra.mxu0 0
        %765 = vmatpush.bf16.msra.mxu0 %v753
        %766 = vmatpush.bf16.msra.mxu0 %v752
        %767 = vmatmul.bf16.gmra.mxu0 %v757
        %v768 = vpop.f32.mrf.mxu0
        %v769 = vadd.f32 %v739, %v768
        %v770 = vpop.f32.mrf.mxu0
        %771 = vdwg.mxu0
        %v772 = vmax.f32 %v769, 0.0
        %v774 = vrot.slane %v772, 1
        %v775 = vld [vmem:[#allocation2] sm:$0xff]
        %v776 = vld [vmem:[#allocation2 + $0x8] sm:$0xff]
        %v777 = vsel %vm634, %v772, 0
        %v780 = vsel %vm634, %v775, 0
        %782 = vmatpush.xpose.msra.mxu0 0.0
        %783 = vmatpush.xpose.msra.mxu0 0.0
        %784 = vmatpush.xpose.msra.mxu0 0.0
        %785 = vmatpush.xpose.msra.mxu0 0.0
        %786 = vmatpush.xpose.msra.mxu0 0.0
        %787 = vmatpush.xpose.msra.mxu0 0.0
        %788 = vmatpush.xpose.msra.mxu0 0.0
        %789 = vmatpush.xpose.msra.mxu0 0.0
        %790 = vmatpush.xpose.msra.mxu0 0.0
        %791 = vmatpush.xpose.msra.mxu0 0.0
        %792 = vmatpush.xpose.msra.mxu0 0.0
        %793 = vmatpush.xpose.msra.mxu0 0.0
        %794 = vmatpush.xpose.msra.mxu0 0.0
        %795 = vmatpush.xpose.msra.mxu0 0.0
        %796 = vmatpush.xpose.msra.mxu0 0.0
        %797 = vmatpush.xpose.msra.mxu0 %v780
        %798 = vmatmul.f32.gmra.mxu0 %v777
        %v799 = vpop.f32.mrf.mxu0
        %v800 = vadd.f32 0.0, %v799
        %801 = vdwg.mxu0
        %v802 = vsel %vm634, %v774, 0
        %v805 = vsel %vm634, %v776, 0
        %807 = vmatpush.xpose.msra.mxu0 0.0
        %808 = vmatpush.xpose.msra.mxu0 0.0
        %809 = vmatpush.xpose.msra.mxu0 0.0
        %810 = vmatpush.xpose.msra.mxu0 0.0
        %811 = vmatpush.xpose.msra.mxu0 0.0
        %812 = vmatpush.xpose.msra.mxu0 0.0
        %813 = vmatpush.xpose.msra.mxu0 0.0
        %814 = vmatpush.xpose.msra.mxu0 0.0
        %815 = vmatpush.xpose.msra.mxu0 0.0
        %816 = vmatpush.xpose.msra.mxu0 0.0
        %817 = vmatpush.xpose.msra.mxu0 0.0
        %818 = vmatpush.xpose.msra.mxu0 0.0
        %819 = vmatpush.xpose.msra.mxu0 0.0
        %820 = vmatpush.xpose.msra.mxu0 0.0
        %821 = vmatpush.xpose.msra.mxu0 0.0
        %822 = vmatpush.xpose.msra.mxu0 %v805
        %823 = vmatmul.f32.gmra.mxu0 %v802
        %v824 = vpop.f32.mrf.mxu0
        %v825 = vadd.f32 0.0, %v824
        %826 = vdwg.mxu0
        %v829 = vrot.slane %v825, 7
        %vm830 = vcmask 1041409
        %v831 = vsel %vm830, %v829, %v800
        %vm833 = vcmask 58368
        %v834 = vsel %vm833, %v831, -inf
        %835 = vmax.xlane.f32.xlu0 %v834
        %v836 = vpop.xlane.xlu0 %835
        %v838 = vrot.slane %v836, 1
        %v841 = vsub.f32 %v800, %v836
        %v842 = vsub.f32 %v825, %v838
        %v843 = vmul.f32 %v841, 1.442695
        %v844 = vpow.pop %v843
        %v845 = vmul.f32 %v842, 1.442695
        %v846 = vpow.pop %v845
        %v849 = vrot.slane %v846, 7
        %v850 = vsel %vm830, %v849, %v844
        %v852 = vsel %vm833, %v850, 0.0
        %853 = vadd.xlane.f32.xlu0 %v852
        %v854 = vpop.xlane.xlu0 %853
        %v855 = vrcp.pop %v854
        %v857 = vrot.slane %v855, 1
        %v860 = vmul.f32 %v844, %v855
        %v861 = vmul.f32 %v846, %v857
        %vm862 = vcmask 64512
        %v864 = vsel %vm862, %v860, 0
        %866 = vmatpush.msra.mxu0 0.0
        %867 = vmatpush.msra.mxu0 0.0
        %868 = vmatpush.msra.mxu0 0.0
        %869 = vmatpush.msra.mxu0 0.0
        %870 = vmatpush.msra.mxu0 0.0
        %871 = vmatpush.msra.mxu0 0.0
        %872 = vmatpush.msra.mxu0 0.0
        %873 = vmatpush.msra.mxu0 0.0
        %874 = vmatpush.msra.mxu0 0.0
        %875 = vmatpush.msra.mxu0 0.0
        %876 = vmatpush.msra.mxu0 0.0
        %877 = vmatpush.msra.mxu0 0.0
        %878 = vmatpush.msra.mxu0 0.0
        %879 = vmatpush.msra.mxu0 0.0
        %880 = vmatpush.msra.mxu0 0.0
        %881 = vmatpush.msra.mxu0 %v549
        %882 = vmatmul.f32.gmra.mxu0 %v864
        %v883 = vpop.f32.mrf.mxu0
        %v884 = vadd.f32 0.0, %v883
        %885 = vdwg.mxu0
        %v887 = vsel %vm862, %v861, 0
        %889 = vmatpush.msra.mxu0 0.0
        %890 = vmatpush.msra.mxu0 0.0
        %891 = vmatpush.msra.mxu0 0.0
        %892 = vmatpush.msra.mxu0 0.0
        %893 = vmatpush.msra.mxu0 0.0
        %894 = vmatpush.msra.mxu0 0.0
        %895 = vmatpush.msra.mxu0 0.0
        %896 = vmatpush.msra.mxu0 0.0
        %897 = vmatpush.msra.mxu0 0.0
        %898 = vmatpush.msra.mxu0 0.0
        %899 = vmatpush.msra.mxu0 0.0
        %900 = vmatpush.msra.mxu0 0.0
        %901 = vmatpush.msra.mxu0 0.0
        %902 = vmatpush.msra.mxu0 0.0
        %903 = vmatpush.msra.mxu0 0.0
        %904 = vmatpush.msra.mxu0 %v550
        %905 = vmatmul.f32.gmra.mxu0 %v887
        %v906 = vpop.f32.mrf.mxu0
        %v907 = vadd.f32 0.0, %v906
        %908 = vdwg.mxu0
        %v909 = vld [vmem:[#allocation18] sm:$0xf]
        %v910 = vld [vmem:[#allocation18 + $0x4] sm:$0xf]
        %v911 = vld [vmem:[#allocation18 + $0x8] sm:$0xf]
        %v912 = vld [vmem:[#allocation18 + $0xc] sm:$0xf]
        %v913 = vpack.c.bf16 %v884, %v884
        %v914 = vpack.c.bf16 %v907, %v907
        %v915 = vld [vmem:[#allocation19] sm:$0xf]
        %v916 = vld [vmem:[#allocation19 + $0x4] sm:$0xf]
        %v917 = vld [vmem:[#allocation19 + $0x8] sm:$0xf]
        %v918 = vld [vmem:[#allocation19 + $0xc] sm:$0xf]
        %v921 = vunpack.c.l.b16 %v913
        %v922 = vunpack.c.l.b16 %v914
        %v923 = vrot.slane %v922, 7
        %v924 = vsel %vm830, %v923, %v921
        %v925 = vpack.c.b16 %v924, %v924
        %v930 = vunpack.c.l.b16 %v915
        %v931 = vunpack.c.l.b16 %v916
        %v932 = vunpack.c.l.b16 %v917
        %v933 = vunpack.c.l.b16 %v918
        %v934 = vpack.c.b16 %v931, %v930
        %v935 = vpack.c.b16 %v933, %v932
        %v939 = vsel %vm634, %v925, 0
        %941 = vmatpush.bf16.msra.mxu0 0
        %942 = vmatpush.bf16.msra.mxu0 0
        %943 = vmatpush.bf16.msra.mxu0 0
        %944 = vmatpush.bf16.msra.mxu0 0
        %945 = vmatpush.bf16.msra.mxu0 0
        %946 = vmatpush.bf16.msra.mxu0 0
        %947 = vmatpush.bf16.msra.mxu0 %v935
        %948 = vmatpush.bf16.msra.mxu0 %v934
        %949 = vmatmul.bf16.gmra.mxu0 %v939
        %v950 = vpop.f32.mrf.mxu0
        %v951 = vadd.f32 0.0, %v950
        %v952 = vpop.f32.mrf.mxu0
        %953 = vdwg.mxu0
        %v958 = vunpack.c.l.b16 %v909
        %v959 = vunpack.c.l.b16 %v910
        %v960 = vunpack.c.l.b16 %v911
        %v961 = vunpack.c.l.b16 %v912
        %v962 = vpack.c.b16 %v959, %v958
        %v963 = vpack.c.b16 %v961, %v960
        %966 = vmatpush.bf16.msra.mxu0 0
        %967 = vmatpush.bf16.msra.mxu0 0
        %968 = vmatpush.bf16.msra.mxu0 0
        %969 = vmatpush.bf16.msra.mxu0 0
        %970 = vmatpush.bf16.msra.mxu0 0
        %971 = vmatpush.bf16.msra.mxu0 0
        %972 = vmatpush.bf16.msra.mxu0 %v963
        %973 = vmatpush.bf16.msra.mxu0 %v962
        %974 = vmatmul.bf16.gmra.mxu0 %v757
        %v975 = vpop.f32.mrf.mxu0
        %v976 = vadd.f32 %v951, %v975
        %v977 = vpop.f32.mrf.mxu0
        %978 = vdwg.mxu0
        %v979 = vld [vmem:[%s11] sm:$0x1]
        %v981 = vperm.slane %v979, 0
        %v983 = vadd.f32 %v976, %v981
        %vm984 = vcmask 1041408
        %v985 = vsel %vm984, %v983, -inf
        %986 = vmax.xlane.f32.xlu0 %v985
        %v987 = vpop.xlane.xlu0 %986
        %v988 = vsub.f32 %v983, %v987
        %v989 = vmul.f32 %v988, 1.442695
        %v990 = vpow.pop %v989
        %v991 = vsel %vm984, %v990, 0.0
        %992 = vadd.xlane.f32.xlu0 %v991
        %v993 = vpop.xlane.xlu0 %992
        %v994 = vlog2.pop %v993
        %v995 = vmul.f32 %v994, 0.6931472
        %v996 = vsub.f32 %v988, %v995
        %997 = vst [vmem:[%s546] sm:$0x3] %v996
        %v998 = vlaneseq
        %v999 = vand.u32 %v998, 127
        %v1000 = vsel %vm984, %v996, -inf
        %1001 = vmax.xlane.f32.xlu0 %v1000
        %v1002 = vpop.xlane.xlu0 %1001
        %vm1003 = vcmp.eq.f32.partialorder %v996, %v1002
        %v1004 = vsel %vm1003, %v999, 128
        %v1005 = vsel %vm984, %v1004, 2147483647
        %v1006 = vand.u32 %v1005, 65535
        %v1007 = vshra.s32 %v1005, 16
        %v1008 = vcvt.s32.f32 %v1006
        %v1009 = vcvt.s32.f32 %v1007
        %1010 = vmin.xlane.f32.xlu0 %v1009
        %v1011 = vpop.xlane.xlu0 %1010
        %vm1012 = vcmp.eq.f32.partialorder %v1009, %v1011
        %v1013 = vsel %vm1012, %v1008, inf
        %1014 = vmin.xlane.f32.xlu0 %v1013
        %v1015 = vpop.xlane.xlu0 %1014
        %v1016 = vcvt.f32.s32 %v1015
        %v1017 = vcvt.f32.s32 %v1011
        %v1018 = vshll.u32 %v1017, 16
        %v1019 = vadd.s32 %v1018, %v1016
        %vm1020 = vcmp.eq.s32.totalorder %v999, %v1019
        %v1021 = vsel %vm1020, 1, 0
        %v1022 = vcvt.s32.f32 %v1021
        %v1023 = vpack.c.bf16 %v1022, %v1022
        %v1024 = vld [vmem:[#allocation10] sm:$0xf]
        %v1025 = vld [vmem:[#allocation10 + $0x4] sm:$0xf]
        %v1026 = vld [vmem:[#allocation10 + $0x8] sm:$0xf]
        %v1027 = vld [vmem:[#allocation10 + $0xc] sm:$0xf]
        %v1028 = vld [vmem:[#allocation10 + $0x10] sm:$0xf]
        %v1029 = vld [vmem:[#allocation10 + $0x14] sm:$0xf]
        %v1030 = vld [vmem:[#allocation10 + $0x18] sm:$0xf]
        %v1031 = vld [vmem:[#allocation10 + $0x1c] sm:$0xf]
        %v1032 = vld [vmem:[#allocation10 + $0x20] sm:$0xf]
        %v1033 = vld [vmem:[#allocation10 + $0x24] sm:$0xf]
        %v1034 = vld [vmem:[#allocation10 + $0x28] sm:$0xf]
        %v1035 = vld [vmem:[#allocation10 + $0x2c] sm:$0xf]
        %v1036 = vld [vmem:[#allocation10 + $0x30] sm:$0xf]
        %v1037 = vld [vmem:[#allocation10 + $0x34] sm:$0xf]
        %v1038 = vld [vmem:[#allocation10 + $0x38] sm:$0xf]
        %v1039 = vld [vmem:[#allocation10 + $0x3c] sm:$0xf]
        %v1056 = vunpack.c.l.b16 %v1024
        %v1057 = vunpack.c.l.b16 %v1025
        %v1058 = vunpack.c.l.b16 %v1026
        %v1059 = vunpack.c.l.b16 %v1027
        %v1060 = vunpack.c.l.b16 %v1028
        %v1061 = vunpack.c.l.b16 %v1029
        %v1062 = vunpack.c.l.b16 %v1030
        %v1063 = vunpack.c.l.b16 %v1031
        %v1064 = vunpack.c.l.b16 %v1032
        %v1065 = vunpack.c.l.b16 %v1033
        %v1066 = vunpack.c.l.b16 %v1034
        %v1067 = vunpack.c.l.b16 %v1035
        %v1068 = vunpack.c.l.b16 %v1036
        %v1069 = vunpack.c.l.b16 %v1037
        %v1070 = vunpack.c.l.b16 %v1038
        %v1071 = vunpack.c.l.b16 %v1039
        %v1072 = vpack.c.b16 %v1057, %v1056
        %v1073 = vpack.c.b16 %v1059, %v1058
        %v1074 = vpack.c.b16 %v1061, %v1060
        %v1075 = vpack.c.b16 %v1063, %v1062
        %v1076 = vpack.c.b16 %v1065, %v1064
        %v1077 = vpack.c.b16 %v1067, %v1066
        %v1078 = vpack.c.b16 %v1069, %v1068
        %v1079 = vpack.c.b16 %v1071, %v1070
        %1088 = vmatpush.bf16.msra.mxu0 %v1079
        %1089 = vmatpush.bf16.msra.mxu0 %v1078
        %1090 = vmatpush.bf16.msra.mxu0 %v1077
        %1091 = vmatpush.bf16.msra.mxu0 %v1076
        %1092 = vmatpush.bf16.msra.mxu0 %v1075
        %1093 = vmatpush.bf16.msra.mxu0 %v1074
        %1094 = vmatpush.bf16.msra.mxu0 %v1073
        %1095 = vmatpush.bf16.msra.mxu0 %v1072
        %1096 = vmatmul.bf16.gmra.mxu0 %v1023
        %v1097 = vpop.f32.mrf.mxu0
        %v1098 = vadd.f32 0.0, %v1097
        %v1099 = vpop.f32.mrf.mxu0
        %1100 = vdwg.mxu0
        %1101 = vst [vmem:[#allocation3] sm:$0x3] %v1098
        %v1104 = vrot.slane %v907, 7
        %v1105 = vsel %vm830, %v1104, %v884
        %vm1107 = vcmask 254976
        %1108 = vst.msk [vmem:[#allocation4] sm:$0x3] %vm1107, %v1105
        %1110 = vrot.lane.b32.xlu0 %v731, 32
        %v1111 = vpop.permute.xlu0 %1110
        %1113 = vst.msk [vmem:[#allocation5] sm:$0x3] %vm1107, %v1111
        %1115 = vrot.lane.b32.xlu0 %v725, 96
        %v1116 = vpop.permute.xlu0 %1115
        %1118 = vst.msk [vmem:[#allocation6] sm:$0x3] %vm1107, %v1116
        %s1119 = sand.u32 %s310, 1
        %s1120 = scalar_lea.sflag [#allocation9], %s1119
        %s1121 = sand.u32 %s310, 1
        %s1122 = smul.addr %s1121, 2
        %s1123 = scalar_lea.vmem [#allocation21], %s1122
        // Predicated region
        $region105: #{tpu_custom_call.1} parent=67 // pred_check
          %p1124 = pneg %p320
        $region106: #{tpu_custom_call.1} parent=67 // pred_check_branch
          %1126 = sbr.rel (%p1124) target = $region108
        $region107: #{tpu_custom_call.1} parent=67 // pred_region
          %1128 = vsyncadd %s1120, 0
          %s1129 = sadd.s32 %s35, %s36
          %s1130 = smul.addr %s1129, 2
          %s1131 = scalar_lea.hbm %s12, %s1130
          %s1133 = sshll.u32 %s1123, 4
          %s1134 = int_to_ptr.vmem [resolvable:$true] %s1133
          %s1135 = sshll.u32 %s1131, 4
          %s1136 = int_to_ptr.hbm [resolvable:$true] %s1135
          %1138 = dma.vmem_to_hbm [thread:$0]  %s1134, 32, %s1136, %s1120
        $region108: #{tpu_custom_call.1} parent=67 // pred_fallthru
          _
      $region68: #{tpu_custom_call.1} parent=5 // pred_fallthru
        _
      %p1139 = scmp.le.s32.totalorder 2, %s26
      // Predicated region
      $region109: #{tpu_custom_call.1} parent=5 // pred_check
        %p1140 = pneg %p1139
      $region110: #{tpu_custom_call.1} parent=5 // pred_check_branch
        %1142 = sbr.rel (%p1140) target = $region112
      $region111: #{tpu_custom_call.1} parent=5 // pred_region
        %s1143 = ssub.s32 %s26, 2
        // Predicated region
        $region113: #{tpu_custom_call.1} parent=111 // pred_check
          %p1144 = pneg %p326
        $region114: #{tpu_custom_call.1} parent=111 // pred_check_branch
          %1146 = sbr.rel (%p1144) target = $region116
        $region115: #{tpu_custom_call.1} parent=111 // pred_region
          %s1147 = sand.u32 %s311, 1
          %s1148 = scalar_lea.sflag [#allocation9], %s1147
          %s1149 = sand.u32 %s311, 1
          %s1150 = smul.addr %s1149, 2
          %s1151 = scalar_lea.vmem [#allocation21], %s1150
          %1153 = dma.done %s1148, 32
        $region116: #{tpu_custom_call.1} parent=111 // pred_fallthru
          _
      $region112: #{tpu_custom_call.1} parent=5 // pred_fallthru
        _
    $region6: #{tpu_custom_call.1} parent=1 // loop_footer
      %s30 = sadd.s32 1, %s26
    $region7: #{tpu_custom_call.1} parent=1 // loop_footer_branch
      %25 = sbr.rel target = $region3
    $region8: #{tpu_custom_call.1} parent=1 // loop_exit
      _
    %1154 = vsyncpa [#allocation8], 1
    %s1155 = scalar_lea.sflag [#allocation8], 1
    %1156 = vsyncpa %s1155, 1
    %1157 = vsyncpa [#allocation11], 1
    %1158 = vsyncpa [#allocation14], 1
    %1159 = vsyncpa [#allocation17], 1
    %1160 = vsyncpa [#allocation20], 1
    %1161 = vsyncpa [#allocation9], 1
    %s1162 = scalar_lea.sflag [#allocation9], 1
    %1163 = vsyncpa %s1162, 1

</llo_original>
